<compile_context>
chip_gen: v5e
topology: v5e:2x2
jax: 0.10.0
libtpu: 0.0.40
codegen_flags: <defaults>
</compile_context>

<pallas_src>
import jax
import jax.numpy as jnp
from jax.experimental import pallas as pl
from jax.experimental.pallas import tpu as pltpu

INPUT_SIZE = 5
HIDDEN_SIZE = 50
NUM_LAYERS = 2
HP = 128                      # per-gate lane padding (vreg lane width)
G = 4 * HP                    # fused gate width
IP = 8                        # input features padded 5 -> 8 (sublane tile)
BP = 8                        # batch padded to 8 (sublane tile)


# ----------------------------------------------------------------------------
# Pallas kernel: input projection + stacked-LSTM recurrence + fc head,
# one gridless invocation (everything resident in VMEM, < 1 MiB).
# ----------------------------------------------------------------------------
def _lstm_kernel(
    x_ref,     # (T*BP, IP) f32  time-major, batch/feature padded input
    wih0_ref,  # (IP, G)   f32   layer-0 input->gates (packed, zero-padded)
    b0_ref,    # (1, G)    f32   layer-0 combined bias (b_ih + b_hh)
    whh0_ref,  # (HP, G)   bf16  layer-0 hidden->gates
    w1_ref,    # (2*HP, G) bf16  layer-1 [input ; hidden] -> gates, K-stacked
    b1_ref,    # (1, G)    f32   layer-1 combined bias
    fcw_ref,   # (HP, 1)   f32   fc weight (transposed, zero-padded)
    fcb_ref,   # (1, 1)    f32   fc bias
    out_ref,   # (B, 1)    f32   prediction
    xg_ref,    # (T*BP, G) f32   scratch: layer-0 input projection for all t
):
    TB = x_ref.shape[0]
    T = TB // BP
    B = out_ref.shape[0]

    # Layer-0 input projection for ALL timesteps (no recurrent dependence):
    # one small matmul, entirely off the serial recurrence.
    xg_ref[...] = (
        jnp.dot(x_ref[...], wih0_ref[...], preferred_element_type=jnp.float32)
        + b0_ref[...]
    )

    def sigmoid(v):
        # Single EUP op (tanh) instead of exp + divide.
        return 0.5 * jnp.tanh(0.5 * v) + 0.5

    def gates_to_hc(gates, c):
        # Lane-tile-aligned static slices of the fused (BP, 4*HP) gate matrix.
        i_g = sigmoid(gates[:, 0 * HP:1 * HP])
        f_g = sigmoid(gates[:, 1 * HP:2 * HP])
        g_g = jnp.tanh(gates[:, 2 * HP:3 * HP])
        o_g = sigmoid(gates[:, 3 * HP:4 * HP])
        c_new = f_g * c + i_g * g_g
        h_new = o_g * jnp.tanh(c_new)
        return h_new, c_new

    def step(t, carry):
        h0, c0, h1, c1 = carry
        # Sublane-tile-aligned (start is a multiple of BP=8) dynamic slice.
        xg_t = xg_ref[pl.ds(t * BP, BP), :]                      # (BP, G)

        # Layer 0: only the recurrent projection is on the serial path.
        # Weight refs are read at the point of use (no whole-weight hoists).
        gates0 = xg_t + jnp.dot(
            h0.astype(jnp.bfloat16), whh0_ref[...],
            preferred_element_type=jnp.float32)
        h0n, c0n = gates_to_hc(gates0, c0)

        # Layer 1: one fused K=2*HP matmul (input + hidden projections).
        # (inter-layer dropout is training-only -> identity here)
        lhs1 = jnp.concatenate([h0n, h1], axis=1).astype(jnp.bfloat16)
        gates1 = (
            jnp.dot(lhs1, w1_ref[...], preferred_element_type=jnp.float32)
            + b1_ref[...]
        )
        h1n, c1n = gates_to_hc(gates1, c1)
        return h0n, c0n, h1n, c1n

    zeros = jnp.zeros((BP, HP), jnp.float32)
    _, _, h1, _ = jax.lax.fori_loop(
        0, T, step, (zeros, zeros, zeros, zeros), unroll=True
    )

    # Final time step: dropout(eval) = identity, then fc head.
    pred = (
        jnp.dot(h1, fcw_ref[...], preferred_element_type=jnp.float32)
        + fcb_ref[...]
    )
    out_ref[...] = pred[:B, :]


def lstm_model_forward(x_bti, packed):
    """x_bti: (B, T, I) float32 (batch_first, like the PyTorch module)."""

    @jax.jit
    def fwd(x, p):
        B, T, I = x.shape
        # Layout plumbing only (~2 KB): batch_first -> time-major, pad the
        # feature dim to IP=8 and the batch dim to BP=8 so every in-kernel
        # slice/matmul row block is tile-aligned. Padded rows are zero.
        x_tm = jnp.swapaxes(x, 0, 1)                               # (T, B, I)
        x_pad = jnp.zeros((T, BP, IP), jnp.float32).at[:, :B, :I].set(x_tm)
        x_flat = x_pad.reshape(T * BP, IP)

        vmem = lambda: pl.BlockSpec(memory_space=pltpu.MemorySpace.VMEM)
        return pl.pallas_call(
            _lstm_kernel,
            out_shape=jax.ShapeDtypeStruct((B, 1), jnp.float32),
            in_specs=[vmem() for _ in range(8)],
            out_specs=vmem(),
            scratch_shapes=[pltpu.VMEM((T * BP, G), jnp.float32)],
        )(x_flat, p["wih0"], p["b0"], p["whh0"], p["w1"], p["b1"],
          p["fcw"], p["fcb"])

    return fwd(x_bti, packed)


# ----------------------------------------------------------------------------
# Deterministic parameter init (PyTorch-like U(-1/sqrt(H), 1/sqrt(H))),
# kept in PyTorch layout; packed into the lane-aligned kernel layout below.
# ----------------------------------------------------------------------------
def init_params(key):
    H, I = HIDDEN_SIZE, INPUT_SIZE
    bound = 1.0 / (H ** 0.5)
    ks = jax.random.split(key, 10)
    u = lambda k, shape: jax.random.uniform(
        k, shape, jnp.float32, minval=-bound, maxval=bound
    )
    return {
        # Layer 0 (PyTorch shapes: weight_ih (4H, I), weight_hh (4H, H), biases (4H,))
        "w_ih0": u(ks[0], (4 * H, I)),
        "w_hh0": u(ks[1], (4 * H, H)),
        "b_ih0": u(ks[2], (4 * H,)),
        "b_hh0": u(ks[3], (4 * H,)),
        # Layer 1 (input is layer-0 hidden of size H)
        "w_ih1": u(ks[4], (4 * H, H)),
        "w_hh1": u(ks[5], (4 * H, H)),
        "b_ih1": u(ks[6], (4 * H,)),
        "b_hh1": u(ks[7], (4 * H,)),
        # fc: Linear(H, 1)
        "fc_w": u(ks[8], (1, H)),
        "fc_b": u(ks[9], (1,)),
    }


def pack_params(p):
    """Repack PyTorch-layout weights into lane-aligned, gate-fused layout."""
    H, I = HIDDEN_SIZE, INPUT_SIZE

    def pack_w(w, in_dim, in_pad, dtype):
        # w: (4H, in_dim) in PyTorch gate order [i, f, g, o]  -> (in_pad, 4*HP)
        out = jnp.zeros((in_pad, G), jnp.float32)
        for k in range(4):
            out = out.at[:in_dim, k * HP:k * HP + H].set(
                w[k * H:(k + 1) * H, :].T)
        return out.astype(dtype)

    def pack_b(b):
        out = jnp.zeros((G,), jnp.float32)
        for k in range(4):
            out = out.at[k * HP:k * HP + H].set(b[k * H:(k + 1) * H])
        return out

    # Layer-1 weights stacked along K so layer 1 is a single K=2*HP matmul.
    wih1 = pack_w(p["w_ih1"], H, HP, jnp.bfloat16)
    whh1 = pack_w(p["w_hh1"], H, HP, jnp.bfloat16)

    fcw = jnp.zeros((HP, 1), jnp.float32).at[:H, 0].set(p["fc_w"][0])

    return {
        "wih0": pack_w(p["w_ih0"], I, IP, jnp.float32),        # (IP, G)   f32
        "b0": pack_b(p["b_ih0"] + p["b_hh0"]).reshape(1, G),   # (1, G)    f32
        "whh0": pack_w(p["w_hh0"], H, HP, jnp.bfloat16),       # (HP, G)   bf16
        "w1": jnp.concatenate([wih1, whh1], axis=0),           # (2*HP, G) bf16
        "b1": pack_b(p["b_ih1"] + p["b_hh1"]).reshape(1, G),   # (1, G)    f32
        "fcw": fcw,                                            # (HP, 1)   f32
        "fcb": p["fc_b"].reshape(1, 1),                        # (1, 1)    f32
    }


# ----------------------------------------------------------------------------
# Pure-JAX reference (mirrors torch.nn.LSTM math, f32) for a correctness check.
# ----------------------------------------------------------------------------
def reference_forward(x_bti, p):
    B, T, I = x_bti.shape
    H = HIDDEN_SIZE

    def cell(x_in, h, c, w_ih, w_hh, b_ih, b_hh):
        gates = x_in @ w_ih.T + h @ w_hh.T + b_ih + b_hh       # (B, 4H)
        i_g = jax.nn.sigmoid(gates[:, 0 * H:1 * H])
        f_g = jax.nn.sigmoid(gates[:, 1 * H:2 * H])
        g_g = jnp.tanh(gates[:, 2 * H:3 * H])
        o_g = jax.nn.sigmoid(gates[:, 3 * H:4 * H])
        c_new = f_g * c + i_g * g_g
        h_new = o_g * jnp.tanh(c_new)
        return h_new, c_new

    h0 = jnp.zeros((B, H), jnp.float32)
    c0 = jnp.zeros((B, H), jnp.float32)
    h1 = jnp.zeros((B, H), jnp.float32)
    c1 = jnp.zeros((B, H), jnp.float32)
    for t in range(T):
        x_t = x_bti[:, t, :]
        h0, c0 = cell(x_t, h0, c0, p["w_ih0"], p["w_hh0"], p["b_ih0"], p["b_hh0"])
        h1, c1 = cell(h0, h1, c1, p["w_ih1"], p["w_hh1"], p["b_ih1"], p["b_hh1"])
    return h1 @ p["fc_w"].T + p["fc_b"]


if __name__ == "__main__":
    key = jax.random.PRNGKey(0)
    k_param, k_x = jax.random.split(key)

    B, T = 2, 8
    x = jax.random.normal(k_x, (B, T, INPUT_SIZE), jnp.float32)

    params = init_params(k_param)
    packed = pack_params(params)

    out = jax.block_until_ready(lstm_model_forward(x, packed))
    ref = jax.block_until_ready(reference_forward(x, params))

    assert out.shape == (B, 1), out.shape
    max_err = float(jnp.max(jnp.abs(out - ref)))
    if max_err > 5e-3:
        raise AssertionError(f"Mismatch vs reference: max abs err = {max_err}")

    print("KERNEL_OK")
</pallas_src>

<mosaic_0001>
module attributes {stable_mosaic.version = 11 : i64} {
  func.func @_lstm_kernel(%arg0: memref<64x8xf32, #tpu.memory_space<vmem>>, %arg1: memref<8x512xf32, #tpu.memory_space<vmem>>, %arg2: memref<1x512xf32, #tpu.memory_space<vmem>>, %arg3: memref<128x512xbf16, #tpu.memory_space<vmem>>, %arg4: memref<256x512xbf16, #tpu.memory_space<vmem>>, %arg5: memref<1x512xf32, #tpu.memory_space<vmem>>, %arg6: memref<128x1xf32, #tpu.memory_space<vmem>>, %arg7: memref<1x1xf32, #tpu.memory_space<vmem>>, %arg8: memref<2x1xf32, #tpu.memory_space<vmem>>, %arg9: memref<64x512xf32, #tpu.memory_space<vmem>>) attributes {dimension_semantics = [], scalar_prefetch = 0 : i64, scratch_operands = 1 : i64, tpu.core_type = #tpu.core_type<tc>} {
    %c0 = arith.constant 0 : index
    %c0_0 = arith.constant 0 : index
    %0 = vector.load %arg0[%c0, %c0_0] : memref<64x8xf32, #tpu.memory_space<vmem>>, vector<64x8xf32>
    %c0_1 = arith.constant 0 : index
    %c0_2 = arith.constant 0 : index
    %1 = vector.load %arg1[%c0_1, %c0_2] : memref<8x512xf32, #tpu.memory_space<vmem>>, vector<8x512xf32>
    %cst = arith.constant dense<0.000000e+00> : vector<64x512xf32>
    %2 = tpu.matmul %0, %1, %cst {dimension_numbers = #tpu.dot_dimension_numbers<[1], [0], [0], [1], [0, 0, 1, 1], [], []>} : vector<64x8xf32>, vector<8x512xf32>, vector<64x512xf32> -> vector<64x512xf32>
    %c0_3 = arith.constant 0 : index
    %c0_4 = arith.constant 0 : index
    %3 = vector.load %arg2[%c0_3, %c0_4] : memref<1x512xf32, #tpu.memory_space<vmem>>, vector<1x512xf32>
    %4 = vector.broadcast %3 : vector<1x512xf32> to vector<64x512xf32>
    %5 = arith.addf %2, %4 : vector<64x512xf32>
    %c0_5 = arith.constant 0 : index
    %c0_6 = arith.constant 0 : index
    %6 = vector.load %arg9[%c0_5, %c0_6] : memref<64x512xf32, #tpu.memory_space<vmem>>, vector<64x512xf32>
    tpu.vector_store %arg9[%c0_5, %c0_6], %5 {strides = array<i32>} : memref<64x512xf32, #tpu.memory_space<vmem>>, vector<64x512xf32>,
    %cst_7 = arith.constant 0.000000e+00 : f32
    %7 = vector.broadcast %cst_7 : f32 to vector<8x128xf32>
    %c0_i32 = arith.constant 0 : i32
    %c8_i32 = arith.constant 8 : i32
    %8 = arith.muli %c0_i32, %c8_i32 : i32
    %9 = arith.index_cast %8 : i32 to index
    %c0_8 = arith.constant 0 : index
    %10 = vector.load %arg9[%9, %c0_8] : memref<64x512xf32, #tpu.memory_space<vmem>>, vector<8x512xf32>
    %11 = arith.truncf %7 : vector<8x128xf32> to vector<8x128xbf16>
    %c0_9 = arith.constant 0 : index
    %c0_10 = arith.constant 0 : index
    %12 = vector.load %arg3[%c0_9, %c0_10] : memref<128x512xbf16, #tpu.memory_space<vmem>>, vector<128x512xbf16>
    %cst_11 = arith.constant dense<0.000000e+00> : vector<8x512xf32>
    %13 = tpu.matmul %11, %12, %cst_11 {dimension_numbers = #tpu.dot_dimension_numbers<[1], [0], [0], [1], [0, 0, 1, 1], [], []>} : vector<8x128xbf16>, vector<128x512xbf16>, vector<8x512xf32> -> vector<8x512xf32>
    %14 = arith.addf %10, %13 : vector<8x512xf32>
    %15 = vector.extract_strided_slice %14 {offsets = [0, 0], sizes = [8, 128], strides = [1, 1]} : vector<8x512xf32> to vector<8x128xf32>
    %cst_12 = arith.constant 5.000000e-01 : f32
    %16 = vector.broadcast %cst_12 : f32 to vector<8x128xf32>
    %17 = arith.mulf %16, %15 : vector<8x128xf32>
    %18 = math.tanh %17 : vector<8x128xf32>
    %cst_13 = arith.constant 5.000000e-01 : f32
    %19 = vector.broadcast %cst_13 : f32 to vector<8x128xf32>
    %20 = arith.mulf %19, %18 : vector<8x128xf32>
    %cst_14 = arith.constant 5.000000e-01 : f32
    %21 = vector.broadcast %cst_14 : f32 to vector<8x128xf32>
    %22 = arith.addf %20, %21 : vector<8x128xf32>
    %23 = vector.extract_strided_slice %14 {offsets = [0, 128], sizes = [8, 128], strides = [1, 1]} : vector<8x512xf32> to vector<8x128xf32>
    %cst_15 = arith.constant 5.000000e-01 : f32
    %24 = vector.broadcast %cst_15 : f32 to vector<8x128xf32>
    %25 = arith.mulf %24, %23 : vector<8x128xf32>
    %26 = math.tanh %25 : vector<8x128xf32>
    %cst_16 = arith.constant 5.000000e-01 : f32
    %27 = vector.broadcast %cst_16 : f32 to vector<8x128xf32>
    %28 = arith.mulf %27, %26 : vector<8x128xf32>
    %cst_17 = arith.constant 5.000000e-01 : f32
    %29 = vector.broadcast %cst_17 : f32 to vector<8x128xf32>
    %30 = arith.addf %28, %29 : vector<8x128xf32>
    %31 = vector.extract_strided_slice %14 {offsets = [0, 256], sizes = [8, 128], strides = [1, 1]} : vector<8x512xf32> to vector<8x128xf32>
    %32 = math.tanh %31 : vector<8x128xf32>
    %33 = vector.extract_strided_slice %14 {offsets = [0, 384], sizes = [8, 128], strides = [1, 1]} : vector<8x512xf32> to vector<8x128xf32>
    %cst_18 = arith.constant 5.000000e-01 : f32
    %34 = vector.broadcast %cst_18 : f32 to vector<8x128xf32>
    %35 = arith.mulf %34, %33 : vector<8x128xf32>
    %36 = math.tanh %35 : vector<8x128xf32>
    %cst_19 = arith.constant 5.000000e-01 : f32
    %37 = vector.broadcast %cst_19 : f32 to vector<8x128xf32>
    %38 = arith.mulf %37, %36 : vector<8x128xf32>
    %cst_20 = arith.constant 5.000000e-01 : f32
    %39 = vector.broadcast %cst_20 : f32 to vector<8x128xf32>
    %40 = arith.addf %38, %39 : vector<8x128xf32>
    %41 = arith.mulf %30, %7 : vector<8x128xf32>
    %42 = arith.mulf %22, %32 : vector<8x128xf32>
    %43 = arith.addf %41, %42 : vector<8x128xf32>
    %44 = math.tanh %43 : vector<8x128xf32>
    %45 = arith.mulf %40, %44 : vector<8x128xf32>
    %46 = tpu.concatenate %45, %7 in 1 : vector<8x128xf32>, vector<8x128xf32> -> vector<8x256xf32>
    %47 = arith.truncf %46 : vector<8x256xf32> to vector<8x256xbf16>
    %c0_21 = arith.constant 0 : index
    %c0_22 = arith.constant 0 : index
    %48 = vector.load %arg4[%c0_21, %c0_22] : memref<256x512xbf16, #tpu.memory_space<vmem>>, vector<256x512xbf16>
    %cst_23 = arith.constant dense<0.000000e+00> : vector<8x512xf32>
    %49 = tpu.matmul %47, %48, %cst_23 {dimension_numbers = #tpu.dot_dimension_numbers<[1], [0], [0], [1], [0, 0, 1, 1], [], []>} : vector<8x256xbf16>, vector<256x512xbf16>, vector<8x512xf32> -> vector<8x512xf32>
    %c0_24 = arith.constant 0 : index
    %c0_25 = arith.constant 0 : index
    %50 = vector.load %arg5[%c0_24, %c0_25] : memref<1x512xf32, #tpu.memory_space<vmem>>, vector<1x512xf32>
    %51 = vector.broadcast %50 : vector<1x512xf32> to vector<8x512xf32>
    %52 = arith.addf %49, %51 : vector<8x512xf32>
    %53 = vector.extract_strided_slice %52 {offsets = [0, 0], sizes = [8, 128], strides = [1, 1]} : vector<8x512xf32> to vector<8x128xf32>
    %cst_26 = arith.constant 5.000000e-01 : f32
    %54 = vector.broadcast %cst_26 : f32 to vector<8x128xf32>
    %55 = arith.mulf %54, %53 : vector<8x128xf32>
    %56 = math.tanh %55 : vector<8x128xf32>
    %cst_27 = arith.constant 5.000000e-01 : f32
    %57 = vector.broadcast %cst_27 : f32 to vector<8x128xf32>
    %58 = arith.mulf %57, %56 : vector<8x128xf32>
    %cst_28 = arith.constant 5.000000e-01 : f32
    %59 = vector.broadcast %cst_28 : f32 to vector<8x128xf32>
    %60 = arith.addf %58, %59 : vector<8x128xf32>
    %61 = vector.extract_strided_slice %52 {offsets = [0, 128], sizes = [8, 128], strides = [1, 1]} : vector<8x512xf32> to vector<8x128xf32>
    %cst_29 = arith.constant 5.000000e-01 : f32
    %62 = vector.broadcast %cst_29 : f32 to vector<8x128xf32>
    %63 = arith.mulf %62, %61 : vector<8x128xf32>
    %64 = math.tanh %63 : vector<8x128xf32>
    %cst_30 = arith.constant 5.000000e-01 : f32
    %65 = vector.broadcast %cst_30 : f32 to vector<8x128xf32>
    %66 = arith.mulf %65, %64 : vector<8x128xf32>
    %cst_31 = arith.constant 5.000000e-01 : f32
    %67 = vector.broadcast %cst_31 : f32 to vector<8x128xf32>
    %68 = arith.addf %66, %67 : vector<8x128xf32>
    %69 = vector.extract_strided_slice %52 {offsets = [0, 256], sizes = [8, 128], strides = [1, 1]} : vector<8x512xf32> to vector<8x128xf32>
    %70 = math.tanh %69 : vector<8x128xf32>
    %71 = vector.extract_strided_slice %52 {offsets = [0, 384], sizes = [8, 128], strides = [1, 1]} : vector<8x512xf32> to vector<8x128xf32>
    %cst_32 = arith.constant 5.000000e-01 : f32
    %72 = vector.broadcast %cst_32 : f32 to vector<8x128xf32>
    %73 = arith.mulf %72, %71 : vector<8x128xf32>
    %74 = math.tanh %73 : vector<8x128xf32>
    %cst_33 = arith.constant 5.000000e-01 : f32
    %75 = vector.broadcast %cst_33 : f32 to vector<8x128xf32>
    %76 = arith.mulf %75, %74 : vector<8x128xf32>
    %cst_34 = arith.constant 5.000000e-01 : f32
    %77 = vector.broadcast %cst_34 : f32 to vector<8x128xf32>
    %78 = arith.addf %76, %77 : vector<8x128xf32>
    %79 = arith.mulf %68, %7 : vector<8x128xf32>
    %80 = arith.mulf %60, %70 : vector<8x128xf32>
    %81 = arith.addf %79, %80 : vector<8x128xf32>
    %82 = math.tanh %81 : vector<8x128xf32>
    %83 = arith.mulf %78, %82 : vector<8x128xf32>
    %c1_i32 = arith.constant 1 : i32
    %c8_i32_35 = arith.constant 8 : i32
    %84 = arith.muli %c1_i32, %c8_i32_35 : i32
    %85 = arith.index_cast %84 : i32 to index
    %c0_36 = arith.constant 0 : index
    %86 = vector.load %arg9[%85, %c0_36] : memref<64x512xf32, #tpu.memory_space<vmem>>, vector<8x512xf32>
    %87 = arith.truncf %45 : vector<8x128xf32> to vector<8x128xbf16>
    %c0_37 = arith.constant 0 : index
    %c0_38 = arith.constant 0 : index
    %88 = vector.load %arg3[%c0_37, %c0_38] : memref<128x512xbf16, #tpu.memory_space<vmem>>, vector<128x512xbf16>
    %cst_39 = arith.constant dense<0.000000e+00> : vector<8x512xf32>
    %89 = tpu.matmul %87, %88, %cst_39 {dimension_numbers = #tpu.dot_dimension_numbers<[1], [0], [0], [1], [0, 0, 1, 1], [], []>} : vector<8x128xbf16>, vector<128x512xbf16>, vector<8x512xf32> -> vector<8x512xf32>
    %90 = arith.addf %86, %89 : vector<8x512xf32>
    %91 = vector.extract_strided_slice %90 {offsets = [0, 0], sizes = [8, 128], strides = [1, 1]} : vector<8x512xf32> to vector<8x128xf32>
    %cst_40 = arith.constant 5.000000e-01 : f32
    %92 = vector.broadcast %cst_40 : f32 to vector<8x128xf32>
    %93 = arith.mulf %92, %91 : vector<8x128xf32>
    %94 = math.tanh %93 : vector<8x128xf32>
    %cst_41 = arith.constant 5.000000e-01 : f32
    %95 = vector.broadcast %cst_41 : f32 to vector<8x128xf32>
    %96 = arith.mulf %95, %94 : vector<8x128xf32>
    %cst_42 = arith.constant 5.000000e-01 : f32
    %97 = vector.broadcast %cst_42 : f32 to vector<8x128xf32>
    %98 = arith.addf %96, %97 : vector<8x128xf32>
    %99 = vector.extract_strided_slice %90 {offsets = [0, 128], sizes = [8, 128], strides = [1, 1]} : vector<8x512xf32> to vector<8x128xf32>
    %cst_43 = arith.constant 5.000000e-01 : f32
    %100 = vector.broadcast %cst_43 : f32 to vector<8x128xf32>
    %101 = arith.mulf %100, %99 : vector<8x128xf32>
    %102 = math.tanh %101 : vector<8x128xf32>
    %cst_44 = arith.constant 5.000000e-01 : f32
    %103 = vector.broadcast %cst_44 : f32 to vector<8x128xf32>
    %104 = arith.mulf %103, %102 : vector<8x128xf32>
    %cst_45 = arith.constant 5.000000e-01 : f32
    %105 = vector.broadcast %cst_45 : f32 to vector<8x128xf32>
    %106 = arith.addf %104, %105 : vector<8x128xf32>
    %107 = vector.extract_strided_slice %90 {offsets = [0, 256], sizes = [8, 128], strides = [1, 1]} : vector<8x512xf32> to vector<8x128xf32>
    %108 = math.tanh %107 : vector<8x128xf32>
    %109 = vector.extract_strided_slice %90 {offsets = [0, 384], sizes = [8, 128], strides = [1, 1]} : vector<8x512xf32> to vector<8x128xf32>
    %cst_46 = arith.constant 5.000000e-01 : f32
    %110 = vector.broadcast %cst_46 : f32 to vector<8x128xf32>
    %111 = arith.mulf %110, %109 : vector<8x128xf32>
    %112 = math.tanh %111 : vector<8x128xf32>
    %cst_47 = arith.constant 5.000000e-01 : f32
    %113 = vector.broadcast %cst_47 : f32 to vector<8x128xf32>
    %114 = arith.mulf %113, %112 : vector<8x128xf32>
    %cst_48 = arith.constant 5.000000e-01 : f32
    %115 = vector.broadcast %cst_48 : f32 to vector<8x128xf32>
    %116 = arith.addf %114, %115 : vector<8x128xf32>
    %117 = arith.mulf %106, %43 : vector<8x128xf32>
    %118 = arith.mulf %98, %108 : vector<8x128xf32>
    %119 = arith.addf %117, %118 : vector<8x128xf32>
    %120 = math.tanh %119 : vector<8x128xf32>
    %121 = arith.mulf %116, %120 : vector<8x128xf32>
    %122 = tpu.concatenate %121, %83 in 1 : vector<8x128xf32>, vector<8x128xf32> -> vector<8x256xf32>
    %123 = arith.truncf %122 : vector<8x256xf32> to vector<8x256xbf16>
    %c0_49 = arith.constant 0 : index
    %c0_50 = arith.constant 0 : index
    %124 = vector.load %arg4[%c0_49, %c0_50] : memref<256x512xbf16, #tpu.memory_space<vmem>>, vector<256x512xbf16>
    %cst_51 = arith.constant dense<0.000000e+00> : vector<8x512xf32>
    %125 = tpu.matmul %123, %124, %cst_51 {dimension_numbers = #tpu.dot_dimension_numbers<[1], [0], [0], [1], [0, 0, 1, 1], [], []>} : vector<8x256xbf16>, vector<256x512xbf16>, vector<8x512xf32> -> vector<8x512xf32>
    %c0_52 = arith.constant 0 : index
    %c0_53 = arith.constant 0 : index
    %126 = vector.load %arg5[%c0_52, %c0_53] : memref<1x512xf32, #tpu.memory_space<vmem>>, vector<1x512xf32>
    %127 = vector.broadcast %126 : vector<1x512xf32> to vector<8x512xf32>
    %128 = arith.addf %125, %127 : vector<8x512xf32>
    %129 = vector.extract_strided_slice %128 {offsets = [0, 0], sizes = [8, 128], strides = [1, 1]} : vector<8x512xf32> to vector<8x128xf32>
    %cst_54 = arith.constant 5.000000e-01 : f32
    %130 = vector.broadcast %cst_54 : f32 to vector<8x128xf32>
    %131 = arith.mulf %130, %129 : vector<8x128xf32>
    %132 = math.tanh %131 : vector<8x128xf32>
    %cst_55 = arith.constant 5.000000e-01 : f32
    %133 = vector.broadcast %cst_55 : f32 to vector<8x128xf32>
    %134 = arith.mulf %133, %132 : vector<8x128xf32>
    %cst_56 = arith.constant 5.000000e-01 : f32
    %135 = vector.broadcast %cst_56 : f32 to vector<8x128xf32>
    %136 = arith.addf %134, %135 : vector<8x128xf32>
    %137 = vector.extract_strided_slice %128 {offsets = [0, 128], sizes = [8, 128], strides = [1, 1]} : vector<8x512xf32> to vector<8x128xf32>
    %cst_57 = arith.constant 5.000000e-01 : f32
    %138 = vector.broadcast %cst_57 : f32 to vector<8x128xf32>
    %139 = arith.mulf %138, %137 : vector<8x128xf32>
    %140 = math.tanh %139 : vector<8x128xf32>
    %cst_58 = arith.constant 5.000000e-01 : f32
    %141 = vector.broadcast %cst_58 : f32 to vector<8x128xf32>
    %142 = arith.mulf %141, %140 : vector<8x128xf32>
    %cst_59 = arith.constant 5.000000e-01 : f32
    %143 = vector.broadcast %cst_59 : f32 to vector<8x128xf32>
    %144 = arith.addf %142, %143 : vector<8x128xf32>
    %145 = vector.extract_strided_slice %128 {offsets = [0, 256], sizes = [8, 128], strides = [1, 1]} : vector<8x512xf32> to vector<8x128xf32>
    %146 = math.tanh %145 : vector<8x128xf32>
    %147 = vector.extract_strided_slice %128 {offsets = [0, 384], sizes = [8, 128], strides = [1, 1]} : vector<8x512xf32> to vector<8x128xf32>
    %cst_60 = arith.constant 5.000000e-01 : f32
    %148 = vector.broadcast %cst_60 : f32 to vector<8x128xf32>
    %149 = arith.mulf %148, %147 : vector<8x128xf32>
    %150 = math.tanh %149 : vector<8x128xf32>
    %cst_61 = arith.constant 5.000000e-01 : f32
    %151 = vector.broadcast %cst_61 : f32 to vector<8x128xf32>
    %152 = arith.mulf %151, %150 : vector<8x128xf32>
    %cst_62 = arith.constant 5.000000e-01 : f32
    %153 = vector.broadcast %cst_62 : f32 to vector<8x128xf32>
    %154 = arith.addf %152, %153 : vector<8x128xf32>
    %155 = arith.mulf %144, %81 : vector<8x128xf32>
    %156 = arith.mulf %136, %146 : vector<8x128xf32>
    %157 = arith.addf %155, %156 : vector<8x128xf32>
    %158 = math.tanh %157 : vector<8x128xf32>
    %159 = arith.mulf %154, %158 : vector<8x128xf32>
    %c2_i32 = arith.constant 2 : i32
    %c8_i32_63 = arith.constant 8 : i32
    %160 = arith.muli %c2_i32, %c8_i32_63 : i32
    %161 = arith.index_cast %160 : i32 to index
    %c0_64 = arith.constant 0 : index
    %162 = vector.load %arg9[%161, %c0_64] : memref<64x512xf32, #tpu.memory_space<vmem>>, vector<8x512xf32>
    %163 = arith.truncf %121 : vector<8x128xf32> to vector<8x128xbf16>
    %c0_65 = arith.constant 0 : index
    %c0_66 = arith.constant 0 : index
    %164 = vector.load %arg3[%c0_65, %c0_66] : memref<128x512xbf16, #tpu.memory_space<vmem>>, vector<128x512xbf16>
    %cst_67 = arith.constant dense<0.000000e+00> : vector<8x512xf32>
    %165 = tpu.matmul %163, %164, %cst_67 {dimension_numbers = #tpu.dot_dimension_numbers<[1], [0], [0], [1], [0, 0, 1, 1], [], []>} : vector<8x128xbf16>, vector<128x512xbf16>, vector<8x512xf32> -> vector<8x512xf32>
    %166 = arith.addf %162, %165 : vector<8x512xf32>
    %167 = vector.extract_strided_slice %166 {offsets = [0, 0], sizes = [8, 128], strides = [1, 1]} : vector<8x512xf32> to vector<8x128xf32>
    %cst_68 = arith.constant 5.000000e-01 : f32
    %168 = vector.broadcast %cst_68 : f32 to vector<8x128xf32>
    %169 = arith.mulf %168, %167 : vector<8x128xf32>
    %170 = math.tanh %169 : vector<8x128xf32>
    %cst_69 = arith.constant 5.000000e-01 : f32
    %171 = vector.broadcast %cst_69 : f32 to vector<8x128xf32>
    %172 = arith.mulf %171, %170 : vector<8x128xf32>
    %cst_70 = arith.constant 5.000000e-01 : f32
    %173 = vector.broadcast %cst_70 : f32 to vector<8x128xf32>
    %174 = arith.addf %172, %173 : vector<8x128xf32>
    %175 = vector.extract_strided_slice %166 {offsets = [0, 128], sizes = [8, 128], strides = [1, 1]} : vector<8x512xf32> to vector<8x128xf32>
    %cst_71 = arith.constant 5.000000e-01 : f32
    %176 = vector.broadcast %cst_71 : f32 to vector<8x128xf32>
    %177 = arith.mulf %176, %175 : vector<8x128xf32>
    %178 = math.tanh %177 : vector<8x128xf32>
    %cst_72 = arith.constant 5.000000e-01 : f32
    %179 = vector.broadcast %cst_72 : f32 to vector<8x128xf32>
    %180 = arith.mulf %179, %178 : vector<8x128xf32>
    %cst_73 = arith.constant 5.000000e-01 : f32
    %181 = vector.broadcast %cst_73 : f32 to vector<8x128xf32>
    %182 = arith.addf %180, %181 : vector<8x128xf32>
    %183 = vector.extract_strided_slice %166 {offsets = [0, 256], sizes = [8, 128], strides = [1, 1]} : vector<8x512xf32> to vector<8x128xf32>
    %184 = math.tanh %183 : vector<8x128xf32>
    %185 = vector.extract_strided_slice %166 {offsets = [0, 384], sizes = [8, 128], strides = [1, 1]} : vector<8x512xf32> to vector<8x128xf32>
    %cst_74 = arith.constant 5.000000e-01 : f32
    %186 = vector.broadcast %cst_74 : f32 to vector<8x128xf32>
    %187 = arith.mulf %186, %185 : vector<8x128xf32>
    %188 = math.tanh %187 : vector<8x128xf32>
    %cst_75 = arith.constant 5.000000e-01 : f32
    %189 = vector.broadcast %cst_75 : f32 to vector<8x128xf32>
    %190 = arith.mulf %189, %188 : vector<8x128xf32>
    %cst_76 = arith.constant 5.000000e-01 : f32
    %191 = vector.broadcast %cst_76 : f32 to vector<8x128xf32>
    %192 = arith.addf %190, %191 : vector<8x128xf32>
    %193 = arith.mulf %182, %119 : vector<8x128xf32>
    %194 = arith.mulf %174, %184 : vector<8x128xf32>
    %195 = arith.addf %193, %194 : vector<8x128xf32>
    %196 = math.tanh %195 : vector<8x128xf32>
    %197 = arith.mulf %192, %196 : vector<8x128xf32>
    %198 = tpu.concatenate %197, %159 in 1 : vector<8x128xf32>, vector<8x128xf32> -> vector<8x256xf32>
    %199 = arith.truncf %198 : vector<8x256xf32> to vector<8x256xbf16>
    %c0_77 = arith.constant 0 : index
    %c0_78 = arith.constant 0 : index
    %200 = vector.load %arg4[%c0_77, %c0_78] : memref<256x512xbf16, #tpu.memory_space<vmem>>, vector<256x512xbf16>
    %cst_79 = arith.constant dense<0.000000e+00> : vector<8x512xf32>
    %201 = tpu.matmul %199, %200, %cst_79 {dimension_numbers = #tpu.dot_dimension_numbers<[1], [0], [0], [1], [0, 0, 1, 1], [], []>} : vector<8x256xbf16>, vector<256x512xbf16>, vector<8x512xf32> -> vector<8x512xf32>
    %c0_80 = arith.constant 0 : index
    %c0_81 = arith.constant 0 : index
    %202 = vector.load %arg5[%c0_80, %c0_81] : memref<1x512xf32, #tpu.memory_space<vmem>>, vector<1x512xf32>
    %203 = vector.broadcast %202 : vector<1x512xf32> to vector<8x512xf32>
    %204 = arith.addf %201, %203 : vector<8x512xf32>
    %205 = vector.extract_strided_slice %204 {offsets = [0, 0], sizes = [8, 128], strides = [1, 1]} : vector<8x512xf32> to vector<8x128xf32>
    %cst_82 = arith.constant 5.000000e-01 : f32
    %206 = vector.broadcast %cst_82 : f32 to vector<8x128xf32>
    %207 = arith.mulf %206, %205 : vector<8x128xf32>
    %208 = math.tanh %207 : vector<8x128xf32>
    %cst_83 = arith.constant 5.000000e-01 : f32
    %209 = vector.broadcast %cst_83 : f32 to vector<8x128xf32>
    %210 = arith.mulf %209, %208 : vector<8x128xf32>
    %cst_84 = arith.constant 5.000000e-01 : f32
    %211 = vector.broadcast %cst_84 : f32 to vector<8x128xf32>
    %212 = arith.addf %210, %211 : vector<8x128xf32>
    %213 = vector.extract_strided_slice %204 {offsets = [0, 128], sizes = [8, 128], strides = [1, 1]} : vector<8x512xf32> to vector<8x128xf32>
    %cst_85 = arith.constant 5.000000e-01 : f32
    %214 = vector.broadcast %cst_85 : f32 to vector<8x128xf32>
    %215 = arith.mulf %214, %213 : vector<8x128xf32>
    %216 = math.tanh %215 : vector<8x128xf32>
    %cst_86 = arith.constant 5.000000e-01 : f32
    %217 = vector.broadcast %cst_86 : f32 to vector<8x128xf32>
    %218 = arith.mulf %217, %216 : vector<8x128xf32>
    %cst_87 = arith.constant 5.000000e-01 : f32
    %219 = vector.broadcast %cst_87 : f32 to vector<8x128xf32>
    %220 = arith.addf %218, %219 : vector<8x128xf32>
    %221 = vector.extract_strided_slice %204 {offsets = [0, 256], sizes = [8, 128], strides = [1, 1]} : vector<8x512xf32> to vector<8x128xf32>
    %222 = math.tanh %221 : vector<8x128xf32>
    %223 = vector.extract_strided_slice %204 {offsets = [0, 384], sizes = [8, 128], strides = [1, 1]} : vector<8x512xf32> to vector<8x128xf32>
    %cst_88 = arith.constant 5.000000e-01 : f32
    %224 = vector.broadcast %cst_88 : f32 to vector<8x128xf32>
    %225 = arith.mulf %224, %223 : vector<8x128xf32>
    %226 = math.tanh %225 : vector<8x128xf32>
    %cst_89 = arith.constant 5.000000e-01 : f32
    %227 = vector.broadcast %cst_89 : f32 to vector<8x128xf32>
    %228 = arith.mulf %227, %226 : vector<8x128xf32>
    %cst_90 = arith.constant 5.000000e-01 : f32
    %229 = vector.broadcast %cst_90 : f32 to vector<8x128xf32>
    %230 = arith.addf %228, %229 : vector<8x128xf32>
    %231 = arith.mulf %220, %157 : vector<8x128xf32>
    %232 = arith.mulf %212, %222 : vector<8x128xf32>
    %233 = arith.addf %231, %232 : vector<8x128xf32>
    %234 = math.tanh %233 : vector<8x128xf32>
    %235 = arith.mulf %230, %234 : vector<8x128xf32>
    %c3_i32 = arith.constant 3 : i32
    %c8_i32_91 = arith.constant 8 : i32
    %236 = arith.muli %c3_i32, %c8_i32_91 : i32
    %237 = arith.index_cast %236 : i32 to index
    %c0_92 = arith.constant 0 : index
    %238 = vector.load %arg9[%237, %c0_92] : memref<64x512xf32, #tpu.memory_space<vmem>>, vector<8x512xf32>
    %239 = arith.truncf %197 : vector<8x128xf32> to vector<8x128xbf16>
    %c0_93 = arith.constant 0 : index
    %c0_94 = arith.constant 0 : index
    %240 = vector.load %arg3[%c0_93, %c0_94] : memref<128x512xbf16, #tpu.memory_space<vmem>>, vector<128x512xbf16>
    %cst_95 = arith.constant dense<0.000000e+00> : vector<8x512xf32>
    %241 = tpu.matmul %239, %240, %cst_95 {dimension_numbers = #tpu.dot_dimension_numbers<[1], [0], [0], [1], [0, 0, 1, 1], [], []>} : vector<8x128xbf16>, vector<128x512xbf16>, vector<8x512xf32> -> vector<8x512xf32>
    %242 = arith.addf %238, %241 : vector<8x512xf32>
    %243 = vector.extract_strided_slice %242 {offsets = [0, 0], sizes = [8, 128], strides = [1, 1]} : vector<8x512xf32> to vector<8x128xf32>
    %cst_96 = arith.constant 5.000000e-01 : f32
    %244 = vector.broadcast %cst_96 : f32 to vector<8x128xf32>
    %245 = arith.mulf %244, %243 : vector<8x128xf32>
    %246 = math.tanh %245 : vector<8x128xf32>
    %cst_97 = arith.constant 5.000000e-01 : f32
    %247 = vector.broadcast %cst_97 : f32 to vector<8x128xf32>
    %248 = arith.mulf %247, %246 : vector<8x128xf32>
    %cst_98 = arith.constant 5.000000e-01 : f32
    %249 = vector.broadcast %cst_98 : f32 to vector<8x128xf32>
    %250 = arith.addf %248, %249 : vector<8x128xf32>
    %251 = vector.extract_strided_slice %242 {offsets = [0, 128], sizes = [8, 128], strides = [1, 1]} : vector<8x512xf32> to vector<8x128xf32>
    %cst_99 = arith.constant 5.000000e-01 : f32
    %252 = vector.broadcast %cst_99 : f32 to vector<8x128xf32>
    %253 = arith.mulf %252, %251 : vector<8x128xf32>
    %254 = math.tanh %253 : vector<8x128xf32>
    %cst_100 = arith.constant 5.000000e-01 : f32
    %255 = vector.broadcast %cst_100 : f32 to vector<8x128xf32>
    %256 = arith.mulf %255, %254 : vector<8x128xf32>
    %cst_101 = arith.constant 5.000000e-01 : f32
    %257 = vector.broadcast %cst_101 : f32 to vector<8x128xf32>
    %258 = arith.addf %256, %257 : vector<8x128xf32>
    %259 = vector.extract_strided_slice %242 {offsets = [0, 256], sizes = [8, 128], strides = [1, 1]} : vector<8x512xf32> to vector<8x128xf32>
    %260 = math.tanh %259 : vector<8x128xf32>
    %261 = vector.extract_strided_slice %242 {offsets = [0, 384], sizes = [8, 128], strides = [1, 1]} : vector<8x512xf32> to vector<8x128xf32>
    %cst_102 = arith.constant 5.000000e-01 : f32
    %262 = vector.broadcast %cst_102 : f32 to vector<8x128xf32>
    %263 = arith.mulf %262, %261 : vector<8x128xf32>
    %264 = math.tanh %263 : vector<8x128xf32>
    %cst_103 = arith.constant 5.000000e-01 : f32
    %265 = vector.broadcast %cst_103 : f32 to vector<8x128xf32>
    %266 = arith.mulf %265, %264 : vector<8x128xf32>
    %cst_104 = arith.constant 5.000000e-01 : f32
    %267 = vector.broadcast %cst_104 : f32 to vector<8x128xf32>
    %268 = arith.addf %266, %267 : vector<8x128xf32>
    %269 = arith.mulf %258, %195 : vector<8x128xf32>
    %270 = arith.mulf %250, %260 : vector<8x128xf32>
    %271 = arith.addf %269, %270 : vector<8x128xf32>
    %272 = math.tanh %271 : vector<8x128xf32>
    %273 = arith.mulf %268, %272 : vector<8x128xf32>
    %274 = tpu.concatenate %273, %235 in 1 : vector<8x128xf32>, vector<8x128xf32> -> vector<8x256xf32>
    %275 = arith.truncf %274 : vector<8x256xf32> to vector<8x256xbf16>
    %c0_105 = arith.constant 0 : index
    %c0_106 = arith.constant 0 : index
    %276 = vector.load %arg4[%c0_105, %c0_106] : memref<256x512xbf16, #tpu.memory_space<vmem>>, vector<256x512xbf16>
    %cst_107 = arith.constant dense<0.000000e+00> : vector<8x512xf32>
    %277 = tpu.matmul %275, %276, %cst_107 {dimension_numbers = #tpu.dot_dimension_numbers<[1], [0], [0], [1], [0, 0, 1, 1], [], []>} : vector<8x256xbf16>, vector<256x512xbf16>, vector<8x512xf32> -> vector<8x512xf32>
    %c0_108 = arith.constant 0 : index
    %c0_109 = arith.constant 0 : index
    %278 = vector.load %arg5[%c0_108, %c0_109] : memref<1x512xf32, #tpu.memory_space<vmem>>, vector<1x512xf32>
    %279 = vector.broadcast %278 : vector<1x512xf32> to vector<8x512xf32>
    %280 = arith.addf %277, %279 : vector<8x512xf32>
    %281 = vector.extract_strided_slice %280 {offsets = [0, 0], sizes = [8, 128], strides = [1, 1]} : vector<8x512xf32> to vector<8x128xf32>
    %cst_110 = arith.constant 5.000000e-01 : f32
    %282 = vector.broadcast %cst_110 : f32 to vector<8x128xf32>
    %283 = arith.mulf %282, %281 : vector<8x128xf32>
    %284 = math.tanh %283 : vector<8x128xf32>
    %cst_111 = arith.constant 5.000000e-01 : f32
    %285 = vector.broadcast %cst_111 : f32 to vector<8x128xf32>
    %286 = arith.mulf %285, %284 : vector<8x128xf32>
    %cst_112 = arith.constant 5.000000e-01 : f32
    %287 = vector.broadcast %cst_112 : f32 to vector<8x128xf32>
    %288 = arith.addf %286, %287 : vector<8x128xf32>
    %289 = vector.extract_strided_slice %280 {offsets = [0, 128], sizes = [8, 128], strides = [1, 1]} : vector<8x512xf32> to vector<8x128xf32>
    %cst_113 = arith.constant 5.000000e-01 : f32
    %290 = vector.broadcast %cst_113 : f32 to vector<8x128xf32>
    %291 = arith.mulf %290, %289 : vector<8x128xf32>
    %292 = math.tanh %291 : vector<8x128xf32>
    %cst_114 = arith.constant 5.000000e-01 : f32
    %293 = vector.broadcast %cst_114 : f32 to vector<8x128xf32>
    %294 = arith.mulf %293, %292 : vector<8x128xf32>
    %cst_115 = arith.constant 5.000000e-01 : f32
    %295 = vector.broadcast %cst_115 : f32 to vector<8x128xf32>
    %296 = arith.addf %294, %295 : vector<8x128xf32>
    %297 = vector.extract_strided_slice %280 {offsets = [0, 256], sizes = [8, 128], strides = [1, 1]} : vector<8x512xf32> to vector<8x128xf32>
    %298 = math.tanh %297 : vector<8x128xf32>
    %299 = vector.extract_strided_slice %280 {offsets = [0, 384], sizes = [8, 128], strides = [1, 1]} : vector<8x512xf32> to vector<8x128xf32>
    %cst_116 = arith.constant 5.000000e-01 : f32
    %300 = vector.broadcast %cst_116 : f32 to vector<8x128xf32>
    %301 = arith.mulf %300, %299 : vector<8x128xf32>
    %302 = math.tanh %301 : vector<8x128xf32>
    %cst_117 = arith.constant 5.000000e-01 : f32
    %303 = vector.broadcast %cst_117 : f32 to vector<8x128xf32>
    %304 = arith.mulf %303, %302 : vector<8x128xf32>
    %cst_118 = arith.constant 5.000000e-01 : f32
    %305 = vector.broadcast %cst_118 : f32 to vector<8x128xf32>
    %306 = arith.addf %304, %305 : vector<8x128xf32>
    %307 = arith.mulf %296, %233 : vector<8x128xf32>
    %308 = arith.mulf %288, %298 : vector<8x128xf32>
    %309 = arith.addf %307, %308 : vector<8x128xf32>
    %310 = math.tanh %309 : vector<8x128xf32>
    %311 = arith.mulf %306, %310 : vector<8x128xf32>
    %c4_i32 = arith.constant 4 : i32
    %c8_i32_119 = arith.constant 8 : i32
    %312 = arith.muli %c4_i32, %c8_i32_119 : i32
    %313 = arith.index_cast %312 : i32 to index
    %c0_120 = arith.constant 0 : index
    %314 = vector.load %arg9[%313, %c0_120] : memref<64x512xf32, #tpu.memory_space<vmem>>, vector<8x512xf32>
    %315 = arith.truncf %273 : vector<8x128xf32> to vector<8x128xbf16>
    %c0_121 = arith.constant 0 : index
    %c0_122 = arith.constant 0 : index
    %316 = vector.load %arg3[%c0_121, %c0_122] : memref<128x512xbf16, #tpu.memory_space<vmem>>, vector<128x512xbf16>
    %cst_123 = arith.constant dense<0.000000e+00> : vector<8x512xf32>
    %317 = tpu.matmul %315, %316, %cst_123 {dimension_numbers = #tpu.dot_dimension_numbers<[1], [0], [0], [1], [0, 0, 1, 1], [], []>} : vector<8x128xbf16>, vector<128x512xbf16>, vector<8x512xf32> -> vector<8x512xf32>
    %318 = arith.addf %314, %317 : vector<8x512xf32>
    %319 = vector.extract_strided_slice %318 {offsets = [0, 0], sizes = [8, 128], strides = [1, 1]} : vector<8x512xf32> to vector<8x128xf32>
    %cst_124 = arith.constant 5.000000e-01 : f32
    %320 = vector.broadcast %cst_124 : f32 to vector<8x128xf32>
    %321 = arith.mulf %320, %319 : vector<8x128xf32>
    %322 = math.tanh %321 : vector<8x128xf32>
    %cst_125 = arith.constant 5.000000e-01 : f32
    %323 = vector.broadcast %cst_125 : f32 to vector<8x128xf32>
    %324 = arith.mulf %323, %322 : vector<8x128xf32>
    %cst_126 = arith.constant 5.000000e-01 : f32
    %325 = vector.broadcast %cst_126 : f32 to vector<8x128xf32>
    %326 = arith.addf %324, %325 : vector<8x128xf32>
    %327 = vector.extract_strided_slice %318 {offsets = [0, 128], sizes = [8, 128], strides = [1, 1]} : vector<8x512xf32> to vector<8x128xf32>
    %cst_127 = arith.constant 5.000000e-01 : f32
    %328 = vector.broadcast %cst_127 : f32 to vector<8x128xf32>
    %329 = arith.mulf %328, %327 : vector<8x128xf32>
    %330 = math.tanh %329 : vector<8x128xf32>
    %cst_128 = arith.constant 5.000000e-01 : f32
    %331 = vector.broadcast %cst_128 : f32 to vector<8x128xf32>
    %332 = arith.mulf %331, %330 : vector<8x128xf32>
    %cst_129 = arith.constant 5.000000e-01 : f32
    %333 = vector.broadcast %cst_129 : f32 to vector<8x128xf32>
    %334 = arith.addf %332, %333 : vector<8x128xf32>
    %335 = vector.extract_strided_slice %318 {offsets = [0, 256], sizes = [8, 128], strides = [1, 1]} : vector<8x512xf32> to vector<8x128xf32>
    %336 = math.tanh %335 : vector<8x128xf32>
    %337 = vector.extract_strided_slice %318 {offsets = [0, 384], sizes = [8, 128], strides = [1, 1]} : vector<8x512xf32> to vector<8x128xf32>
    %cst_130 = arith.constant 5.000000e-01 : f32
    %338 = vector.broadcast %cst_130 : f32 to vector<8x128xf32>
    %339 = arith.mulf %338, %337 : vector<8x128xf32>
    %340 = math.tanh %339 : vector<8x128xf32>
    %cst_131 = arith.constant 5.000000e-01 : f32
    %341 = vector.broadcast %cst_131 : f32 to vector<8x128xf32>
    %342 = arith.mulf %341, %340 : vector<8x128xf32>
    %cst_132 = arith.constant 5.000000e-01 : f32
    %343 = vector.broadcast %cst_132 : f32 to vector<8x128xf32>
    %344 = arith.addf %342, %343 : vector<8x128xf32>
    %345 = arith.mulf %334, %271 : vector<8x128xf32>
    %346 = arith.mulf %326, %336 : vector<8x128xf32>
    %347 = arith.addf %345, %346 : vector<8x128xf32>
    %348 = math.tanh %347 : vector<8x128xf32>
    %349 = arith.mulf %344, %348 : vector<8x128xf32>
    %350 = tpu.concatenate %349, %311 in 1 : vector<8x128xf32>, vector<8x128xf32> -> vector<8x256xf32>
    %351 = arith.truncf %350 : vector<8x256xf32> to vector<8x256xbf16>
    %c0_133 = arith.constant 0 : index
    %c0_134 = arith.constant 0 : index
    %352 = vector.load %arg4[%c0_133, %c0_134] : memref<256x512xbf16, #tpu.memory_space<vmem>>, vector<256x512xbf16>
    %cst_135 = arith.constant dense<0.000000e+00> : vector<8x512xf32>
    %353 = tpu.matmul %351, %352, %cst_135 {dimension_numbers = #tpu.dot_dimension_numbers<[1], [0], [0], [1], [0, 0, 1, 1], [], []>} : vector<8x256xbf16>, vector<256x512xbf16>, vector<8x512xf32> -> vector<8x512xf32>
    %c0_136 = arith.constant 0 : index
    %c0_137 = arith.constant 0 : index
    %354 = vector.load %arg5[%c0_136, %c0_137] : memref<1x512xf32, #tpu.memory_space<vmem>>, vector<1x512xf32>
    %355 = vector.broadcast %354 : vector<1x512xf32> to vector<8x512xf32>
    %356 = arith.addf %353, %355 : vector<8x512xf32>
    %357 = vector.extract_strided_slice %356 {offsets = [0, 0], sizes = [8, 128], strides = [1, 1]} : vector<8x512xf32> to vector<8x128xf32>
    %cst_138 = arith.constant 5.000000e-01 : f32
    %358 = vector.broadcast %cst_138 : f32 to vector<8x128xf32>
    %359 = arith.mulf %358, %357 : vector<8x128xf32>
    %360 = math.tanh %359 : vector<8x128xf32>
    %cst_139 = arith.constant 5.000000e-01 : f32
    %361 = vector.broadcast %cst_139 : f32 to vector<8x128xf32>
    %362 = arith.mulf %361, %360 : vector<8x128xf32>
    %cst_140 = arith.constant 5.000000e-01 : f32
    %363 = vector.broadcast %cst_140 : f32 to vector<8x128xf32>
    %364 = arith.addf %362, %363 : vector<8x128xf32>
    %365 = vector.extract_strided_slice %356 {offsets = [0, 128], sizes = [8, 128], strides = [1, 1]} : vector<8x512xf32> to vector<8x128xf32>
    %cst_141 = arith.constant 5.000000e-01 : f32
    %366 = vector.broadcast %cst_141 : f32 to vector<8x128xf32>
    %367 = arith.mulf %366, %365 : vector<8x128xf32>
    %368 = math.tanh %367 : vector<8x128xf32>
    %cst_142 = arith.constant 5.000000e-01 : f32
    %369 = vector.broadcast %cst_142 : f32 to vector<8x128xf32>
    %370 = arith.mulf %369, %368 : vector<8x128xf32>
    %cst_143 = arith.constant 5.000000e-01 : f32
    %371 = vector.broadcast %cst_143 : f32 to vector<8x128xf32>
    %372 = arith.addf %370, %371 : vector<8x128xf32>
    %373 = vector.extract_strided_slice %356 {offsets = [0, 256], sizes = [8, 128], strides = [1, 1]} : vector<8x512xf32> to vector<8x128xf32>
    %374 = math.tanh %373 : vector<8x128xf32>
    %375 = vector.extract_strided_slice %356 {offsets = [0, 384], sizes = [8, 128], strides = [1, 1]} : vector<8x512xf32> to vector<8x128xf32>
    %cst_144 = arith.constant 5.000000e-01 : f32
    %376 = vector.broadcast %cst_144 : f32 to vector<8x128xf32>
    %377 = arith.mulf %376, %375 : vector<8x128xf32>
    %378 = math.tanh %377 : vector<8x128xf32>
    %cst_145 = arith.constant 5.000000e-01 : f32
    %379 = vector.broadcast %cst_145 : f32 to vector<8x128xf32>
    %380 = arith.mulf %379, %378 : vector<8x128xf32>
    %cst_146 = arith.constant 5.000000e-01 : f32
    %381 = vector.broadcast %cst_146 : f32 to vector<8x128xf32>
    %382 = arith.addf %380, %381 : vector<8x128xf32>
    %383 = arith.mulf %372, %309 : vector<8x128xf32>
    %384 = arith.mulf %364, %374 : vector<8x128xf32>
    %385 = arith.addf %383, %384 : vector<8x128xf32>
    %386 = math.tanh %385 : vector<8x128xf32>
    %387 = arith.mulf %382, %386 : vector<8x128xf32>
    %c5_i32 = arith.constant 5 : i32
    %c8_i32_147 = arith.constant 8 : i32
    %388 = arith.muli %c5_i32, %c8_i32_147 : i32
    %389 = arith.index_cast %388 : i32 to index
    %c0_148 = arith.constant 0 : index
    %390 = vector.load %arg9[%389, %c0_148] : memref<64x512xf32, #tpu.memory_space<vmem>>, vector<8x512xf32>
    %391 = arith.truncf %349 : vector<8x128xf32> to vector<8x128xbf16>
    %c0_149 = arith.constant 0 : index
    %c0_150 = arith.constant 0 : index
    %392 = vector.load %arg3[%c0_149, %c0_150] : memref<128x512xbf16, #tpu.memory_space<vmem>>, vector<128x512xbf16>
    %cst_151 = arith.constant dense<0.000000e+00> : vector<8x512xf32>
    %393 = tpu.matmul %391, %392, %cst_151 {dimension_numbers = #tpu.dot_dimension_numbers<[1], [0], [0], [1], [0, 0, 1, 1], [], []>} : vector<8x128xbf16>, vector<128x512xbf16>, vector<8x512xf32> -> vector<8x512xf32>
    %394 = arith.addf %390, %393 : vector<8x512xf32>
    %395 = vector.extract_strided_slice %394 {offsets = [0, 0], sizes = [8, 128], strides = [1, 1]} : vector<8x512xf32> to vector<8x128xf32>
    %cst_152 = arith.constant 5.000000e-01 : f32
    %396 = vector.broadcast %cst_152 : f32 to vector<8x128xf32>
    %397 = arith.mulf %396, %395 : vector<8x128xf32>
    %398 = math.tanh %397 : vector<8x128xf32>
    %cst_153 = arith.constant 5.000000e-01 : f32
    %399 = vector.broadcast %cst_153 : f32 to vector<8x128xf32>
    %400 = arith.mulf %399, %398 : vector<8x128xf32>
    %cst_154 = arith.constant 5.000000e-01 : f32
    %401 = vector.broadcast %cst_154 : f32 to vector<8x128xf32>
    %402 = arith.addf %400, %401 : vector<8x128xf32>
    %403 = vector.extract_strided_slice %394 {offsets = [0, 128], sizes = [8, 128], strides = [1, 1]} : vector<8x512xf32> to vector<8x128xf32>
    %cst_155 = arith.constant 5.000000e-01 : f32
    %404 = vector.broadcast %cst_155 : f32 to vector<8x128xf32>
    %405 = arith.mulf %404, %403 : vector<8x128xf32>
    %406 = math.tanh %405 : vector<8x128xf32>
    %cst_156 = arith.constant 5.000000e-01 : f32
    %407 = vector.broadcast %cst_156 : f32 to vector<8x128xf32>
    %408 = arith.mulf %407, %406 : vector<8x128xf32>
    %cst_157 = arith.constant 5.000000e-01 : f32
    %409 = vector.broadcast %cst_157 : f32 to vector<8x128xf32>
    %410 = arith.addf %408, %409 : vector<8x128xf32>
    %411 = vector.extract_strided_slice %394 {offsets = [0, 256], sizes = [8, 128], strides = [1, 1]} : vector<8x512xf32> to vector<8x128xf32>
    %412 = math.tanh %411 : vector<8x128xf32>
    %413 = vector.extract_strided_slice %394 {offsets = [0, 384], sizes = [8, 128], strides = [1, 1]} : vector<8x512xf32> to vector<8x128xf32>
    %cst_158 = arith.constant 5.000000e-01 : f32
    %414 = vector.broadcast %cst_158 : f32 to vector<8x128xf32>
    %415 = arith.mulf %414, %413 : vector<8x128xf32>
    %416 = math.tanh %415 : vector<8x128xf32>
    %cst_159 = arith.constant 5.000000e-01 : f32
    %417 = vector.broadcast %cst_159 : f32 to vector<8x128xf32>
    %418 = arith.mulf %417, %416 : vector<8x128xf32>
    %cst_160 = arith.constant 5.000000e-01 : f32
    %419 = vector.broadcast %cst_160 : f32 to vector<8x128xf32>
    %420 = arith.addf %418, %419 : vector<8x128xf32>
    %421 = arith.mulf %410, %347 : vector<8x128xf32>
    %422 = arith.mulf %402, %412 : vector<8x128xf32>
    %423 = arith.addf %421, %422 : vector<8x128xf32>
    %424 = math.tanh %423 : vector<8x128xf32>
    %425 = arith.mulf %420, %424 : vector<8x128xf32>
    %426 = tpu.concatenate %425, %387 in 1 : vector<8x128xf32>, vector<8x128xf32> -> vector<8x256xf32>
    %427 = arith.truncf %426 : vector<8x256xf32> to vector<8x256xbf16>
    %c0_161 = arith.constant 0 : index
    %c0_162 = arith.constant 0 : index
    %428 = vector.load %arg4[%c0_161, %c0_162] : memref<256x512xbf16, #tpu.memory_space<vmem>>, vector<256x512xbf16>
    %cst_163 = arith.constant dense<0.000000e+00> : vector<8x512xf32>
    %429 = tpu.matmul %427, %428, %cst_163 {dimension_numbers = #tpu.dot_dimension_numbers<[1], [0], [0], [1], [0, 0, 1, 1], [], []>} : vector<8x256xbf16>, vector<256x512xbf16>, vector<8x512xf32> -> vector<8x512xf32>
    %c0_164 = arith.constant 0 : index
    %c0_165 = arith.constant 0 : index
    %430 = vector.load %arg5[%c0_164, %c0_165] : memref<1x512xf32, #tpu.memory_space<vmem>>, vector<1x512xf32>
    %431 = vector.broadcast %430 : vector<1x512xf32> to vector<8x512xf32>
    %432 = arith.addf %429, %431 : vector<8x512xf32>
    %433 = vector.extract_strided_slice %432 {offsets = [0, 0], sizes = [8, 128], strides = [1, 1]} : vector<8x512xf32> to vector<8x128xf32>
    %cst_166 = arith.constant 5.000000e-01 : f32
    %434 = vector.broadcast %cst_166 : f32 to vector<8x128xf32>
    %435 = arith.mulf %434, %433 : vector<8x128xf32>
    %436 = math.tanh %435 : vector<8x128xf32>
    %cst_167 = arith.constant 5.000000e-01 : f32
    %437 = vector.broadcast %cst_167 : f32 to vector<8x128xf32>
    %438 = arith.mulf %437, %436 : vector<8x128xf32>
    %cst_168 = arith.constant 5.000000e-01 : f32
    %439 = vector.broadcast %cst_168 : f32 to vector<8x128xf32>
    %440 = arith.addf %438, %439 : vector<8x128xf32>
    %441 = vector.extract_strided_slice %432 {offsets = [0, 128], sizes = [8, 128], strides = [1, 1]} : vector<8x512xf32> to vector<8x128xf32>
    %cst_169 = arith.constant 5.000000e-01 : f32
    %442 = vector.broadcast %cst_169 : f32 to vector<8x128xf32>
    %443 = arith.mulf %442, %441 : vector<8x128xf32>
    %444 = math.tanh %443 : vector<8x128xf32>
    %cst_170 = arith.constant 5.000000e-01 : f32
    %445 = vector.broadcast %cst_170 : f32 to vector<8x128xf32>
    %446 = arith.mulf %445, %444 : vector<8x128xf32>
    %cst_171 = arith.constant 5.000000e-01 : f32
    %447 = vector.broadcast %cst_171 : f32 to vector<8x128xf32>
    %448 = arith.addf %446, %447 : vector<8x128xf32>
    %449 = vector.extract_strided_slice %432 {offsets = [0, 256], sizes = [8, 128], strides = [1, 1]} : vector<8x512xf32> to vector<8x128xf32>
    %450 = math.tanh %449 : vector<8x128xf32>
    %451 = vector.extract_strided_slice %432 {offsets = [0, 384], sizes = [8, 128], strides = [1, 1]} : vector<8x512xf32> to vector<8x128xf32>
    %cst_172 = arith.constant 5.000000e-01 : f32
    %452 = vector.broadcast %cst_172 : f32 to vector<8x128xf32>
    %453 = arith.mulf %452, %451 : vector<8x128xf32>
    %454 = math.tanh %453 : vector<8x128xf32>
    %cst_173 = arith.constant 5.000000e-01 : f32
    %455 = vector.broadcast %cst_173 : f32 to vector<8x128xf32>
    %456 = arith.mulf %455, %454 : vector<8x128xf32>
    %cst_174 = arith.constant 5.000000e-01 : f32
    %457 = vector.broadcast %cst_174 : f32 to vector<8x128xf32>
    %458 = arith.addf %456, %457 : vector<8x128xf32>
    %459 = arith.mulf %448, %385 : vector<8x128xf32>
    %460 = arith.mulf %440, %450 : vector<8x128xf32>
    %461 = arith.addf %459, %460 : vector<8x128xf32>
    %462 = math.tanh %461 : vector<8x128xf32>
    %463 = arith.mulf %458, %462 : vector<8x128xf32>
    %c6_i32 = arith.constant 6 : i32
    %c8_i32_175 = arith.constant 8 : i32
    %464 = arith.muli %c6_i32, %c8_i32_175 : i32
    %465 = arith.index_cast %464 : i32 to index
    %c0_176 = arith.constant 0 : index
    %466 = vector.load %arg9[%465, %c0_176] : memref<64x512xf32, #tpu.memory_space<vmem>>, vector<8x512xf32>
    %467 = arith.truncf %425 : vector<8x128xf32> to vector<8x128xbf16>
    %c0_177 = arith.constant 0 : index
    %c0_178 = arith.constant 0 : index
    %468 = vector.load %arg3[%c0_177, %c0_178] : memref<128x512xbf16, #tpu.memory_space<vmem>>, vector<128x512xbf16>
    %cst_179 = arith.constant dense<0.000000e+00> : vector<8x512xf32>
    %469 = tpu.matmul %467, %468, %cst_179 {dimension_numbers = #tpu.dot_dimension_numbers<[1], [0], [0], [1], [0, 0, 1, 1], [], []>} : vector<8x128xbf16>, vector<128x512xbf16>, vector<8x512xf32> -> vector<8x512xf32>
    %470 = arith.addf %466, %469 : vector<8x512xf32>
    %471 = vector.extract_strided_slice %470 {offsets = [0, 0], sizes = [8, 128], strides = [1, 1]} : vector<8x512xf32> to vector<8x128xf32>
    %cst_180 = arith.constant 5.000000e-01 : f32
    %472 = vector.broadcast %cst_180 : f32 to vector<8x128xf32>
    %473 = arith.mulf %472, %471 : vector<8x128xf32>
    %474 = math.tanh %473 : vector<8x128xf32>
    %cst_181 = arith.constant 5.000000e-01 : f32
    %475 = vector.broadcast %cst_181 : f32 to vector<8x128xf32>
    %476 = arith.mulf %475, %474 : vector<8x128xf32>
    %cst_182 = arith.constant 5.000000e-01 : f32
    %477 = vector.broadcast %cst_182 : f32 to vector<8x128xf32>
    %478 = arith.addf %476, %477 : vector<8x128xf32>
    %479 = vector.extract_strided_slice %470 {offsets = [0, 128], sizes = [8, 128], strides = [1, 1]} : vector<8x512xf32> to vector<8x128xf32>
    %cst_183 = arith.constant 5.000000e-01 : f32
    %480 = vector.broadcast %cst_183 : f32 to vector<8x128xf32>
    %481 = arith.mulf %480, %479 : vector<8x128xf32>
    %482 = math.tanh %481 : vector<8x128xf32>
    %cst_184 = arith.constant 5.000000e-01 : f32
    %483 = vector.broadcast %cst_184 : f32 to vector<8x128xf32>
    %484 = arith.mulf %483, %482 : vector<8x128xf32>
    %cst_185 = arith.constant 5.000000e-01 : f32
    %485 = vector.broadcast %cst_185 : f32 to vector<8x128xf32>
    %486 = arith.addf %484, %485 : vector<8x128xf32>
    %487 = vector.extract_strided_slice %470 {offsets = [0, 256], sizes = [8, 128], strides = [1, 1]} : vector<8x512xf32> to vector<8x128xf32>
    %488 = math.tanh %487 : vector<8x128xf32>
    %489 = vector.extract_strided_slice %470 {offsets = [0, 384], sizes = [8, 128], strides = [1, 1]} : vector<8x512xf32> to vector<8x128xf32>
    %cst_186 = arith.constant 5.000000e-01 : f32
    %490 = vector.broadcast %cst_186 : f32 to vector<8x128xf32>
    %491 = arith.mulf %490, %489 : vector<8x128xf32>
    %492 = math.tanh %491 : vector<8x128xf32>
    %cst_187 = arith.constant 5.000000e-01 : f32
    %493 = vector.broadcast %cst_187 : f32 to vector<8x128xf32>
    %494 = arith.mulf %493, %492 : vector<8x128xf32>
    %cst_188 = arith.constant 5.000000e-01 : f32
    %495 = vector.broadcast %cst_188 : f32 to vector<8x128xf32>
    %496 = arith.addf %494, %495 : vector<8x128xf32>
    %497 = arith.mulf %486, %423 : vector<8x128xf32>
    %498 = arith.mulf %478, %488 : vector<8x128xf32>
    %499 = arith.addf %497, %498 : vector<8x128xf32>
    %500 = math.tanh %499 : vector<8x128xf32>
    %501 = arith.mulf %496, %500 : vector<8x128xf32>
    %502 = tpu.concatenate %501, %463 in 1 : vector<8x128xf32>, vector<8x128xf32> -> vector<8x256xf32>
    %503 = arith.truncf %502 : vector<8x256xf32> to vector<8x256xbf16>
    %c0_189 = arith.constant 0 : index
    %c0_190 = arith.constant 0 : index
    %504 = vector.load %arg4[%c0_189, %c0_190] : memref<256x512xbf16, #tpu.memory_space<vmem>>, vector<256x512xbf16>
    %cst_191 = arith.constant dense<0.000000e+00> : vector<8x512xf32>
    %505 = tpu.matmul %503, %504, %cst_191 {dimension_numbers = #tpu.dot_dimension_numbers<[1], [0], [0], [1], [0, 0, 1, 1], [], []>} : vector<8x256xbf16>, vector<256x512xbf16>, vector<8x512xf32> -> vector<8x512xf32>
    %c0_192 = arith.constant 0 : index
    %c0_193 = arith.constant 0 : index
    %506 = vector.load %arg5[%c0_192, %c0_193] : memref<1x512xf32, #tpu.memory_space<vmem>>, vector<1x512xf32>
    %507 = vector.broadcast %506 : vector<1x512xf32> to vector<8x512xf32>
    %508 = arith.addf %505, %507 : vector<8x512xf32>
    %509 = vector.extract_strided_slice %508 {offsets = [0, 0], sizes = [8, 128], strides = [1, 1]} : vector<8x512xf32> to vector<8x128xf32>
    %cst_194 = arith.constant 5.000000e-01 : f32
    %510 = vector.broadcast %cst_194 : f32 to vector<8x128xf32>
    %511 = arith.mulf %510, %509 : vector<8x128xf32>
    %512 = math.tanh %511 : vector<8x128xf32>
    %cst_195 = arith.constant 5.000000e-01 : f32
    %513 = vector.broadcast %cst_195 : f32 to vector<8x128xf32>
    %514 = arith.mulf %513, %512 : vector<8x128xf32>
    %cst_196 = arith.constant 5.000000e-01 : f32
    %515 = vector.broadcast %cst_196 : f32 to vector<8x128xf32>
    %516 = arith.addf %514, %515 : vector<8x128xf32>
    %517 = vector.extract_strided_slice %508 {offsets = [0, 128], sizes = [8, 128], strides = [1, 1]} : vector<8x512xf32> to vector<8x128xf32>
    %cst_197 = arith.constant 5.000000e-01 : f32
    %518 = vector.broadcast %cst_197 : f32 to vector<8x128xf32>
    %519 = arith.mulf %518, %517 : vector<8x128xf32>
    %520 = math.tanh %519 : vector<8x128xf32>
    %cst_198 = arith.constant 5.000000e-01 : f32
    %521 = vector.broadcast %cst_198 : f32 to vector<8x128xf32>
    %522 = arith.mulf %521, %520 : vector<8x128xf32>
    %cst_199 = arith.constant 5.000000e-01 : f32
    %523 = vector.broadcast %cst_199 : f32 to vector<8x128xf32>
    %524 = arith.addf %522, %523 : vector<8x128xf32>
    %525 = vector.extract_strided_slice %508 {offsets = [0, 256], sizes = [8, 128], strides = [1, 1]} : vector<8x512xf32> to vector<8x128xf32>
    %526 = math.tanh %525 : vector<8x128xf32>
    %527 = vector.extract_strided_slice %508 {offsets = [0, 384], sizes = [8, 128], strides = [1, 1]} : vector<8x512xf32> to vector<8x128xf32>
    %cst_200 = arith.constant 5.000000e-01 : f32
    %528 = vector.broadcast %cst_200 : f32 to vector<8x128xf32>
    %529 = arith.mulf %528, %527 : vector<8x128xf32>
    %530 = math.tanh %529 : vector<8x128xf32>
    %cst_201 = arith.constant 5.000000e-01 : f32
    %531 = vector.broadcast %cst_201 : f32 to vector<8x128xf32>
    %532 = arith.mulf %531, %530 : vector<8x128xf32>
    %cst_202 = arith.constant 5.000000e-01 : f32
    %533 = vector.broadcast %cst_202 : f32 to vector<8x128xf32>
    %534 = arith.addf %532, %533 : vector<8x128xf32>
    %535 = arith.mulf %524, %461 : vector<8x128xf32>
    %536 = arith.mulf %516, %526 : vector<8x128xf32>
    %537 = arith.addf %535, %536 : vector<8x128xf32>
    %538 = math.tanh %537 : vector<8x128xf32>
    %539 = arith.mulf %534, %538 : vector<8x128xf32>
    %c7_i32 = arith.constant 7 : i32
    %c8_i32_203 = arith.constant 8 : i32
    %540 = arith.muli %c7_i32, %c8_i32_203 : i32
    %541 = arith.index_cast %540 : i32 to index
    %c0_204 = arith.constant 0 : index
    %542 = vector.load %arg9[%541, %c0_204] : memref<64x512xf32, #tpu.memory_space<vmem>>, vector<8x512xf32>
    %543 = arith.truncf %501 : vector<8x128xf32> to vector<8x128xbf16>
    %c0_205 = arith.constant 0 : index
    %c0_206 = arith.constant 0 : index
    %544 = vector.load %arg3[%c0_205, %c0_206] : memref<128x512xbf16, #tpu.memory_space<vmem>>, vector<128x512xbf16>
    %cst_207 = arith.constant dense<0.000000e+00> : vector<8x512xf32>
    %545 = tpu.matmul %543, %544, %cst_207 {dimension_numbers = #tpu.dot_dimension_numbers<[1], [0], [0], [1], [0, 0, 1, 1], [], []>} : vector<8x128xbf16>, vector<128x512xbf16>, vector<8x512xf32> -> vector<8x512xf32>
    %546 = arith.addf %542, %545 : vector<8x512xf32>
    %547 = vector.extract_strided_slice %546 {offsets = [0, 0], sizes = [8, 128], strides = [1, 1]} : vector<8x512xf32> to vector<8x128xf32>
    %cst_208 = arith.constant 5.000000e-01 : f32
    %548 = vector.broadcast %cst_208 : f32 to vector<8x128xf32>
    %549 = arith.mulf %548, %547 : vector<8x128xf32>
    %550 = math.tanh %549 : vector<8x128xf32>
    %cst_209 = arith.constant 5.000000e-01 : f32
    %551 = vector.broadcast %cst_209 : f32 to vector<8x128xf32>
    %552 = arith.mulf %551, %550 : vector<8x128xf32>
    %cst_210 = arith.constant 5.000000e-01 : f32
    %553 = vector.broadcast %cst_210 : f32 to vector<8x128xf32>
    %554 = arith.addf %552, %553 : vector<8x128xf32>
    %555 = vector.extract_strided_slice %546 {offsets = [0, 128], sizes = [8, 128], strides = [1, 1]} : vector<8x512xf32> to vector<8x128xf32>
    %cst_211 = arith.constant 5.000000e-01 : f32
    %556 = vector.broadcast %cst_211 : f32 to vector<8x128xf32>
    %557 = arith.mulf %556, %555 : vector<8x128xf32>
    %558 = math.tanh %557 : vector<8x128xf32>
    %cst_212 = arith.constant 5.000000e-01 : f32
    %559 = vector.broadcast %cst_212 : f32 to vector<8x128xf32>
    %560 = arith.mulf %559, %558 : vector<8x128xf32>
    %cst_213 = arith.constant 5.000000e-01 : f32
    %561 = vector.broadcast %cst_213 : f32 to vector<8x128xf32>
    %562 = arith.addf %560, %561 : vector<8x128xf32>
    %563 = vector.extract_strided_slice %546 {offsets = [0, 256], sizes = [8, 128], strides = [1, 1]} : vector<8x512xf32> to vector<8x128xf32>
    %564 = math.tanh %563 : vector<8x128xf32>
    %565 = vector.extract_strided_slice %546 {offsets = [0, 384], sizes = [8, 128], strides = [1, 1]} : vector<8x512xf32> to vector<8x128xf32>
    %cst_214 = arith.constant 5.000000e-01 : f32
    %566 = vector.broadcast %cst_214 : f32 to vector<8x128xf32>
    %567 = arith.mulf %566, %565 : vector<8x128xf32>
    %568 = math.tanh %567 : vector<8x128xf32>
    %cst_215 = arith.constant 5.000000e-01 : f32
    %569 = vector.broadcast %cst_215 : f32 to vector<8x128xf32>
    %570 = arith.mulf %569, %568 : vector<8x128xf32>
    %cst_216 = arith.constant 5.000000e-01 : f32
    %571 = vector.broadcast %cst_216 : f32 to vector<8x128xf32>
    %572 = arith.addf %570, %571 : vector<8x128xf32>
    %573 = arith.mulf %562, %499 : vector<8x128xf32>
    %574 = arith.mulf %554, %564 : vector<8x128xf32>
    %575 = arith.addf %573, %574 : vector<8x128xf32>
    %576 = math.tanh %575 : vector<8x128xf32>
    %577 = arith.mulf %572, %576 : vector<8x128xf32>
    %578 = tpu.concatenate %577, %539 in 1 : vector<8x128xf32>, vector<8x128xf32> -> vector<8x256xf32>
    %579 = arith.truncf %578 : vector<8x256xf32> to vector<8x256xbf16>
    %c0_217 = arith.constant 0 : index
    %c0_218 = arith.constant 0 : index
    %580 = vector.load %arg4[%c0_217, %c0_218] : memref<256x512xbf16, #tpu.memory_space<vmem>>, vector<256x512xbf16>
    %cst_219 = arith.constant dense<0.000000e+00> : vector<8x512xf32>
    %581 = tpu.matmul %579, %580, %cst_219 {dimension_numbers = #tpu.dot_dimension_numbers<[1], [0], [0], [1], [0, 0, 1, 1], [], []>} : vector<8x256xbf16>, vector<256x512xbf16>, vector<8x512xf32> -> vector<8x512xf32>
    %c0_220 = arith.constant 0 : index
    %c0_221 = arith.constant 0 : index
    %582 = vector.load %arg5[%c0_220, %c0_221] : memref<1x512xf32, #tpu.memory_space<vmem>>, vector<1x512xf32>
    %583 = vector.broadcast %582 : vector<1x512xf32> to vector<8x512xf32>
    %584 = arith.addf %581, %583 : vector<8x512xf32>
    %585 = vector.extract_strided_slice %584 {offsets = [0, 0], sizes = [8, 128], strides = [1, 1]} : vector<8x512xf32> to vector<8x128xf32>
    %cst_222 = arith.constant 5.000000e-01 : f32
    %586 = vector.broadcast %cst_222 : f32 to vector<8x128xf32>
    %587 = arith.mulf %586, %585 : vector<8x128xf32>
    %588 = math.tanh %587 : vector<8x128xf32>
    %cst_223 = arith.constant 5.000000e-01 : f32
    %589 = vector.broadcast %cst_223 : f32 to vector<8x128xf32>
    %590 = arith.mulf %589, %588 : vector<8x128xf32>
    %cst_224 = arith.constant 5.000000e-01 : f32
    %591 = vector.broadcast %cst_224 : f32 to vector<8x128xf32>
    %592 = arith.addf %590, %591 : vector<8x128xf32>
    %593 = vector.extract_strided_slice %584 {offsets = [0, 128], sizes = [8, 128], strides = [1, 1]} : vector<8x512xf32> to vector<8x128xf32>
    %cst_225 = arith.constant 5.000000e-01 : f32
    %594 = vector.broadcast %cst_225 : f32 to vector<8x128xf32>
    %595 = arith.mulf %594, %593 : vector<8x128xf32>
    %596 = math.tanh %595 : vector<8x128xf32>
    %cst_226 = arith.constant 5.000000e-01 : f32
    %597 = vector.broadcast %cst_226 : f32 to vector<8x128xf32>
    %598 = arith.mulf %597, %596 : vector<8x128xf32>
    %cst_227 = arith.constant 5.000000e-01 : f32
    %599 = vector.broadcast %cst_227 : f32 to vector<8x128xf32>
    %600 = arith.addf %598, %599 : vector<8x128xf32>
    %601 = vector.extract_strided_slice %584 {offsets = [0, 256], sizes = [8, 128], strides = [1, 1]} : vector<8x512xf32> to vector<8x128xf32>
    %602 = math.tanh %601 : vector<8x128xf32>
    %603 = vector.extract_strided_slice %584 {offsets = [0, 384], sizes = [8, 128], strides = [1, 1]} : vector<8x512xf32> to vector<8x128xf32>
    %cst_228 = arith.constant 5.000000e-01 : f32
    %604 = vector.broadcast %cst_228 : f32 to vector<8x128xf32>
    %605 = arith.mulf %604, %603 : vector<8x128xf32>
    %606 = math.tanh %605 : vector<8x128xf32>
    %cst_229 = arith.constant 5.000000e-01 : f32
    %607 = vector.broadcast %cst_229 : f32 to vector<8x128xf32>
    %608 = arith.mulf %607, %606 : vector<8x128xf32>
    %cst_230 = arith.constant 5.000000e-01 : f32
    %609 = vector.broadcast %cst_230 : f32 to vector<8x128xf32>
    %610 = arith.addf %608, %609 : vector<8x128xf32>
    %611 = arith.mulf %600, %537 : vector<8x128xf32>
    %612 = arith.mulf %592, %602 : vector<8x128xf32>
    %613 = arith.addf %611, %612 : vector<8x128xf32>
    %614 = math.tanh %613 : vector<8x128xf32>
    %615 = arith.mulf %610, %614 : vector<8x128xf32>
    %c8_i32_231 = arith.constant 8 : i32
    %c0_232 = arith.constant 0 : index
    %c0_233 = arith.constant 0 : index
    %616 = vector.load %arg6[%c0_232, %c0_233] : memref<128x1xf32, #tpu.memory_space<vmem>>, vector<128x1xf32>
    %cst_234 = arith.constant dense<0.000000e+00> : vector<8x1xf32>
    %617 = tpu.matmul %615, %616, %cst_234 {dimension_numbers = #tpu.dot_dimension_numbers<[1], [0], [0], [1], [0, 0, 1, 1], [], []>} : vector<8x128xf32>, vector<128x1xf32>, vector<8x1xf32> -> vector<8x1xf32>
    %c0_235 = arith.constant 0 : index
    %c0_236 = arith.constant 0 : index
    %618 = vector.load %arg7[%c0_235, %c0_236] : memref<1x1xf32, #tpu.memory_space<vmem>>, vector<1x1xf32>
    %619 = vector.broadcast %618 : vector<1x1xf32> to vector<8x1xf32>
    %620 = arith.addf %617, %619 : vector<8x1xf32>
    %621 = vector.extract_strided_slice %620 {offsets = [0, 0], sizes = [2, 1], strides = [1, 1]} : vector<8x1xf32> to vector<2x1xf32>
    %c0_237 = arith.constant 0 : index
    %c0_238 = arith.constant 0 : index
    %622 = vector.load %arg8[%c0_237, %c0_238] : memref<2x1xf32, #tpu.memory_space<vmem>>, vector<2x1xf32>
    tpu.vector_store %arg8[%c0_237, %c0_238], %621 {strides = array<i32>} : memref<2x1xf32, #tpu.memory_space<vmem>>, vector<2x1xf32>,
    return
  }
}

</mosaic_0001>

<llo_original>
// kernel: fwd.1
$region0: #{fwd.1}
  #allocation0 [shape = 'u32[]', space=smem, size = 0x4, offset = 0x4, fixed_abs, tag = 'smem constant byte address 0x4 - core index']
  #allocation1 [shape = 'u32[72,128]{1,0:T(1,128)}', space=vmem, size = 0x9000, scoped, tag = 'internal scratch']
  #allocation2 [shape = 'f32[64,512]{1,0:T(8,128)}', space=vmem, size = 0x20000, scoped, tag = 'scratch operand']
  #allocation3 [shape = 'f32[1,1]{1,0:T(1,128)S(1)}', space=vmem, size = 0x200, scoped, tag = 'scoped memory for fwd.1']
  %s0 = inlined_call_operand.vmem [shape: f32[64,8], index: 0, kind: input, shape index: {}]
  %s1 = inlined_call_operand.vmem [shape: f32[8,512], index: 1, kind: input, shape index: {}]
  %s2 = inlined_call_operand.vmem [shape: f32[1,512], index: 2, kind: input, shape index: {}]
  %s3 = inlined_call_operand.hbm [shape: bf16[128,512], index: 3, kind: input, shape index: {}]
  %s4 = inlined_call_operand.hbm [shape: bf16[256,512], index: 4, kind: input, shape index: {}]
  %s5 = inlined_call_operand.vmem [shape: f32[1,512], index: 5, kind: input, shape index: {}]
  %s6 = inlined_call_operand.vmem [shape: f32[128,1], index: 6, kind: input, shape index: {}]
  %s7 = inlined_call_operand.<no memory space> [shape: f32[1,1], index: 7, kind: input, shape index: {}]
  %s8 = inlined_call_operand.vmem [shape: f32[2,1], index: 8, kind: output, shape index: {}]
  %s9 = sld [smem:[#allocation0]]
  $region50: #{fwd.1} parent=0
    _
  %s11 = ssub.s32 1, %s9
  %s12 = scalar_select 0, %s11, %s9
  %v13 = vstv %s7
  %14 = vst [vmem:[#allocation3] sm:$0x1] %v13
  $region1: #{fwd.1} parent=0
    #allocation4 [shape = 'u8[131072]{0}', space=vmem, size = 0x20000, scoped, tag = 'input window, operand 3, single buffered']
    #allocation5 [shape = 's32[1]{0}', space=sflag, size = 0x4, scoped, tag = 'scoped memory for fwd.1']
    #allocation6 [shape = 'u8[262144]{0}', space=vmem, size = 0x40000, scoped, tag = 'input window, operand 4, single buffered']
    #allocation7 [shape = 's32[1]{0}', space=sflag, size = 0x4, scoped, tag = 'scoped memory for fwd.1']
    %15 = vsyncpa [#allocation5], 0
    %16 = vsyncpa [#allocation7], 0
    // Predicated region
    $region2: #{fwd.1} parent=1 // pred_check
      _
    $region3: #{fwd.1} parent=1 // pred_check_branch
      %18 = sbr.rel (0) target = $region5
    $region4: #{fwd.1} parent=1 // pred_region
      _
    $region5: #{fwd.1} parent=1 // pred_fallthru
      _
    // Predicated region
    $region6: #{fwd.1} parent=1 // pred_check
      _
    $region7: #{fwd.1} parent=1 // pred_check_branch
      %20 = sbr.rel (0) target = $region9
    $region8: #{fwd.1} parent=1 // pred_region
      _
    $region9: #{fwd.1} parent=1 // pred_fallthru
      _
    // Predicated region
    $region10: #{fwd.1} parent=1 // pred_check
      _
    $region11: #{fwd.1} parent=1 // pred_check_branch
      %22 = sbr.rel (0) target = $region13
    $region12: #{fwd.1} parent=1 // pred_region
      _
    $region13: #{fwd.1} parent=1 // pred_fallthru
      _
    // Predicated region
    $region14: #{fwd.1} parent=1 // pred_check
      _
    $region15: #{fwd.1} parent=1 // pred_check_branch
      %24 = sbr.rel (0) target = $region17
    $region16: #{fwd.1} parent=1 // pred_region
      %26 = vsyncadd [#allocation5], 0
      %s27 = sshll.u32 %s3, 4
      %s28 = int_to_ptr.hbm [resolvable:$true] %s27
      %s29 = sshll.u32 [#allocation4], 4
      %s30 = int_to_ptr.vmem [resolvable:$true] %s29
      %35 = dma.hbm_to_vmem [thread:$0]  %s28, 4096, %s30, [#allocation5], 256, 256, 16
    $region17: #{fwd.1} parent=1 // pred_fallthru
      _
    // Predicated region
    $region18: #{fwd.1} parent=1 // pred_check
      _
    $region19: #{fwd.1} parent=1 // pred_check_branch
      %37 = sbr.rel (0) target = $region21
    $region20: #{fwd.1} parent=1 // pred_region
      %39 = vsyncadd [#allocation7], 0
      %s40 = sshll.u32 %s4, 4
      %s41 = int_to_ptr.hbm [resolvable:$true] %s40
      %s42 = sshll.u32 [#allocation6], 4
      %s43 = int_to_ptr.vmem [resolvable:$true] %s42
      %48 = dma.hbm_to_vmem [thread:$0]  %s41, 8192, %s43, [#allocation7], 256, 256, 16
    $region21: #{fwd.1} parent=1 // pred_fallthru
      _
    // Predicated region
    $region22: #{fwd.1} parent=1 // pred_check
      _
    $region23: #{fwd.1} parent=1 // pred_check_branch
      %50 = sbr.rel (0) target = $region25
    $region24: #{fwd.1} parent=1 // pred_region
      _
    $region25: #{fwd.1} parent=1 // pred_fallthru
      _
    // Predicated region
    $region26: #{fwd.1} parent=1 // pred_check
      _
    $region27: #{fwd.1} parent=1 // pred_check_branch
      %52 = sbr.rel (0) target = $region29
    $region28: #{fwd.1} parent=1 // pred_region
      _
    $region29: #{fwd.1} parent=1 // pred_fallthru
      _
    // Predicated region
    $region30: #{fwd.1} parent=1 // pred_check
      _
    $region31: #{fwd.1} parent=1 // pred_check_branch
      %54 = sbr.rel (0) target = $region33
    $region32: #{fwd.1} parent=1 // pred_region
      _
    $region33: #{fwd.1} parent=1 // pred_fallthru
      _
    // Predicated region
    $region34: #{fwd.1} parent=1 // pred_check
      _
    $region35: #{fwd.1} parent=1 // pred_check_branch
      %56 = sbr.rel (0) target = $region37
    $region36: #{fwd.1} parent=1 // pred_region
      %58 = dma.done [#allocation5], 4096
    $region37: #{fwd.1} parent=1 // pred_fallthru
      _
    // Predicated region
    $region38: #{fwd.1} parent=1 // pred_check
      _
    $region39: #{fwd.1} parent=1 // pred_check_branch
      %60 = sbr.rel (0) target = $region41
    $region40: #{fwd.1} parent=1 // pred_region
      %62 = dma.done [#allocation7], 8192
    $region41: #{fwd.1} parent=1 // pred_fallthru
      _
    %v64 = vld [vmem:[%s0] sm:$0xff]
    %v65 = vld [vmem:[%s0 + $0x8] sm:$0xff]
    %v66 = vld [vmem:[%s0 + $0x10] sm:$0xff]
    %v67 = vld [vmem:[%s0 + $0x18] sm:$0xff]
    %v68 = vld [vmem:[%s0 + $0x20] sm:$0xff]
    %v69 = vld [vmem:[%s0 + $0x28] sm:$0xff]
    %v70 = vld [vmem:[%s0 + $0x30] sm:$0xff]
    %v71 = vld [vmem:[%s0 + $0x38] sm:$0xff]
    %v72 = vld [vmem:[%s1] sm:$0xff]
    %v73 = vld [vmem:[%s1 + $0x8] sm:$0xff]
    %v74 = vld [vmem:[%s1 + $0x10] sm:$0xff]
    %v75 = vld [vmem:[%s1 + $0x18] sm:$0xff]
    %v76 = vld [vmem:[%s2] sm:$0xf]
    %v78 = vperm.slane %v76, 0
    %v79 = vperm.slane %v76, 1
    %v80 = vperm.slane %v76, 2
    %v81 = vperm.slane %v76, 3
    %vm86 = vcmask 64512
    %v88 = vsel %vm86, %v64, 0
    %v91 = vsel %vm86, %v65, 0
    %v94 = vsel %vm86, %v66, 0
    %v97 = vsel %vm86, %v67, 0
    %v100 = vsel %vm86, %v68, 0
    %v103 = vsel %vm86, %v69, 0
    %v106 = vsel %vm86, %v70, 0
    %v109 = vsel %vm86, %v71, 0
    %111 = vmatpush.msra.mxu0 0.0
    %112 = vmatpush.msra.mxu0 0.0
    %113 = vmatpush.msra.mxu0 0.0
    %114 = vmatpush.msra.mxu0 0.0
    %115 = vmatpush.msra.mxu0 0.0
    %116 = vmatpush.msra.mxu0 0.0
    %117 = vmatpush.msra.mxu0 0.0
    %118 = vmatpush.msra.mxu0 0.0
    %119 = vmatpush.msra.mxu0 0.0
    %120 = vmatpush.msra.mxu0 0.0
    %121 = vmatpush.msra.mxu0 0.0
    %122 = vmatpush.msra.mxu0 0.0
    %123 = vmatpush.msra.mxu0 0.0
    %124 = vmatpush.msra.mxu0 0.0
    %125 = vmatpush.msra.mxu0 0.0
    %126 = vmatpush.msra.mxu0 %v72
    %127 = vmatmul.f32.gmra.mxu0 %v88
    %v128 = vpop.f32.mrf.mxu0
    %v129 = vadd.f32 %v78, %v128
    %130 = vmatmul.f32.gmra.mxu0 %v91
    %v131 = vpop.f32.mrf.mxu0
    %v132 = vadd.f32 %v78, %v131
    %133 = vmatmul.f32.gmra.mxu0 %v94
    %v134 = vpop.f32.mrf.mxu0
    %v135 = vadd.f32 %v78, %v134
    %136 = vmatmul.f32.gmra.mxu0 %v97
    %v137 = vpop.f32.mrf.mxu0
    %v138 = vadd.f32 %v78, %v137
    %139 = vmatmul.f32.gmra.mxu0 %v100
    %v140 = vpop.f32.mrf.mxu0
    %v141 = vadd.f32 %v78, %v140
    %142 = vmatmul.f32.gmra.mxu0 %v103
    %v143 = vpop.f32.mrf.mxu0
    %v144 = vadd.f32 %v78, %v143
    %145 = vmatmul.f32.gmra.mxu0 %v106
    %v146 = vpop.f32.mrf.mxu0
    %v147 = vadd.f32 %v78, %v146
    %148 = vmatmul.f32.gmra.mxu0 %v109
    %v149 = vpop.f32.mrf.mxu0
    %v150 = vadd.f32 %v78, %v149
    %151 = vdwg.mxu0
    %152 = vmatpush.msra.mxu0 0.0
    %153 = vmatpush.msra.mxu0 0.0
    %154 = vmatpush.msra.mxu0 0.0
    %155 = vmatpush.msra.mxu0 0.0
    %156 = vmatpush.msra.mxu0 0.0
    %157 = vmatpush.msra.mxu0 0.0
    %158 = vmatpush.msra.mxu0 0.0
    %159 = vmatpush.msra.mxu0 0.0
    %160 = vmatpush.msra.mxu0 0.0
    %161 = vmatpush.msra.mxu0 0.0
    %162 = vmatpush.msra.mxu0 0.0
    %163 = vmatpush.msra.mxu0 0.0
    %164 = vmatpush.msra.mxu0 0.0
    %165 = vmatpush.msra.mxu0 0.0
    %166 = vmatpush.msra.mxu0 0.0
    %167 = vmatpush.msra.mxu0 %v73
    %168 = vmatmul.f32.gmra.mxu0 %v88
    %v169 = vpop.f32.mrf.mxu0
    %v170 = vadd.f32 %v79, %v169
    %171 = vmatmul.f32.gmra.mxu0 %v91
    %v172 = vpop.f32.mrf.mxu0
    %v173 = vadd.f32 %v79, %v172
    %174 = vmatmul.f32.gmra.mxu0 %v94
    %v175 = vpop.f32.mrf.mxu0
    %v176 = vadd.f32 %v79, %v175
    %177 = vmatmul.f32.gmra.mxu0 %v97
    %v178 = vpop.f32.mrf.mxu0
    %v179 = vadd.f32 %v79, %v178
    %180 = vmatmul.f32.gmra.mxu0 %v100
    %v181 = vpop.f32.mrf.mxu0
    %v182 = vadd.f32 %v79, %v181
    %183 = vmatmul.f32.gmra.mxu0 %v103
    %v184 = vpop.f32.mrf.mxu0
    %v185 = vadd.f32 %v79, %v184
    %186 = vmatmul.f32.gmra.mxu0 %v106
    %v187 = vpop.f32.mrf.mxu0
    %v188 = vadd.f32 %v79, %v187
    %189 = vmatmul.f32.gmra.mxu0 %v109
    %v190 = vpop.f32.mrf.mxu0
    %v191 = vadd.f32 %v79, %v190
    %192 = vdwg.mxu0
    %193 = vmatpush.msra.mxu0 0.0
    %194 = vmatpush.msra.mxu0 0.0
    %195 = vmatpush.msra.mxu0 0.0
    %196 = vmatpush.msra.mxu0 0.0
    %197 = vmatpush.msra.mxu0 0.0
    %198 = vmatpush.msra.mxu0 0.0
    %199 = vmatpush.msra.mxu0 0.0
    %200 = vmatpush.msra.mxu0 0.0
    %201 = vmatpush.msra.mxu0 0.0
    %202 = vmatpush.msra.mxu0 0.0
    %203 = vmatpush.msra.mxu0 0.0
    %204 = vmatpush.msra.mxu0 0.0
    %205 = vmatpush.msra.mxu0 0.0
    %206 = vmatpush.msra.mxu0 0.0
    %207 = vmatpush.msra.mxu0 0.0
    %208 = vmatpush.msra.mxu0 %v74
    %209 = vmatmul.f32.gmra.mxu0 %v88
    %v210 = vpop.f32.mrf.mxu0
    %v211 = vadd.f32 %v80, %v210
    %212 = vmatmul.f32.gmra.mxu0 %v91
    %v213 = vpop.f32.mrf.mxu0
    %v214 = vadd.f32 %v80, %v213
    %215 = vmatmul.f32.gmra.mxu0 %v94
    %v216 = vpop.f32.mrf.mxu0
    %v217 = vadd.f32 %v80, %v216
    %218 = vmatmul.f32.gmra.mxu0 %v97
    %v219 = vpop.f32.mrf.mxu0
    %v220 = vadd.f32 %v80, %v219
    %221 = vmatmul.f32.gmra.mxu0 %v100
    %v222 = vpop.f32.mrf.mxu0
    %v223 = vadd.f32 %v80, %v222
    %224 = vmatmul.f32.gmra.mxu0 %v103
    %v225 = vpop.f32.mrf.mxu0
    %v226 = vadd.f32 %v80, %v225
    %227 = vmatmul.f32.gmra.mxu0 %v106
    %v228 = vpop.f32.mrf.mxu0
    %v229 = vadd.f32 %v80, %v228
    %230 = vmatmul.f32.gmra.mxu0 %v109
    %v231 = vpop.f32.mrf.mxu0
    %v232 = vadd.f32 %v80, %v231
    %233 = vdwg.mxu0
    %234 = vmatpush.msra.mxu0 0.0
    %235 = vmatpush.msra.mxu0 0.0
    %236 = vmatpush.msra.mxu0 0.0
    %237 = vmatpush.msra.mxu0 0.0
    %238 = vmatpush.msra.mxu0 0.0
    %239 = vmatpush.msra.mxu0 0.0
    %240 = vmatpush.msra.mxu0 0.0
    %241 = vmatpush.msra.mxu0 0.0
    %242 = vmatpush.msra.mxu0 0.0
    %243 = vmatpush.msra.mxu0 0.0
    %244 = vmatpush.msra.mxu0 0.0
    %245 = vmatpush.msra.mxu0 0.0
    %246 = vmatpush.msra.mxu0 0.0
    %247 = vmatpush.msra.mxu0 0.0
    %248 = vmatpush.msra.mxu0 0.0
    %249 = vmatpush.msra.mxu0 %v75
    %250 = vmatmul.f32.gmra.mxu0 %v88
    %v251 = vpop.f32.mrf.mxu0
    %v252 = vadd.f32 %v81, %v251
    %253 = vmatmul.f32.gmra.mxu0 %v91
    %v254 = vpop.f32.mrf.mxu0
    %v255 = vadd.f32 %v81, %v254
    %256 = vmatmul.f32.gmra.mxu0 %v94
    %v257 = vpop.f32.mrf.mxu0
    %v258 = vadd.f32 %v81, %v257
    %259 = vmatmul.f32.gmra.mxu0 %v97
    %v260 = vpop.f32.mrf.mxu0
    %v261 = vadd.f32 %v81, %v260
    %262 = vmatmul.f32.gmra.mxu0 %v100
    %v263 = vpop.f32.mrf.mxu0
    %v264 = vadd.f32 %v81, %v263
    %265 = vmatmul.f32.gmra.mxu0 %v103
    %v266 = vpop.f32.mrf.mxu0
    %v267 = vadd.f32 %v81, %v266
    %268 = vmatmul.f32.gmra.mxu0 %v106
    %v269 = vpop.f32.mrf.mxu0
    %v270 = vadd.f32 %v81, %v269
    %271 = vmatmul.f32.gmra.mxu0 %v109
    %v272 = vpop.f32.mrf.mxu0
    %v273 = vadd.f32 %v81, %v272
    %274 = vdwg.mxu0
    %275 = vst [vmem:[#allocation2] sm:$0xff] %v129
    %276 = vst [vmem:[#allocation2 + $0x8] sm:$0xff] %v170
    %277 = vst [vmem:[#allocation2 + $0x10] sm:$0xff] %v211
    %278 = vst [vmem:[#allocation2 + $0x18] sm:$0xff] %v252
    %279 = vst [vmem:[#allocation2 + $0x20] sm:$0xff] %v132
    %280 = vst [vmem:[#allocation2 + $0x28] sm:$0xff] %v173
    %281 = vst [vmem:[#allocation2 + $0x30] sm:$0xff] %v214
    %282 = vst [vmem:[#allocation2 + $0x38] sm:$0xff] %v255
    %283 = vst [vmem:[#allocation2 + $0x40] sm:$0xff] %v135
    %284 = vst [vmem:[#allocation2 + $0x48] sm:$0xff] %v176
    %285 = vst [vmem:[#allocation2 + $0x50] sm:$0xff] %v217
    %286 = vst [vmem:[#allocation2 + $0x58] sm:$0xff] %v258
    %287 = vst [vmem:[#allocation2 + $0x60] sm:$0xff] %v138
    %288 = vst [vmem:[#allocation2 + $0x68] sm:$0xff] %v179
    %289 = vst [vmem:[#allocation2 + $0x70] sm:$0xff] %v220
    %290 = vst [vmem:[#allocation2 + $0x78] sm:$0xff] %v261
    %291 = vst [vmem:[#allocation2 + $0x80] sm:$0xff] %v141
    %292 = vst [vmem:[#allocation2 + $0x88] sm:$0xff] %v182
    %293 = vst [vmem:[#allocation2 + $0x90] sm:$0xff] %v223
    %294 = vst [vmem:[#allocation2 + $0x98] sm:$0xff] %v264
    %295 = vst [vmem:[#allocation2 + $0xa0] sm:$0xff] %v144
    %296 = vst [vmem:[#allocation2 + $0xa8] sm:$0xff] %v185
    %297 = vst [vmem:[#allocation2 + $0xb0] sm:$0xff] %v226
    %298 = vst [vmem:[#allocation2 + $0xb8] sm:$0xff] %v267
    %299 = vst [vmem:[#allocation2 + $0xc0] sm:$0xff] %v147
    %300 = vst [vmem:[#allocation2 + $0xc8] sm:$0xff] %v188
    %301 = vst [vmem:[#allocation2 + $0xd0] sm:$0xff] %v229
    %302 = vst [vmem:[#allocation2 + $0xd8] sm:$0xff] %v270
    %303 = vst [vmem:[#allocation2 + $0xe0] sm:$0xff] %v150
    %304 = vst [vmem:[#allocation2 + $0xe8] sm:$0xff] %v191
    %305 = vst [vmem:[#allocation2 + $0xf0] sm:$0xff] %v232
    %306 = vst [vmem:[#allocation2 + $0xf8] sm:$0xff] %v273
    %v307 = vld [vmem:[#allocation2] sm:$0xff]
    %v308 = vld [vmem:[#allocation2 + $0x8] sm:$0xff]
    %v309 = vld [vmem:[#allocation2 + $0x10] sm:$0xff]
    %v310 = vld [vmem:[#allocation2 + $0x18] sm:$0xff]
    %v311 = vld [vmem:[#allocation4] sm:$0xff]
    %v312 = vld [vmem:[#allocation4 + $0x8] sm:$0xff]
    %v313 = vld [vmem:[#allocation4 + $0x10] sm:$0xff]
    %v314 = vld [vmem:[#allocation4 + $0x18] sm:$0xff]
    %v315 = vld [vmem:[#allocation4 + $0x20] sm:$0xff]
    %v316 = vld [vmem:[#allocation4 + $0x28] sm:$0xff]
    %v317 = vld [vmem:[#allocation4 + $0x30] sm:$0xff]
    %v318 = vld [vmem:[#allocation4 + $0x38] sm:$0xff]
    %v319 = vld [vmem:[#allocation4 + $0x40] sm:$0xff]
    %v320 = vld [vmem:[#allocation4 + $0x48] sm:$0xff]
    %v321 = vld [vmem:[#allocation4 + $0x50] sm:$0xff]
    %v322 = vld [vmem:[#allocation4 + $0x58] sm:$0xff]
    %v323 = vld [vmem:[#allocation4 + $0x60] sm:$0xff]
    %v324 = vld [vmem:[#allocation4 + $0x68] sm:$0xff]
    %v325 = vld [vmem:[#allocation4 + $0x70] sm:$0xff]
    %v326 = vld [vmem:[#allocation4 + $0x78] sm:$0xff]
    %v327 = vld [vmem:[#allocation4 + $0x80] sm:$0xff]
    %v328 = vld [vmem:[#allocation4 + $0x88] sm:$0xff]
    %v329 = vld [vmem:[#allocation4 + $0x90] sm:$0xff]
    %v330 = vld [vmem:[#allocation4 + $0x98] sm:$0xff]
    %v331 = vld [vmem:[#allocation4 + $0xa0] sm:$0xff]
    %v332 = vld [vmem:[#allocation4 + $0xa8] sm:$0xff]
    %v333 = vld [vmem:[#allocation4 + $0xb0] sm:$0xff]
    %v334 = vld [vmem:[#allocation4 + $0xb8] sm:$0xff]
    %v335 = vld [vmem:[#allocation4 + $0xc0] sm:$0xff]
    %v336 = vld [vmem:[#allocation4 + $0xc8] sm:$0xff]
    %v337 = vld [vmem:[#allocation4 + $0xd0] sm:$0xff]
    %v338 = vld [vmem:[#allocation4 + $0xd8] sm:$0xff]
    %v339 = vld [vmem:[#allocation4 + $0xe0] sm:$0xff]
    %v340 = vld [vmem:[#allocation4 + $0xe8] sm:$0xff]
    %v341 = vld [vmem:[#allocation4 + $0xf0] sm:$0xff]
    %v342 = vld [vmem:[#allocation4 + $0xf8] sm:$0xff]
    %v375 = vunpack.c.l.b16 %v311
    %v376 = vunpack.c.h.b16 %v311
    %v377 = vunpack.c.l.b16 %v312
    %v378 = vunpack.c.h.b16 %v312
    %v379 = vunpack.c.l.b16 %v313
    %v380 = vunpack.c.h.b16 %v313
    %v381 = vunpack.c.l.b16 %v314
    %v382 = vunpack.c.h.b16 %v314
    %v383 = vunpack.c.l.b16 %v315
    %v384 = vunpack.c.h.b16 %v315
    %v385 = vunpack.c.l.b16 %v316
    %v386 = vunpack.c.h.b16 %v316
    %v387 = vunpack.c.l.b16 %v317
    %v388 = vunpack.c.h.b16 %v317
    %v389 = vunpack.c.l.b16 %v318
    %v390 = vunpack.c.h.b16 %v318
    %v391 = vunpack.c.l.b16 %v319
    %v392 = vunpack.c.h.b16 %v319
    %v393 = vunpack.c.l.b16 %v320
    %v394 = vunpack.c.h.b16 %v320
    %v395 = vunpack.c.l.b16 %v321
    %v396 = vunpack.c.h.b16 %v321
    %v397 = vunpack.c.l.b16 %v322
    %v398 = vunpack.c.h.b16 %v322
    %v399 = vunpack.c.l.b16 %v323
    %v400 = vunpack.c.h.b16 %v323
    %v401 = vunpack.c.l.b16 %v324
    %v402 = vunpack.c.h.b16 %v324
    %v403 = vunpack.c.l.b16 %v325
    %v404 = vunpack.c.h.b16 %v325
    %v405 = vunpack.c.l.b16 %v326
    %v406 = vunpack.c.h.b16 %v326
    %v407 = vunpack.c.l.b16 %v327
    %v408 = vunpack.c.h.b16 %v327
    %v409 = vunpack.c.l.b16 %v328
    %v410 = vunpack.c.h.b16 %v328
    %v411 = vunpack.c.l.b16 %v329
    %v412 = vunpack.c.h.b16 %v329
    %v413 = vunpack.c.l.b16 %v330
    %v414 = vunpack.c.h.b16 %v330
    %v415 = vunpack.c.l.b16 %v331
    %v416 = vunpack.c.h.b16 %v331
    %v417 = vunpack.c.l.b16 %v332
    %v418 = vunpack.c.h.b16 %v332
    %v419 = vunpack.c.l.b16 %v333
    %v420 = vunpack.c.h.b16 %v333
    %v421 = vunpack.c.l.b16 %v334
    %v422 = vunpack.c.h.b16 %v334
    %v423 = vunpack.c.l.b16 %v335
    %v424 = vunpack.c.h.b16 %v335
    %v425 = vunpack.c.l.b16 %v336
    %v426 = vunpack.c.h.b16 %v336
    %v427 = vunpack.c.l.b16 %v337
    %v428 = vunpack.c.h.b16 %v337
    %v429 = vunpack.c.l.b16 %v338
    %v430 = vunpack.c.h.b16 %v338
    %v431 = vunpack.c.l.b16 %v339
    %v432 = vunpack.c.h.b16 %v339
    %v433 = vunpack.c.l.b16 %v340
    %v434 = vunpack.c.h.b16 %v340
    %v435 = vunpack.c.l.b16 %v341
    %v436 = vunpack.c.h.b16 %v341
    %v437 = vunpack.c.l.b16 %v342
    %v438 = vunpack.c.h.b16 %v342
    %v439 = vpack.c.b16 %v379, %v375
    %v440 = vpack.c.b16 %v380, %v376
    %v441 = vpack.c.b16 %v381, %v377
    %v442 = vpack.c.b16 %v382, %v378
    %v443 = vpack.c.b16 %v387, %v383
    %v444 = vpack.c.b16 %v388, %v384
    %v445 = vpack.c.b16 %v389, %v385
    %v446 = vpack.c.b16 %v390, %v386
    %v447 = vpack.c.b16 %v395, %v391
    %v448 = vpack.c.b16 %v396, %v392
    %v449 = vpack.c.b16 %v397, %v393
    %v450 = vpack.c.b16 %v398, %v394
    %v451 = vpack.c.b16 %v403, %v399
    %v452 = vpack.c.b16 %v404, %v400
    %v453 = vpack.c.b16 %v405, %v401
    %v454 = vpack.c.b16 %v406, %v402
    %v455 = vpack.c.b16 %v411, %v407
    %v456 = vpack.c.b16 %v412, %v408
    %v457 = vpack.c.b16 %v413, %v409
    %v458 = vpack.c.b16 %v414, %v410
    %v459 = vpack.c.b16 %v419, %v415
    %v460 = vpack.c.b16 %v420, %v416
    %v461 = vpack.c.b16 %v421, %v417
    %v462 = vpack.c.b16 %v422, %v418
    %v463 = vpack.c.b16 %v427, %v423
    %v464 = vpack.c.b16 %v428, %v424
    %v465 = vpack.c.b16 %v429, %v425
    %v466 = vpack.c.b16 %v430, %v426
    %v467 = vpack.c.b16 %v435, %v431
    %v468 = vpack.c.b16 %v436, %v432
    %v469 = vpack.c.b16 %v437, %v433
    %v470 = vpack.c.b16 %v438, %v434
    %503 = vmatpush.bf16.msra.mxu0 %v467
    %504 = vmatpush.bf16.msra.mxu0 %v463
    %505 = vmatpush.bf16.msra.mxu0 %v459
    %506 = vmatpush.bf16.msra.mxu0 %v455
    %507 = vmatpush.bf16.msra.mxu0 %v451
    %508 = vmatpush.bf16.msra.mxu0 %v447
    %509 = vmatpush.bf16.msra.mxu0 %v443
    %510 = vmatpush.bf16.msra.mxu0 %v439
    %511 = vmatmul.bf16.gmra.mxu0 0
    %v512 = vpop.f32.mrf.mxu0
    %v513 = vadd.f32 0.0, %v512
    %v514 = vpop.f32.mrf.mxu0
    %515 = vdwg.mxu0
    %516 = vmatpush.bf16.msra.mxu0 %v468
    %517 = vmatpush.bf16.msra.mxu0 %v464
    %518 = vmatpush.bf16.msra.mxu0 %v460
    %519 = vmatpush.bf16.msra.mxu0 %v456
    %520 = vmatpush.bf16.msra.mxu0 %v452
    %521 = vmatpush.bf16.msra.mxu0 %v448
    %522 = vmatpush.bf16.msra.mxu0 %v444
    %523 = vmatpush.bf16.msra.mxu0 %v440
    %524 = vmatmul.bf16.gmra.mxu0 0
    %v525 = vpop.f32.mrf.mxu0
    %v526 = vadd.f32 0.0, %v525
    %v527 = vpop.f32.mrf.mxu0
    %528 = vdwg.mxu0
    %529 = vmatpush.bf16.msra.mxu0 %v469
    %530 = vmatpush.bf16.msra.mxu0 %v465
    %531 = vmatpush.bf16.msra.mxu0 %v461
    %532 = vmatpush.bf16.msra.mxu0 %v457
    %533 = vmatpush.bf16.msra.mxu0 %v453
    %534 = vmatpush.bf16.msra.mxu0 %v449
    %535 = vmatpush.bf16.msra.mxu0 %v445
    %536 = vmatpush.bf16.msra.mxu0 %v441
    %537 = vmatmul.bf16.gmra.mxu0 0
    %v538 = vpop.f32.mrf.mxu0
    %v539 = vadd.f32 0.0, %v538
    %v540 = vpop.f32.mrf.mxu0
    %541 = vdwg.mxu0
    %542 = vmatpush.bf16.msra.mxu0 %v470
    %543 = vmatpush.bf16.msra.mxu0 %v466
    %544 = vmatpush.bf16.msra.mxu0 %v462
    %545 = vmatpush.bf16.msra.mxu0 %v458
    %546 = vmatpush.bf16.msra.mxu0 %v454
    %547 = vmatpush.bf16.msra.mxu0 %v450
    %548 = vmatpush.bf16.msra.mxu0 %v446
    %549 = vmatpush.bf16.msra.mxu0 %v442
    %550 = vmatmul.bf16.gmra.mxu0 0
    %v551 = vpop.f32.mrf.mxu0
    %v552 = vadd.f32 0.0, %v551
    %v553 = vpop.f32.mrf.mxu0
    %554 = vdwg.mxu0
    %v555 = vadd.f32 %v307, %v513
    %v556 = vadd.f32 %v308, %v526
    %v557 = vadd.f32 %v309, %v539
    %v558 = vadd.f32 %v310, %v552
    %v559 = vmul.f32 %v555, 0.5
    %v560 = vtanh.pop %v559
    %v561 = vmul.f32 %v560, 0.5
    %v562 = vadd.f32 %v561, 0.5
    %v563 = vmul.f32 %v556, 0.5
    %v564 = vtanh.pop %v563
    %v565 = vmul.f32 %v564, 0.5
    %v566 = vadd.f32 %v565, 0.5
    %v567 = vtanh.pop %v557
    %v568 = vmul.f32 %v558, 0.5
    %v569 = vtanh.pop %v568
    %v570 = vmul.f32 %v569, 0.5
    %v571 = vadd.f32 %v570, 0.5
    %v572 = vmul.f32 %v566, 0.0
    %v573 = vmul.f32 %v562, %v567
    %v574 = vadd.f32 %v572, %v573
    %v575 = vtanh.pop %v574
    %v576 = vmul.f32 %v571, %v575
    %v577 = vpack.c.bf16 %v576, %v576
    %v578 = vpack.c.bf16 0.0, 0.0
    %v579 = vld [vmem:[#allocation6] sm:$0xff]
    %v580 = vld [vmem:[#allocation6 + $0x8] sm:$0xff]
    %v581 = vld [vmem:[#allocation6 + $0x10] sm:$0xff]
    %v582 = vld [vmem:[#allocation6 + $0x18] sm:$0xff]
    %v583 = vld [vmem:[#allocation6 + $0x20] sm:$0xff]
    %v584 = vld [vmem:[#allocation6 + $0x28] sm:$0xff]
    %v585 = vld [vmem:[#allocation6 + $0x30] sm:$0xff]
    %v586 = vld [vmem:[#allocation6 + $0x38] sm:$0xff]
    %v587 = vld [vmem:[#allocation6 + $0x40] sm:$0xff]
    %v588 = vld [vmem:[#allocation6 + $0x48] sm:$0xff]
    %v589 = vld [vmem:[#allocation6 + $0x50] sm:$0xff]
    %v590 = vld [vmem:[#allocation6 + $0x58] sm:$0xff]
    %v591 = vld [vmem:[#allocation6 + $0x60] sm:$0xff]
    %v592 = vld [vmem:[#allocation6 + $0x68] sm:$0xff]
    %v593 = vld [vmem:[#allocation6 + $0x70] sm:$0xff]
    %v594 = vld [vmem:[#allocation6 + $0x78] sm:$0xff]
    %v595 = vld [vmem:[#allocation6 + $0x80] sm:$0xff]
    %v596 = vld [vmem:[#allocation6 + $0x88] sm:$0xff]
    %v597 = vld [vmem:[#allocation6 + $0x90] sm:$0xff]
    %v598 = vld [vmem:[#allocation6 + $0x98] sm:$0xff]
    %v599 = vld [vmem:[#allocation6 + $0xa0] sm:$0xff]
    %v600 = vld [vmem:[#allocation6 + $0xa8] sm:$0xff]
    %v601 = vld [vmem:[#allocation6 + $0xb0] sm:$0xff]
    %v602 = vld [vmem:[#allocation6 + $0xb8] sm:$0xff]
    %v603 = vld [vmem:[#allocation6 + $0xc0] sm:$0xff]
    %v604 = vld [vmem:[#allocation6 + $0xc8] sm:$0xff]
    %v605 = vld [vmem:[#allocation6 + $0xd0] sm:$0xff]
    %v606 = vld [vmem:[#allocation6 + $0xd8] sm:$0xff]
    %v607 = vld [vmem:[#allocation6 + $0xe0] sm:$0xff]
    %v608 = vld [vmem:[#allocation6 + $0xe8] sm:$0xff]
    %v609 = vld [vmem:[#allocation6 + $0xf0] sm:$0xff]
    %v610 = vld [vmem:[#allocation6 + $0xf8] sm:$0xff]
    %v611 = vld [vmem:[#allocation6 + $0x100] sm:$0xff]
    %v612 = vld [vmem:[#allocation6 + $0x108] sm:$0xff]
    %v613 = vld [vmem:[#allocation6 + $0x110] sm:$0xff]
    %v614 = vld [vmem:[#allocation6 + $0x118] sm:$0xff]
    %v615 = vld [vmem:[#allocation6 + $0x120] sm:$0xff]
    %v616 = vld [vmem:[#allocation6 + $0x128] sm:$0xff]
    %v617 = vld [vmem:[#allocation6 + $0x130] sm:$0xff]
    %v618 = vld [vmem:[#allocation6 + $0x138] sm:$0xff]
    %v619 = vld [vmem:[#allocation6 + $0x140] sm:$0xff]
    %v620 = vld [vmem:[#allocation6 + $0x148] sm:$0xff]
    %v621 = vld [vmem:[#allocation6 + $0x150] sm:$0xff]
    %v622 = vld [vmem:[#allocation6 + $0x158] sm:$0xff]
    %v623 = vld [vmem:[#allocation6 + $0x160] sm:$0xff]
    %v624 = vld [vmem:[#allocation6 + $0x168] sm:$0xff]
    %v625 = vld [vmem:[#allocation6 + $0x170] sm:$0xff]
    %v626 = vld [vmem:[#allocation6 + $0x178] sm:$0xff]
    %v627 = vld [vmem:[#allocation6 + $0x180] sm:$0xff]
    %v628 = vld [vmem:[#allocation6 + $0x188] sm:$0xff]
    %v629 = vld [vmem:[#allocation6 + $0x190] sm:$0xff]
    %v630 = vld [vmem:[#allocation6 + $0x198] sm:$0xff]
    %v631 = vld [vmem:[#allocation6 + $0x1a0] sm:$0xff]
    %v632 = vld [vmem:[#allocation6 + $0x1a8] sm:$0xff]
    %v633 = vld [vmem:[#allocation6 + $0x1b0] sm:$0xff]
    %v634 = vld [vmem:[#allocation6 + $0x1b8] sm:$0xff]
    %v635 = vld [vmem:[#allocation6 + $0x1c0] sm:$0xff]
    %v636 = vld [vmem:[#allocation6 + $0x1c8] sm:$0xff]
    %v637 = vld [vmem:[#allocation6 + $0x1d0] sm:$0xff]
    %v638 = vld [vmem:[#allocation6 + $0x1d8] sm:$0xff]
    %v639 = vld [vmem:[#allocation6 + $0x1e0] sm:$0xff]
    %v640 = vld [vmem:[#allocation6 + $0x1e8] sm:$0xff]
    %v641 = vld [vmem:[#allocation6 + $0x1f0] sm:$0xff]
    %v642 = vld [vmem:[#allocation6 + $0x1f8] sm:$0xff]
    %v643 = vld [vmem:[%s5] sm:$0xf]
    %v645 = vperm.slane %v643, 0
    %v646 = vperm.slane %v643, 1
    %v647 = vperm.slane %v643, 2
    %v648 = vperm.slane %v643, 3
    %v717 = vunpack.c.l.b16 %v579
    %v718 = vunpack.c.h.b16 %v579
    %v719 = vunpack.c.l.b16 %v580
    %v720 = vunpack.c.h.b16 %v580
    %v721 = vunpack.c.l.b16 %v581
    %v722 = vunpack.c.h.b16 %v581
    %v723 = vunpack.c.l.b16 %v582
    %v724 = vunpack.c.h.b16 %v582
    %v725 = vunpack.c.l.b16 %v583
    %v726 = vunpack.c.h.b16 %v583
    %v727 = vunpack.c.l.b16 %v584
    %v728 = vunpack.c.h.b16 %v584
    %v729 = vunpack.c.l.b16 %v585
    %v730 = vunpack.c.h.b16 %v585
    %v731 = vunpack.c.l.b16 %v586
    %v732 = vunpack.c.h.b16 %v586
    %v733 = vunpack.c.l.b16 %v587
    %v734 = vunpack.c.h.b16 %v587
    %v735 = vunpack.c.l.b16 %v588
    %v736 = vunpack.c.h.b16 %v588
    %v737 = vunpack.c.l.b16 %v589
    %v738 = vunpack.c.h.b16 %v589
    %v739 = vunpack.c.l.b16 %v590
    %v740 = vunpack.c.h.b16 %v590
    %v741 = vunpack.c.l.b16 %v591
    %v742 = vunpack.c.h.b16 %v591
    %v743 = vunpack.c.l.b16 %v592
    %v744 = vunpack.c.h.b16 %v592
    %v745 = vunpack.c.l.b16 %v593
    %v746 = vunpack.c.h.b16 %v593
    %v747 = vunpack.c.l.b16 %v594
    %v748 = vunpack.c.h.b16 %v594
    %v749 = vunpack.c.l.b16 %v595
    %v750 = vunpack.c.h.b16 %v595
    %v751 = vunpack.c.l.b16 %v596
    %v752 = vunpack.c.h.b16 %v596
    %v753 = vunpack.c.l.b16 %v597
    %v754 = vunpack.c.h.b16 %v597
    %v755 = vunpack.c.l.b16 %v598
    %v756 = vunpack.c.h.b16 %v598
    %v757 = vunpack.c.l.b16 %v599
    %v758 = vunpack.c.h.b16 %v599
    %v759 = vunpack.c.l.b16 %v600
    %v760 = vunpack.c.h.b16 %v600
    %v761 = vunpack.c.l.b16 %v601
    %v762 = vunpack.c.h.b16 %v601
    %v763 = vunpack.c.l.b16 %v602
    %v764 = vunpack.c.h.b16 %v602
    %v765 = vunpack.c.l.b16 %v603
    %v766 = vunpack.c.h.b16 %v603
    %v767 = vunpack.c.l.b16 %v604
    %v768 = vunpack.c.h.b16 %v604
    %v769 = vunpack.c.l.b16 %v605
    %v770 = vunpack.c.h.b16 %v605
    %v771 = vunpack.c.l.b16 %v606
    %v772 = vunpack.c.h.b16 %v606
    %v773 = vunpack.c.l.b16 %v607
    %v774 = vunpack.c.h.b16 %v607
    %v775 = vunpack.c.l.b16 %v608
    %v776 = vunpack.c.h.b16 %v608
    %v777 = vunpack.c.l.b16 %v609
    %v778 = vunpack.c.h.b16 %v609
    %v779 = vunpack.c.l.b16 %v610
    %v780 = vunpack.c.h.b16 %v610
    %v781 = vunpack.c.l.b16 %v611
    %v782 = vunpack.c.h.b16 %v611
    %v783 = vunpack.c.l.b16 %v612
    %v784 = vunpack.c.h.b16 %v612
    %v785 = vunpack.c.l.b16 %v613
    %v786 = vunpack.c.h.b16 %v613
    %v787 = vunpack.c.l.b16 %v614
    %v788 = vunpack.c.h.b16 %v614
    %v789 = vunpack.c.l.b16 %v615
    %v790 = vunpack.c.h.b16 %v615
    %v791 = vunpack.c.l.b16 %v616
    %v792 = vunpack.c.h.b16 %v616
    %v793 = vunpack.c.l.b16 %v617
    %v794 = vunpack.c.h.b16 %v617
    %v795 = vunpack.c.l.b16 %v618
    %v796 = vunpack.c.h.b16 %v618
    %v797 = vunpack.c.l.b16 %v619
    %v798 = vunpack.c.h.b16 %v619
    %v799 = vunpack.c.l.b16 %v620
    %v800 = vunpack.c.h.b16 %v620
    %v801 = vunpack.c.l.b16 %v621
    %v802 = vunpack.c.h.b16 %v621
    %v803 = vunpack.c.l.b16 %v622
    %v804 = vunpack.c.h.b16 %v622
    %v805 = vunpack.c.l.b16 %v623
    %v806 = vunpack.c.h.b16 %v623
    %v807 = vunpack.c.l.b16 %v624
    %v808 = vunpack.c.h.b16 %v624
    %v809 = vunpack.c.l.b16 %v625
    %v810 = vunpack.c.h.b16 %v625
    %v811 = vunpack.c.l.b16 %v626
    %v812 = vunpack.c.h.b16 %v626
    %v813 = vunpack.c.l.b16 %v627
    %v814 = vunpack.c.h.b16 %v627
    %v815 = vunpack.c.l.b16 %v628
    %v816 = vunpack.c.h.b16 %v628
    %v817 = vunpack.c.l.b16 %v629
    %v818 = vunpack.c.h.b16 %v629
    %v819 = vunpack.c.l.b16 %v630
    %v820 = vunpack.c.h.b16 %v630
    %v821 = vunpack.c.l.b16 %v631
    %v822 = vunpack.c.h.b16 %v631
    %v823 = vunpack.c.l.b16 %v632
    %v824 = vunpack.c.h.b16 %v632
    %v825 = vunpack.c.l.b16 %v633
    %v826 = vunpack.c.h.b16 %v633
    %v827 = vunpack.c.l.b16 %v634
    %v828 = vunpack.c.h.b16 %v634
    %v829 = vunpack.c.l.b16 %v635
    %v830 = vunpack.c.h.b16 %v635
    %v831 = vunpack.c.l.b16 %v636
    %v832 = vunpack.c.h.b16 %v636
    %v833 = vunpack.c.l.b16 %v637
    %v834 = vunpack.c.h.b16 %v637
    %v835 = vunpack.c.l.b16 %v638
    %v836 = vunpack.c.h.b16 %v638
    %v837 = vunpack.c.l.b16 %v639
    %v838 = vunpack.c.h.b16 %v639
    %v839 = vunpack.c.l.b16 %v640
    %v840 = vunpack.c.h.b16 %v640
    %v841 = vunpack.c.l.b16 %v641
    %v842 = vunpack.c.h.b16 %v641
    %v843 = vunpack.c.l.b16 %v642
    %v844 = vunpack.c.h.b16 %v642
    %v845 = vpack.c.b16 %v721, %v717
    %v846 = vpack.c.b16 %v722, %v718
    %v847 = vpack.c.b16 %v723, %v719
    %v848 = vpack.c.b16 %v724, %v720
    %v849 = vpack.c.b16 %v729, %v725
    %v850 = vpack.c.b16 %v730, %v726
    %v851 = vpack.c.b16 %v731, %v727
    %v852 = vpack.c.b16 %v732, %v728
    %v853 = vpack.c.b16 %v737, %v733
    %v854 = vpack.c.b16 %v738, %v734
    %v855 = vpack.c.b16 %v739, %v735
    %v856 = vpack.c.b16 %v740, %v736
    %v857 = vpack.c.b16 %v745, %v741
    %v858 = vpack.c.b16 %v746, %v742
    %v859 = vpack.c.b16 %v747, %v743
    %v860 = vpack.c.b16 %v748, %v744
    %v861 = vpack.c.b16 %v753, %v749
    %v862 = vpack.c.b16 %v754, %v750
    %v863 = vpack.c.b16 %v755, %v751
    %v864 = vpack.c.b16 %v756, %v752
    %v865 = vpack.c.b16 %v761, %v757
    %v866 = vpack.c.b16 %v762, %v758
    %v867 = vpack.c.b16 %v763, %v759
    %v868 = vpack.c.b16 %v764, %v760
    %v869 = vpack.c.b16 %v769, %v765
    %v870 = vpack.c.b16 %v770, %v766
    %v871 = vpack.c.b16 %v771, %v767
    %v872 = vpack.c.b16 %v772, %v768
    %v873 = vpack.c.b16 %v777, %v773
    %v874 = vpack.c.b16 %v778, %v774
    %v875 = vpack.c.b16 %v779, %v775
    %v876 = vpack.c.b16 %v780, %v776
    %v877 = vpack.c.b16 %v785, %v781
    %v878 = vpack.c.b16 %v786, %v782
    %v879 = vpack.c.b16 %v787, %v783
    %v880 = vpack.c.b16 %v788, %v784
    %v881 = vpack.c.b16 %v793, %v789
    %v882 = vpack.c.b16 %v794, %v790
    %v883 = vpack.c.b16 %v795, %v791
    %v884 = vpack.c.b16 %v796, %v792
    %v885 = vpack.c.b16 %v801, %v797
    %v886 = vpack.c.b16 %v802, %v798
    %v887 = vpack.c.b16 %v803, %v799
    %v888 = vpack.c.b16 %v804, %v800
    %v889 = vpack.c.b16 %v809, %v805
    %v890 = vpack.c.b16 %v810, %v806
    %v891 = vpack.c.b16 %v811, %v807
    %v892 = vpack.c.b16 %v812, %v808
    %v893 = vpack.c.b16 %v817, %v813
    %v894 = vpack.c.b16 %v818, %v814
    %v895 = vpack.c.b16 %v819, %v815
    %v896 = vpack.c.b16 %v820, %v816
    %v897 = vpack.c.b16 %v825, %v821
    %v898 = vpack.c.b16 %v826, %v822
    %v899 = vpack.c.b16 %v827, %v823
    %v900 = vpack.c.b16 %v828, %v824
    %v901 = vpack.c.b16 %v833, %v829
    %v902 = vpack.c.b16 %v834, %v830
    %v903 = vpack.c.b16 %v835, %v831
    %v904 = vpack.c.b16 %v836, %v832
    %v905 = vpack.c.b16 %v841, %v837
    %v906 = vpack.c.b16 %v842, %v838
    %v907 = vpack.c.b16 %v843, %v839
    %v908 = vpack.c.b16 %v844, %v840
    %973 = vmatpush.bf16.msra.mxu0 %v873
    %974 = vmatpush.bf16.msra.mxu0 %v869
    %975 = vmatpush.bf16.msra.mxu0 %v865
    %976 = vmatpush.bf16.msra.mxu0 %v861
    %977 = vmatpush.bf16.msra.mxu0 %v857
    %978 = vmatpush.bf16.msra.mxu0 %v853
    %979 = vmatpush.bf16.msra.mxu0 %v849
    %980 = vmatpush.bf16.msra.mxu0 %v845
    %981 = vmatmul.bf16.gmra.mxu0 %v577
    %v982 = vpop.f32.mrf.mxu0
    %v983 = vadd.f32 %v645, %v982
    %v984 = vpop.f32.mrf.mxu0
    %985 = vdwg.mxu0
    %986 = vmatpush.bf16.msra.mxu0 %v905
    %987 = vmatpush.bf16.msra.mxu0 %v901
    %988 = vmatpush.bf16.msra.mxu0 %v897
    %989 = vmatpush.bf16.msra.mxu0 %v893
    %990 = vmatpush.bf16.msra.mxu0 %v889
    %991 = vmatpush.bf16.msra.mxu0 %v885
    %992 = vmatpush.bf16.msra.mxu0 %v881
    %993 = vmatpush.bf16.msra.mxu0 %v877
    %994 = vmatmul.bf16.gmra.mxu0 %v578
    %v995 = vpop.f32.mrf.mxu0
    %v996 = vadd.f32 %v983, %v995
    %v997 = vpop.f32.mrf.mxu0
    %998 = vdwg.mxu0
    %999 = vmatpush.bf16.msra.mxu0 %v874
    %1000 = vmatpush.bf16.msra.mxu0 %v870
    %1001 = vmatpush.bf16.msra.mxu0 %v866
    %1002 = vmatpush.bf16.msra.mxu0 %v862
    %1003 = vmatpush.bf16.msra.mxu0 %v858
    %1004 = vmatpush.bf16.msra.mxu0 %v854
    %1005 = vmatpush.bf16.msra.mxu0 %v850
    %1006 = vmatpush.bf16.msra.mxu0 %v846
    %1007 = vmatmul.bf16.gmra.mxu0 %v577
    %v1008 = vpop.f32.mrf.mxu0
    %v1009 = vadd.f32 %v646, %v1008
    %v1010 = vpop.f32.mrf.mxu0
    %1011 = vdwg.mxu0
    %1012 = vmatpush.bf16.msra.mxu0 %v906
    %1013 = vmatpush.bf16.msra.mxu0 %v902
    %1014 = vmatpush.bf16.msra.mxu0 %v898
    %1015 = vmatpush.bf16.msra.mxu0 %v894
    %1016 = vmatpush.bf16.msra.mxu0 %v890
    %1017 = vmatpush.bf16.msra.mxu0 %v886
    %1018 = vmatpush.bf16.msra.mxu0 %v882
    %1019 = vmatpush.bf16.msra.mxu0 %v878
    %1020 = vmatmul.bf16.gmra.mxu0 %v578
    %v1021 = vpop.f32.mrf.mxu0
    %v1022 = vadd.f32 %v1009, %v1021
    %v1023 = vpop.f32.mrf.mxu0
    %1024 = vdwg.mxu0
    %1025 = vmatpush.bf16.msra.mxu0 %v875
    %1026 = vmatpush.bf16.msra.mxu0 %v871
    %1027 = vmatpush.bf16.msra.mxu0 %v867
    %1028 = vmatpush.bf16.msra.mxu0 %v863
    %1029 = vmatpush.bf16.msra.mxu0 %v859
    %1030 = vmatpush.bf16.msra.mxu0 %v855
    %1031 = vmatpush.bf16.msra.mxu0 %v851
    %1032 = vmatpush.bf16.msra.mxu0 %v847
    %1033 = vmatmul.bf16.gmra.mxu0 %v577
    %v1034 = vpop.f32.mrf.mxu0
    %v1035 = vadd.f32 %v647, %v1034
    %v1036 = vpop.f32.mrf.mxu0
    %1037 = vdwg.mxu0
    %1038 = vmatpush.bf16.msra.mxu0 %v907
    %1039 = vmatpush.bf16.msra.mxu0 %v903
    %1040 = vmatpush.bf16.msra.mxu0 %v899
    %1041 = vmatpush.bf16.msra.mxu0 %v895
    %1042 = vmatpush.bf16.msra.mxu0 %v891
    %1043 = vmatpush.bf16.msra.mxu0 %v887
    %1044 = vmatpush.bf16.msra.mxu0 %v883
    %1045 = vmatpush.bf16.msra.mxu0 %v879
    %1046 = vmatmul.bf16.gmra.mxu0 %v578
    %v1047 = vpop.f32.mrf.mxu0
    %v1048 = vadd.f32 %v1035, %v1047
    %v1049 = vpop.f32.mrf.mxu0
    %1050 = vdwg.mxu0
    %1051 = vmatpush.bf16.msra.mxu0 %v876
    %1052 = vmatpush.bf16.msra.mxu0 %v872
    %1053 = vmatpush.bf16.msra.mxu0 %v868
    %1054 = vmatpush.bf16.msra.mxu0 %v864
    %1055 = vmatpush.bf16.msra.mxu0 %v860
    %1056 = vmatpush.bf16.msra.mxu0 %v856
    %1057 = vmatpush.bf16.msra.mxu0 %v852
    %1058 = vmatpush.bf16.msra.mxu0 %v848
    %1059 = vmatmul.bf16.gmra.mxu0 %v577
    %v1060 = vpop.f32.mrf.mxu0
    %v1061 = vadd.f32 %v648, %v1060
    %v1062 = vpop.f32.mrf.mxu0
    %1063 = vdwg.mxu0
    %1064 = vmatpush.bf16.msra.mxu0 %v908
    %1065 = vmatpush.bf16.msra.mxu0 %v904
    %1066 = vmatpush.bf16.msra.mxu0 %v900
    %1067 = vmatpush.bf16.msra.mxu0 %v896
    %1068 = vmatpush.bf16.msra.mxu0 %v892
    %1069 = vmatpush.bf16.msra.mxu0 %v888
    %1070 = vmatpush.bf16.msra.mxu0 %v884
    %1071 = vmatpush.bf16.msra.mxu0 %v880
    %1072 = vmatmul.bf16.gmra.mxu0 %v578
    %v1073 = vpop.f32.mrf.mxu0
    %v1074 = vadd.f32 %v1061, %v1073
    %v1075 = vpop.f32.mrf.mxu0
    %1076 = vdwg.mxu0
    %v1077 = vmul.f32 %v996, 0.5
    %v1078 = vtanh.pop %v1077
    %v1079 = vmul.f32 %v1078, 0.5
    %v1080 = vadd.f32 %v1079, 0.5
    %v1081 = vmul.f32 %v1022, 0.5
    %v1082 = vtanh.pop %v1081
    %v1083 = vmul.f32 %v1082, 0.5
    %v1084 = vadd.f32 %v1083, 0.5
    %v1085 = vtanh.pop %v1048
    %v1086 = vmul.f32 %v1074, 0.5
    %v1087 = vtanh.pop %v1086
    %v1088 = vmul.f32 %v1087, 0.5
    %v1089 = vadd.f32 %v1088, 0.5
    %v1090 = vmul.f32 %v1084, 0.0
    %v1091 = vmul.f32 %v1080, %v1085
    %v1092 = vadd.f32 %v1090, %v1091
    %v1093 = vtanh.pop %v1092
    %v1094 = vmul.f32 %v1089, %v1093
    %v1095 = vld [vmem:[#allocation2 + $0x20] sm:$0xff]
    %v1096 = vld [vmem:[#allocation2 + $0x28] sm:$0xff]
    %v1097 = vld [vmem:[#allocation2 + $0x30] sm:$0xff]
    %v1098 = vld [vmem:[#allocation2 + $0x38] sm:$0xff]
    %1099 = vmatpush.bf16.msra.mxu0 %v467
    %1100 = vmatpush.bf16.msra.mxu0 %v463
    %1101 = vmatpush.bf16.msra.mxu0 %v459
    %1102 = vmatpush.bf16.msra.mxu0 %v455
    %1103 = vmatpush.bf16.msra.mxu0 %v451
    %1104 = vmatpush.bf16.msra.mxu0 %v447
    %1105 = vmatpush.bf16.msra.mxu0 %v443
    %1106 = vmatpush.bf16.msra.mxu0 %v439
    %1107 = vmatmul.bf16.gmra.mxu0 %v577
    %v1108 = vpop.f32.mrf.mxu0
    %v1109 = vadd.f32 0.0, %v1108
    %v1110 = vpop.f32.mrf.mxu0
    %1111 = vdwg.mxu0
    %1112 = vmatpush.bf16.msra.mxu0 %v468
    %1113 = vmatpush.bf16.msra.mxu0 %v464
    %1114 = vmatpush.bf16.msra.mxu0 %v460
    %1115 = vmatpush.bf16.msra.mxu0 %v456
    %1116 = vmatpush.bf16.msra.mxu0 %v452
    %1117 = vmatpush.bf16.msra.mxu0 %v448
    %1118 = vmatpush.bf16.msra.mxu0 %v444
    %1119 = vmatpush.bf16.msra.mxu0 %v440
    %1120 = vmatmul.bf16.gmra.mxu0 %v577
    %v1121 = vpop.f32.mrf.mxu0
    %v1122 = vadd.f32 0.0, %v1121
    %v1123 = vpop.f32.mrf.mxu0
    %1124 = vdwg.mxu0
    %1125 = vmatpush.bf16.msra.mxu0 %v469
    %1126 = vmatpush.bf16.msra.mxu0 %v465
    %1127 = vmatpush.bf16.msra.mxu0 %v461
    %1128 = vmatpush.bf16.msra.mxu0 %v457
    %1129 = vmatpush.bf16.msra.mxu0 %v453
    %1130 = vmatpush.bf16.msra.mxu0 %v449
    %1131 = vmatpush.bf16.msra.mxu0 %v445
    %1132 = vmatpush.bf16.msra.mxu0 %v441
    %1133 = vmatmul.bf16.gmra.mxu0 %v577
    %v1134 = vpop.f32.mrf.mxu0
    %v1135 = vadd.f32 0.0, %v1134
    %v1136 = vpop.f32.mrf.mxu0
    %1137 = vdwg.mxu0
    %1138 = vmatpush.bf16.msra.mxu0 %v470
    %1139 = vmatpush.bf16.msra.mxu0 %v466
    %1140 = vmatpush.bf16.msra.mxu0 %v462
    %1141 = vmatpush.bf16.msra.mxu0 %v458
    %1142 = vmatpush.bf16.msra.mxu0 %v454
    %1143 = vmatpush.bf16.msra.mxu0 %v450
    %1144 = vmatpush.bf16.msra.mxu0 %v446
    %1145 = vmatpush.bf16.msra.mxu0 %v442
    %1146 = vmatmul.bf16.gmra.mxu0 %v577
    %v1147 = vpop.f32.mrf.mxu0
    %v1148 = vadd.f32 0.0, %v1147
    %v1149 = vpop.f32.mrf.mxu0
    %1150 = vdwg.mxu0
    %v1151 = vadd.f32 %v1095, %v1109
    %v1152 = vadd.f32 %v1096, %v1122
    %v1153 = vadd.f32 %v1097, %v1135
    %v1154 = vadd.f32 %v1098, %v1148
    %v1155 = vmul.f32 %v1151, 0.5
    %v1156 = vtanh.pop %v1155
    %v1157 = vmul.f32 %v1156, 0.5
    %v1158 = vadd.f32 %v1157, 0.5
    %v1159 = vmul.f32 %v1152, 0.5
    %v1160 = vtanh.pop %v1159
    %v1161 = vmul.f32 %v1160, 0.5
    %v1162 = vadd.f32 %v1161, 0.5
    %v1163 = vtanh.pop %v1153
    %v1164 = vmul.f32 %v1154, 0.5
    %v1165 = vtanh.pop %v1164
    %v1166 = vmul.f32 %v1165, 0.5
    %v1167 = vadd.f32 %v1166, 0.5
    %v1168 = vmul.f32 %v1162, %v574
    %v1169 = vmul.f32 %v1158, %v1163
    %v1170 = vadd.f32 %v1168, %v1169
    %v1171 = vtanh.pop %v1170
    %v1172 = vmul.f32 %v1167, %v1171
    %v1173 = vpack.c.bf16 %v1172, %v1172
    %v1174 = vpack.c.bf16 %v1094, %v1094
    %1175 = vmatpush.bf16.msra.mxu0 %v873
    %1176 = vmatpush.bf16.msra.mxu0 %v869
    %1177 = vmatpush.bf16.msra.mxu0 %v865
    %1178 = vmatpush.bf16.msra.mxu0 %v861
    %1179 = vmatpush.bf16.msra.mxu0 %v857
    %1180 = vmatpush.bf16.msra.mxu0 %v853
    %1181 = vmatpush.bf16.msra.mxu0 %v849
    %1182 = vmatpush.bf16.msra.mxu0 %v845
    %1183 = vmatmul.bf16.gmra.mxu0 %v1173
    %v1184 = vpop.f32.mrf.mxu0
    %v1185 = vadd.f32 %v645, %v1184
    %v1186 = vpop.f32.mrf.mxu0
    %1187 = vdwg.mxu0
    %1188 = vmatpush.bf16.msra.mxu0 %v905
    %1189 = vmatpush.bf16.msra.mxu0 %v901
    %1190 = vmatpush.bf16.msra.mxu0 %v897
    %1191 = vmatpush.bf16.msra.mxu0 %v893
    %1192 = vmatpush.bf16.msra.mxu0 %v889
    %1193 = vmatpush.bf16.msra.mxu0 %v885
    %1194 = vmatpush.bf16.msra.mxu0 %v881
    %1195 = vmatpush.bf16.msra.mxu0 %v877
    %1196 = vmatmul.bf16.gmra.mxu0 %v1174
    %v1197 = vpop.f32.mrf.mxu0
    %v1198 = vadd.f32 %v1185, %v1197
    %v1199 = vpop.f32.mrf.mxu0
    %1200 = vdwg.mxu0
    %1201 = vmatpush.bf16.msra.mxu0 %v874
    %1202 = vmatpush.bf16.msra.mxu0 %v870
    %1203 = vmatpush.bf16.msra.mxu0 %v866
    %1204 = vmatpush.bf16.msra.mxu0 %v862
    %1205 = vmatpush.bf16.msra.mxu0 %v858
    %1206 = vmatpush.bf16.msra.mxu0 %v854
    %1207 = vmatpush.bf16.msra.mxu0 %v850
    %1208 = vmatpush.bf16.msra.mxu0 %v846
    %1209 = vmatmul.bf16.gmra.mxu0 %v1173
    %v1210 = vpop.f32.mrf.mxu0
    %v1211 = vadd.f32 %v646, %v1210
    %v1212 = vpop.f32.mrf.mxu0
    %1213 = vdwg.mxu0
    %1214 = vmatpush.bf16.msra.mxu0 %v906
    %1215 = vmatpush.bf16.msra.mxu0 %v902
    %1216 = vmatpush.bf16.msra.mxu0 %v898
    %1217 = vmatpush.bf16.msra.mxu0 %v894
    %1218 = vmatpush.bf16.msra.mxu0 %v890
    %1219 = vmatpush.bf16.msra.mxu0 %v886
    %1220 = vmatpush.bf16.msra.mxu0 %v882
    %1221 = vmatpush.bf16.msra.mxu0 %v878
    %1222 = vmatmul.bf16.gmra.mxu0 %v1174
    %v1223 = vpop.f32.mrf.mxu0
    %v1224 = vadd.f32 %v1211, %v1223
    %v1225 = vpop.f32.mrf.mxu0
    %1226 = vdwg.mxu0
    %1227 = vmatpush.bf16.msra.mxu0 %v875
    %1228 = vmatpush.bf16.msra.mxu0 %v871
    %1229 = vmatpush.bf16.msra.mxu0 %v867
    %1230 = vmatpush.bf16.msra.mxu0 %v863
    %1231 = vmatpush.bf16.msra.mxu0 %v859
    %1232 = vmatpush.bf16.msra.mxu0 %v855
    %1233 = vmatpush.bf16.msra.mxu0 %v851
    %1234 = vmatpush.bf16.msra.mxu0 %v847
    %1235 = vmatmul.bf16.gmra.mxu0 %v1173
    %v1236 = vpop.f32.mrf.mxu0
    %v1237 = vadd.f32 %v647, %v1236
    %v1238 = vpop.f32.mrf.mxu0
    %1239 = vdwg.mxu0
    %1240 = vmatpush.bf16.msra.mxu0 %v907
    %1241 = vmatpush.bf16.msra.mxu0 %v903
    %1242 = vmatpush.bf16.msra.mxu0 %v899
    %1243 = vmatpush.bf16.msra.mxu0 %v895
    %1244 = vmatpush.bf16.msra.mxu0 %v891
    %1245 = vmatpush.bf16.msra.mxu0 %v887
    %1246 = vmatpush.bf16.msra.mxu0 %v883
    %1247 = vmatpush.bf16.msra.mxu0 %v879
    %1248 = vmatmul.bf16.gmra.mxu0 %v1174
    %v1249 = vpop.f32.mrf.mxu0
    %v1250 = vadd.f32 %v1237, %v1249
    %v1251 = vpop.f32.mrf.mxu0
    %1252 = vdwg.mxu0
    %1253 = vmatpush.bf16.msra.mxu0 %v876
    %1254 = vmatpush.bf16.msra.mxu0 %v872
    %1255 = vmatpush.bf16.msra.mxu0 %v868
    %1256 = vmatpush.bf16.msra.mxu0 %v864
    %1257 = vmatpush.bf16.msra.mxu0 %v860
    %1258 = vmatpush.bf16.msra.mxu0 %v856
    %1259 = vmatpush.bf16.msra.mxu0 %v852
    %1260 = vmatpush.bf16.msra.mxu0 %v848
    %1261 = vmatmul.bf16.gmra.mxu0 %v1173
    %v1262 = vpop.f32.mrf.mxu0
    %v1263 = vadd.f32 %v648, %v1262
    %v1264 = vpop.f32.mrf.mxu0
    %1265 = vdwg.mxu0
    %1266 = vmatpush.bf16.msra.mxu0 %v908
    %1267 = vmatpush.bf16.msra.mxu0 %v904
    %1268 = vmatpush.bf16.msra.mxu0 %v900
    %1269 = vmatpush.bf16.msra.mxu0 %v896
    %1270 = vmatpush.bf16.msra.mxu0 %v892
    %1271 = vmatpush.bf16.msra.mxu0 %v888
    %1272 = vmatpush.bf16.msra.mxu0 %v884
    %1273 = vmatpush.bf16.msra.mxu0 %v880
    %1274 = vmatmul.bf16.gmra.mxu0 %v1174
    %v1275 = vpop.f32.mrf.mxu0
    %v1276 = vadd.f32 %v1263, %v1275
    %v1277 = vpop.f32.mrf.mxu0
    %1278 = vdwg.mxu0
    %v1279 = vmul.f32 %v1198, 0.5
    %v1280 = vtanh.pop %v1279
    %v1281 = vmul.f32 %v1280, 0.5
    %v1282 = vadd.f32 %v1281, 0.5
    %v1283 = vmul.f32 %v1224, 0.5
    %v1284 = vtanh.pop %v1283
    %v1285 = vmul.f32 %v1284, 0.5
    %v1286 = vadd.f32 %v1285, 0.5
    %v1287 = vtanh.pop %v1250
    %v1288 = vmul.f32 %v1276, 0.5
    %v1289 = vtanh.pop %v1288
    %v1290 = vmul.f32 %v1289, 0.5
    %v1291 = vadd.f32 %v1290, 0.5
    %v1292 = vmul.f32 %v1286, %v1092
    %v1293 = vmul.f32 %v1282, %v1287
    %v1294 = vadd.f32 %v1292, %v1293
    %v1295 = vtanh.pop %v1294
    %v1296 = vmul.f32 %v1291, %v1295
    %v1297 = vld [vmem:[#allocation2 + $0x40] sm:$0xff]
    %v1298 = vld [vmem:[#allocation2 + $0x48] sm:$0xff]
    %v1299 = vld [vmem:[#allocation2 + $0x50] sm:$0xff]
    %v1300 = vld [vmem:[#allocation2 + $0x58] sm:$0xff]
    %1301 = vmatpush.bf16.msra.mxu0 %v467
    %1302 = vmatpush.bf16.msra.mxu0 %v463
    %1303 = vmatpush.bf16.msra.mxu0 %v459
    %1304 = vmatpush.bf16.msra.mxu0 %v455
    %1305 = vmatpush.bf16.msra.mxu0 %v451
    %1306 = vmatpush.bf16.msra.mxu0 %v447
    %1307 = vmatpush.bf16.msra.mxu0 %v443
    %1308 = vmatpush.bf16.msra.mxu0 %v439
    %1309 = vmatmul.bf16.gmra.mxu0 %v1173
    %v1310 = vpop.f32.mrf.mxu0
    %v1311 = vadd.f32 0.0, %v1310
    %v1312 = vpop.f32.mrf.mxu0
    %1313 = vdwg.mxu0
    %1314 = vmatpush.bf16.msra.mxu0 %v468
    %1315 = vmatpush.bf16.msra.mxu0 %v464
    %1316 = vmatpush.bf16.msra.mxu0 %v460
    %1317 = vmatpush.bf16.msra.mxu0 %v456
    %1318 = vmatpush.bf16.msra.mxu0 %v452
    %1319 = vmatpush.bf16.msra.mxu0 %v448
    %1320 = vmatpush.bf16.msra.mxu0 %v444
    %1321 = vmatpush.bf16.msra.mxu0 %v440
    %1322 = vmatmul.bf16.gmra.mxu0 %v1173
    %v1323 = vpop.f32.mrf.mxu0
    %v1324 = vadd.f32 0.0, %v1323
    %v1325 = vpop.f32.mrf.mxu0
    %1326 = vdwg.mxu0
    %1327 = vmatpush.bf16.msra.mxu0 %v469
    %1328 = vmatpush.bf16.msra.mxu0 %v465
    %1329 = vmatpush.bf16.msra.mxu0 %v461
    %1330 = vmatpush.bf16.msra.mxu0 %v457
    %1331 = vmatpush.bf16.msra.mxu0 %v453
    %1332 = vmatpush.bf16.msra.mxu0 %v449
    %1333 = vmatpush.bf16.msra.mxu0 %v445
    %1334 = vmatpush.bf16.msra.mxu0 %v441
    %1335 = vmatmul.bf16.gmra.mxu0 %v1173
    %v1336 = vpop.f32.mrf.mxu0
    %v1337 = vadd.f32 0.0, %v1336
    %v1338 = vpop.f32.mrf.mxu0
    %1339 = vdwg.mxu0
    %1340 = vmatpush.bf16.msra.mxu0 %v470
    %1341 = vmatpush.bf16.msra.mxu0 %v466
    %1342 = vmatpush.bf16.msra.mxu0 %v462
    %1343 = vmatpush.bf16.msra.mxu0 %v458
    %1344 = vmatpush.bf16.msra.mxu0 %v454
    %1345 = vmatpush.bf16.msra.mxu0 %v450
    %1346 = vmatpush.bf16.msra.mxu0 %v446
    %1347 = vmatpush.bf16.msra.mxu0 %v442
    %1348 = vmatmul.bf16.gmra.mxu0 %v1173
    %v1349 = vpop.f32.mrf.mxu0
    %v1350 = vadd.f32 0.0, %v1349
    %v1351 = vpop.f32.mrf.mxu0
    %1352 = vdwg.mxu0
    %v1353 = vadd.f32 %v1297, %v1311
    %v1354 = vadd.f32 %v1298, %v1324
    %v1355 = vadd.f32 %v1299, %v1337
    %v1356 = vadd.f32 %v1300, %v1350
    %v1357 = vmul.f32 %v1353, 0.5
    %v1358 = vtanh.pop %v1357
    %v1359 = vmul.f32 %v1358, 0.5
    %v1360 = vadd.f32 %v1359, 0.5
    %v1361 = vmul.f32 %v1354, 0.5
    %v1362 = vtanh.pop %v1361
    %v1363 = vmul.f32 %v1362, 0.5
    %v1364 = vadd.f32 %v1363, 0.5
    %v1365 = vtanh.pop %v1355
    %v1366 = vmul.f32 %v1356, 0.5
    %v1367 = vtanh.pop %v1366
    %v1368 = vmul.f32 %v1367, 0.5
    %v1369 = vadd.f32 %v1368, 0.5
    %v1370 = vmul.f32 %v1364, %v1170
    %v1371 = vmul.f32 %v1360, %v1365
    %v1372 = vadd.f32 %v1370, %v1371
    %v1373 = vtanh.pop %v1372
    %v1374 = vmul.f32 %v1369, %v1373
    %v1375 = vpack.c.bf16 %v1374, %v1374
    %v1376 = vpack.c.bf16 %v1296, %v1296
    %1377 = vmatpush.bf16.msra.mxu0 %v873
    %1378 = vmatpush.bf16.msra.mxu0 %v869
    %1379 = vmatpush.bf16.msra.mxu0 %v865
    %1380 = vmatpush.bf16.msra.mxu0 %v861
    %1381 = vmatpush.bf16.msra.mxu0 %v857
    %1382 = vmatpush.bf16.msra.mxu0 %v853
    %1383 = vmatpush.bf16.msra.mxu0 %v849
    %1384 = vmatpush.bf16.msra.mxu0 %v845
    %1385 = vmatmul.bf16.gmra.mxu0 %v1375
    %v1386 = vpop.f32.mrf.mxu0
    %v1387 = vadd.f32 %v645, %v1386
    %v1388 = vpop.f32.mrf.mxu0
    %1389 = vdwg.mxu0
    %1390 = vmatpush.bf16.msra.mxu0 %v905
    %1391 = vmatpush.bf16.msra.mxu0 %v901
    %1392 = vmatpush.bf16.msra.mxu0 %v897
    %1393 = vmatpush.bf16.msra.mxu0 %v893
    %1394 = vmatpush.bf16.msra.mxu0 %v889
    %1395 = vmatpush.bf16.msra.mxu0 %v885
    %1396 = vmatpush.bf16.msra.mxu0 %v881
    %1397 = vmatpush.bf16.msra.mxu0 %v877
    %1398 = vmatmul.bf16.gmra.mxu0 %v1376
    %v1399 = vpop.f32.mrf.mxu0
    %v1400 = vadd.f32 %v1387, %v1399
    %v1401 = vpop.f32.mrf.mxu0
    %1402 = vdwg.mxu0
    %1403 = vmatpush.bf16.msra.mxu0 %v874
    %1404 = vmatpush.bf16.msra.mxu0 %v870
    %1405 = vmatpush.bf16.msra.mxu0 %v866
    %1406 = vmatpush.bf16.msra.mxu0 %v862
    %1407 = vmatpush.bf16.msra.mxu0 %v858
    %1408 = vmatpush.bf16.msra.mxu0 %v854
    %1409 = vmatpush.bf16.msra.mxu0 %v850
    %1410 = vmatpush.bf16.msra.mxu0 %v846
    %1411 = vmatmul.bf16.gmra.mxu0 %v1375
    %v1412 = vpop.f32.mrf.mxu0
    %v1413 = vadd.f32 %v646, %v1412
    %v1414 = vpop.f32.mrf.mxu0
    %1415 = vdwg.mxu0
    %1416 = vmatpush.bf16.msra.mxu0 %v906
    %1417 = vmatpush.bf16.msra.mxu0 %v902
    %1418 = vmatpush.bf16.msra.mxu0 %v898
    %1419 = vmatpush.bf16.msra.mxu0 %v894
    %1420 = vmatpush.bf16.msra.mxu0 %v890
    %1421 = vmatpush.bf16.msra.mxu0 %v886
    %1422 = vmatpush.bf16.msra.mxu0 %v882
    %1423 = vmatpush.bf16.msra.mxu0 %v878
    %1424 = vmatmul.bf16.gmra.mxu0 %v1376
    %v1425 = vpop.f32.mrf.mxu0
    %v1426 = vadd.f32 %v1413, %v1425
    %v1427 = vpop.f32.mrf.mxu0
    %1428 = vdwg.mxu0
    %1429 = vmatpush.bf16.msra.mxu0 %v875
    %1430 = vmatpush.bf16.msra.mxu0 %v871
    %1431 = vmatpush.bf16.msra.mxu0 %v867
    %1432 = vmatpush.bf16.msra.mxu0 %v863
    %1433 = vmatpush.bf16.msra.mxu0 %v859
    %1434 = vmatpush.bf16.msra.mxu0 %v855
    %1435 = vmatpush.bf16.msra.mxu0 %v851
    %1436 = vmatpush.bf16.msra.mxu0 %v847
    %1437 = vmatmul.bf16.gmra.mxu0 %v1375
    %v1438 = vpop.f32.mrf.mxu0
    %v1439 = vadd.f32 %v647, %v1438
    %v1440 = vpop.f32.mrf.mxu0
    %1441 = vdwg.mxu0
    %1442 = vmatpush.bf16.msra.mxu0 %v907
    %1443 = vmatpush.bf16.msra.mxu0 %v903
    %1444 = vmatpush.bf16.msra.mxu0 %v899
    %1445 = vmatpush.bf16.msra.mxu0 %v895
    %1446 = vmatpush.bf16.msra.mxu0 %v891
    %1447 = vmatpush.bf16.msra.mxu0 %v887
    %1448 = vmatpush.bf16.msra.mxu0 %v883
    %1449 = vmatpush.bf16.msra.mxu0 %v879
    %1450 = vmatmul.bf16.gmra.mxu0 %v1376
    %v1451 = vpop.f32.mrf.mxu0
    %v1452 = vadd.f32 %v1439, %v1451
    %v1453 = vpop.f32.mrf.mxu0
    %1454 = vdwg.mxu0
    %1455 = vmatpush.bf16.msra.mxu0 %v876
    %1456 = vmatpush.bf16.msra.mxu0 %v872
    %1457 = vmatpush.bf16.msra.mxu0 %v868
    %1458 = vmatpush.bf16.msra.mxu0 %v864
    %1459 = vmatpush.bf16.msra.mxu0 %v860
    %1460 = vmatpush.bf16.msra.mxu0 %v856
    %1461 = vmatpush.bf16.msra.mxu0 %v852
    %1462 = vmatpush.bf16.msra.mxu0 %v848
    %1463 = vmatmul.bf16.gmra.mxu0 %v1375
    %v1464 = vpop.f32.mrf.mxu0
    %v1465 = vadd.f32 %v648, %v1464
    %v1466 = vpop.f32.mrf.mxu0
    %1467 = vdwg.mxu0
    %1468 = vmatpush.bf16.msra.mxu0 %v908
    %1469 = vmatpush.bf16.msra.mxu0 %v904
    %1470 = vmatpush.bf16.msra.mxu0 %v900
    %1471 = vmatpush.bf16.msra.mxu0 %v896
    %1472 = vmatpush.bf16.msra.mxu0 %v892
    %1473 = vmatpush.bf16.msra.mxu0 %v888
    %1474 = vmatpush.bf16.msra.mxu0 %v884
    %1475 = vmatpush.bf16.msra.mxu0 %v880
    %1476 = vmatmul.bf16.gmra.mxu0 %v1376
    %v1477 = vpop.f32.mrf.mxu0
    %v1478 = vadd.f32 %v1465, %v1477
    %v1479 = vpop.f32.mrf.mxu0
    %1480 = vdwg.mxu0
    %v1481 = vmul.f32 %v1400, 0.5
    %v1482 = vtanh.pop %v1481
    %v1483 = vmul.f32 %v1482, 0.5
    %v1484 = vadd.f32 %v1483, 0.5
    %v1485 = vmul.f32 %v1426, 0.5
    %v1486 = vtanh.pop %v1485
    %v1487 = vmul.f32 %v1486, 0.5
    %v1488 = vadd.f32 %v1487, 0.5
    %v1489 = vtanh.pop %v1452
    %v1490 = vmul.f32 %v1478, 0.5
    %v1491 = vtanh.pop %v1490
    %v1492 = vmul.f32 %v1491, 0.5
    %v1493 = vadd.f32 %v1492, 0.5
    %v1494 = vmul.f32 %v1488, %v1294
    %v1495 = vmul.f32 %v1484, %v1489
    %v1496 = vadd.f32 %v1494, %v1495
    %v1497 = vtanh.pop %v1496
    %v1498 = vmul.f32 %v1493, %v1497
    %v1499 = vld [vmem:[#allocation2 + $0x60] sm:$0xff]
    %v1500 = vld [vmem:[#allocation2 + $0x68] sm:$0xff]
    %v1501 = vld [vmem:[#allocation2 + $0x70] sm:$0xff]
    %v1502 = vld [vmem:[#allocation2 + $0x78] sm:$0xff]
    %1503 = vmatpush.bf16.msra.mxu0 %v467
    %1504 = vmatpush.bf16.msra.mxu0 %v463
    %1505 = vmatpush.bf16.msra.mxu0 %v459
    %1506 = vmatpush.bf16.msra.mxu0 %v455
    %1507 = vmatpush.bf16.msra.mxu0 %v451
    %1508 = vmatpush.bf16.msra.mxu0 %v447
    %1509 = vmatpush.bf16.msra.mxu0 %v443
    %1510 = vmatpush.bf16.msra.mxu0 %v439
    %1511 = vmatmul.bf16.gmra.mxu0 %v1375
    %v1512 = vpop.f32.mrf.mxu0
    %v1513 = vadd.f32 0.0, %v1512
    %v1514 = vpop.f32.mrf.mxu0
    %1515 = vdwg.mxu0
    %1516 = vmatpush.bf16.msra.mxu0 %v468
    %1517 = vmatpush.bf16.msra.mxu0 %v464
    %1518 = vmatpush.bf16.msra.mxu0 %v460
    %1519 = vmatpush.bf16.msra.mxu0 %v456
    %1520 = vmatpush.bf16.msra.mxu0 %v452
    %1521 = vmatpush.bf16.msra.mxu0 %v448
    %1522 = vmatpush.bf16.msra.mxu0 %v444
    %1523 = vmatpush.bf16.msra.mxu0 %v440
    %1524 = vmatmul.bf16.gmra.mxu0 %v1375
    %v1525 = vpop.f32.mrf.mxu0
    %v1526 = vadd.f32 0.0, %v1525
    %v1527 = vpop.f32.mrf.mxu0
    %1528 = vdwg.mxu0
    %1529 = vmatpush.bf16.msra.mxu0 %v469
    %1530 = vmatpush.bf16.msra.mxu0 %v465
    %1531 = vmatpush.bf16.msra.mxu0 %v461
    %1532 = vmatpush.bf16.msra.mxu0 %v457
    %1533 = vmatpush.bf16.msra.mxu0 %v453
    %1534 = vmatpush.bf16.msra.mxu0 %v449
    %1535 = vmatpush.bf16.msra.mxu0 %v445
    %1536 = vmatpush.bf16.msra.mxu0 %v441
    %1537 = vmatmul.bf16.gmra.mxu0 %v1375
    %v1538 = vpop.f32.mrf.mxu0
    %v1539 = vadd.f32 0.0, %v1538
    %v1540 = vpop.f32.mrf.mxu0
    %1541 = vdwg.mxu0
    %1542 = vmatpush.bf16.msra.mxu0 %v470
    %1543 = vmatpush.bf16.msra.mxu0 %v466
    %1544 = vmatpush.bf16.msra.mxu0 %v462
    %1545 = vmatpush.bf16.msra.mxu0 %v458
    %1546 = vmatpush.bf16.msra.mxu0 %v454
    %1547 = vmatpush.bf16.msra.mxu0 %v450
    %1548 = vmatpush.bf16.msra.mxu0 %v446
    %1549 = vmatpush.bf16.msra.mxu0 %v442
    %1550 = vmatmul.bf16.gmra.mxu0 %v1375
    %v1551 = vpop.f32.mrf.mxu0
    %v1552 = vadd.f32 0.0, %v1551
    %v1553 = vpop.f32.mrf.mxu0
    %1554 = vdwg.mxu0
    %v1555 = vadd.f32 %v1499, %v1513
    %v1556 = vadd.f32 %v1500, %v1526
    %v1557 = vadd.f32 %v1501, %v1539
    %v1558 = vadd.f32 %v1502, %v1552
    %v1559 = vmul.f32 %v1555, 0.5
    %v1560 = vtanh.pop %v1559
    %v1561 = vmul.f32 %v1560, 0.5
    %v1562 = vadd.f32 %v1561, 0.5
    %v1563 = vmul.f32 %v1556, 0.5
    %v1564 = vtanh.pop %v1563
    %v1565 = vmul.f32 %v1564, 0.5
    %v1566 = vadd.f32 %v1565, 0.5
    %v1567 = vtanh.pop %v1557
    %v1568 = vmul.f32 %v1558, 0.5
    %v1569 = vtanh.pop %v1568
    %v1570 = vmul.f32 %v1569, 0.5
    %v1571 = vadd.f32 %v1570, 0.5
    %v1572 = vmul.f32 %v1566, %v1372
    %v1573 = vmul.f32 %v1562, %v1567
    %v1574 = vadd.f32 %v1572, %v1573
    %v1575 = vtanh.pop %v1574
    %v1576 = vmul.f32 %v1571, %v1575
    %v1577 = vpack.c.bf16 %v1576, %v1576
    %v1578 = vpack.c.bf16 %v1498, %v1498
    %1579 = vmatpush.bf16.msra.mxu0 %v873
    %1580 = vmatpush.bf16.msra.mxu0 %v869
    %1581 = vmatpush.bf16.msra.mxu0 %v865
    %1582 = vmatpush.bf16.msra.mxu0 %v861
    %1583 = vmatpush.bf16.msra.mxu0 %v857
    %1584 = vmatpush.bf16.msra.mxu0 %v853
    %1585 = vmatpush.bf16.msra.mxu0 %v849
    %1586 = vmatpush.bf16.msra.mxu0 %v845
    %1587 = vmatmul.bf16.gmra.mxu0 %v1577
    %v1588 = vpop.f32.mrf.mxu0
    %v1589 = vadd.f32 %v645, %v1588
    %v1590 = vpop.f32.mrf.mxu0
    %1591 = vdwg.mxu0
    %1592 = vmatpush.bf16.msra.mxu0 %v905
    %1593 = vmatpush.bf16.msra.mxu0 %v901
    %1594 = vmatpush.bf16.msra.mxu0 %v897
    %1595 = vmatpush.bf16.msra.mxu0 %v893
    %1596 = vmatpush.bf16.msra.mxu0 %v889
    %1597 = vmatpush.bf16.msra.mxu0 %v885
    %1598 = vmatpush.bf16.msra.mxu0 %v881
    %1599 = vmatpush.bf16.msra.mxu0 %v877
    %1600 = vmatmul.bf16.gmra.mxu0 %v1578
    %v1601 = vpop.f32.mrf.mxu0
    %v1602 = vadd.f32 %v1589, %v1601
    %v1603 = vpop.f32.mrf.mxu0
    %1604 = vdwg.mxu0
    %1605 = vmatpush.bf16.msra.mxu0 %v874
    %1606 = vmatpush.bf16.msra.mxu0 %v870
    %1607 = vmatpush.bf16.msra.mxu0 %v866
    %1608 = vmatpush.bf16.msra.mxu0 %v862
    %1609 = vmatpush.bf16.msra.mxu0 %v858
    %1610 = vmatpush.bf16.msra.mxu0 %v854
    %1611 = vmatpush.bf16.msra.mxu0 %v850
    %1612 = vmatpush.bf16.msra.mxu0 %v846
    %1613 = vmatmul.bf16.gmra.mxu0 %v1577
    %v1614 = vpop.f32.mrf.mxu0
    %v1615 = vadd.f32 %v646, %v1614
    %v1616 = vpop.f32.mrf.mxu0
    %1617 = vdwg.mxu0
    %1618 = vmatpush.bf16.msra.mxu0 %v906
    %1619 = vmatpush.bf16.msra.mxu0 %v902
    %1620 = vmatpush.bf16.msra.mxu0 %v898
    %1621 = vmatpush.bf16.msra.mxu0 %v894
    %1622 = vmatpush.bf16.msra.mxu0 %v890
    %1623 = vmatpush.bf16.msra.mxu0 %v886
    %1624 = vmatpush.bf16.msra.mxu0 %v882
    %1625 = vmatpush.bf16.msra.mxu0 %v878
    %1626 = vmatmul.bf16.gmra.mxu0 %v1578
    %v1627 = vpop.f32.mrf.mxu0
    %v1628 = vadd.f32 %v1615, %v1627
    %v1629 = vpop.f32.mrf.mxu0
    %1630 = vdwg.mxu0
    %1631 = vmatpush.bf16.msra.mxu0 %v875
    %1632 = vmatpush.bf16.msra.mxu0 %v871
    %1633 = vmatpush.bf16.msra.mxu0 %v867
    %1634 = vmatpush.bf16.msra.mxu0 %v863
    %1635 = vmatpush.bf16.msra.mxu0 %v859
    %1636 = vmatpush.bf16.msra.mxu0 %v855
    %1637 = vmatpush.bf16.msra.mxu0 %v851
    %1638 = vmatpush.bf16.msra.mxu0 %v847
    %1639 = vmatmul.bf16.gmra.mxu0 %v1577
    %v1640 = vpop.f32.mrf.mxu0
    %v1641 = vadd.f32 %v647, %v1640
    %v1642 = vpop.f32.mrf.mxu0
    %1643 = vdwg.mxu0
    %1644 = vmatpush.bf16.msra.mxu0 %v907
    %1645 = vmatpush.bf16.msra.mxu0 %v903
    %1646 = vmatpush.bf16.msra.mxu0 %v899
    %1647 = vmatpush.bf16.msra.mxu0 %v895
    %1648 = vmatpush.bf16.msra.mxu0 %v891
    %1649 = vmatpush.bf16.msra.mxu0 %v887
    %1650 = vmatpush.bf16.msra.mxu0 %v883
    %1651 = vmatpush.bf16.msra.mxu0 %v879
    %1652 = vmatmul.bf16.gmra.mxu0 %v1578
    %v1653 = vpop.f32.mrf.mxu0
    %v1654 = vadd.f32 %v1641, %v1653
    %v1655 = vpop.f32.mrf.mxu0
    %1656 = vdwg.mxu0
    %1657 = vmatpush.bf16.msra.mxu0 %v876
    %1658 = vmatpush.bf16.msra.mxu0 %v872
    %1659 = vmatpush.bf16.msra.mxu0 %v868
    %1660 = vmatpush.bf16.msra.mxu0 %v864
    %1661 = vmatpush.bf16.msra.mxu0 %v860
    %1662 = vmatpush.bf16.msra.mxu0 %v856
    %1663 = vmatpush.bf16.msra.mxu0 %v852
    %1664 = vmatpush.bf16.msra.mxu0 %v848
    %1665 = vmatmul.bf16.gmra.mxu0 %v1577
    %v1666 = vpop.f32.mrf.mxu0
    %v1667 = vadd.f32 %v648, %v1666
    %v1668 = vpop.f32.mrf.mxu0
    %1669 = vdwg.mxu0
    %1670 = vmatpush.bf16.msra.mxu0 %v908
    %1671 = vmatpush.bf16.msra.mxu0 %v904
    %1672 = vmatpush.bf16.msra.mxu0 %v900
    %1673 = vmatpush.bf16.msra.mxu0 %v896
    %1674 = vmatpush.bf16.msra.mxu0 %v892
    %1675 = vmatpush.bf16.msra.mxu0 %v888
    %1676 = vmatpush.bf16.msra.mxu0 %v884
    %1677 = vmatpush.bf16.msra.mxu0 %v880
    %1678 = vmatmul.bf16.gmra.mxu0 %v1578
    %v1679 = vpop.f32.mrf.mxu0
    %v1680 = vadd.f32 %v1667, %v1679
    %v1681 = vpop.f32.mrf.mxu0
    %1682 = vdwg.mxu0
    %v1683 = vmul.f32 %v1602, 0.5
    %v1684 = vtanh.pop %v1683
    %v1685 = vmul.f32 %v1684, 0.5
    %v1686 = vadd.f32 %v1685, 0.5
    %v1687 = vmul.f32 %v1628, 0.5
    %v1688 = vtanh.pop %v1687
    %v1689 = vmul.f32 %v1688, 0.5
    %v1690 = vadd.f32 %v1689, 0.5
    %v1691 = vtanh.pop %v1654
    %v1692 = vmul.f32 %v1680, 0.5
    %v1693 = vtanh.pop %v1692
    %v1694 = vmul.f32 %v1693, 0.5
    %v1695 = vadd.f32 %v1694, 0.5
    %v1696 = vmul.f32 %v1690, %v1496
    %v1697 = vmul.f32 %v1686, %v1691
    %v1698 = vadd.f32 %v1696, %v1697
    %v1699 = vtanh.pop %v1698
    %v1700 = vmul.f32 %v1695, %v1699
    %v1701 = vld [vmem:[#allocation2 + $0x80] sm:$0xff]
    %v1702 = vld [vmem:[#allocation2 + $0x88] sm:$0xff]
    %v1703 = vld [vmem:[#allocation2 + $0x90] sm:$0xff]
    %v1704 = vld [vmem:[#allocation2 + $0x98] sm:$0xff]
    %1705 = vmatpush.bf16.msra.mxu0 %v467
    %1706 = vmatpush.bf16.msra.mxu0 %v463
    %1707 = vmatpush.bf16.msra.mxu0 %v459
    %1708 = vmatpush.bf16.msra.mxu0 %v455
    %1709 = vmatpush.bf16.msra.mxu0 %v451
    %1710 = vmatpush.bf16.msra.mxu0 %v447
    %1711 = vmatpush.bf16.msra.mxu0 %v443
    %1712 = vmatpush.bf16.msra.mxu0 %v439
    %1713 = vmatmul.bf16.gmra.mxu0 %v1577
    %v1714 = vpop.f32.mrf.mxu0
    %v1715 = vadd.f32 0.0, %v1714
    %v1716 = vpop.f32.mrf.mxu0
    %1717 = vdwg.mxu0
    %1718 = vmatpush.bf16.msra.mxu0 %v468
    %1719 = vmatpush.bf16.msra.mxu0 %v464
    %1720 = vmatpush.bf16.msra.mxu0 %v460
    %1721 = vmatpush.bf16.msra.mxu0 %v456
    %1722 = vmatpush.bf16.msra.mxu0 %v452
    %1723 = vmatpush.bf16.msra.mxu0 %v448
    %1724 = vmatpush.bf16.msra.mxu0 %v444
    %1725 = vmatpush.bf16.msra.mxu0 %v440
    %1726 = vmatmul.bf16.gmra.mxu0 %v1577
    %v1727 = vpop.f32.mrf.mxu0
    %v1728 = vadd.f32 0.0, %v1727
    %v1729 = vpop.f32.mrf.mxu0
    %1730 = vdwg.mxu0
    %1731 = vmatpush.bf16.msra.mxu0 %v469
    %1732 = vmatpush.bf16.msra.mxu0 %v465
    %1733 = vmatpush.bf16.msra.mxu0 %v461
    %1734 = vmatpush.bf16.msra.mxu0 %v457
    %1735 = vmatpush.bf16.msra.mxu0 %v453
    %1736 = vmatpush.bf16.msra.mxu0 %v449
    %1737 = vmatpush.bf16.msra.mxu0 %v445
    %1738 = vmatpush.bf16.msra.mxu0 %v441
    %1739 = vmatmul.bf16.gmra.mxu0 %v1577
    %v1740 = vpop.f32.mrf.mxu0
    %v1741 = vadd.f32 0.0, %v1740
    %v1742 = vpop.f32.mrf.mxu0
    %1743 = vdwg.mxu0
    %1744 = vmatpush.bf16.msra.mxu0 %v470
    %1745 = vmatpush.bf16.msra.mxu0 %v466
    %1746 = vmatpush.bf16.msra.mxu0 %v462
    %1747 = vmatpush.bf16.msra.mxu0 %v458
    %1748 = vmatpush.bf16.msra.mxu0 %v454
    %1749 = vmatpush.bf16.msra.mxu0 %v450
    %1750 = vmatpush.bf16.msra.mxu0 %v446
    %1751 = vmatpush.bf16.msra.mxu0 %v442
    %1752 = vmatmul.bf16.gmra.mxu0 %v1577
    %v1753 = vpop.f32.mrf.mxu0
    %v1754 = vadd.f32 0.0, %v1753
    %v1755 = vpop.f32.mrf.mxu0
    %1756 = vdwg.mxu0
    %v1757 = vadd.f32 %v1701, %v1715
    %v1758 = vadd.f32 %v1702, %v1728
    %v1759 = vadd.f32 %v1703, %v1741
    %v1760 = vadd.f32 %v1704, %v1754
    %v1761 = vmul.f32 %v1757, 0.5
    %v1762 = vtanh.pop %v1761
    %v1763 = vmul.f32 %v1762, 0.5
    %v1764 = vadd.f32 %v1763, 0.5
    %v1765 = vmul.f32 %v1758, 0.5
    %v1766 = vtanh.pop %v1765
    %v1767 = vmul.f32 %v1766, 0.5
    %v1768 = vadd.f32 %v1767, 0.5
    %v1769 = vtanh.pop %v1759
    %v1770 = vmul.f32 %v1760, 0.5
    %v1771 = vtanh.pop %v1770
    %v1772 = vmul.f32 %v1771, 0.5
    %v1773 = vadd.f32 %v1772, 0.5
    %v1774 = vmul.f32 %v1768, %v1574
    %v1775 = vmul.f32 %v1764, %v1769
    %v1776 = vadd.f32 %v1774, %v1775
    %v1777 = vtanh.pop %v1776
    %v1778 = vmul.f32 %v1773, %v1777
    %v1779 = vpack.c.bf16 %v1778, %v1778
    %v1780 = vpack.c.bf16 %v1700, %v1700
    %1781 = vmatpush.bf16.msra.mxu0 %v873
    %1782 = vmatpush.bf16.msra.mxu0 %v869
    %1783 = vmatpush.bf16.msra.mxu0 %v865
    %1784 = vmatpush.bf16.msra.mxu0 %v861
    %1785 = vmatpush.bf16.msra.mxu0 %v857
    %1786 = vmatpush.bf16.msra.mxu0 %v853
    %1787 = vmatpush.bf16.msra.mxu0 %v849
    %1788 = vmatpush.bf16.msra.mxu0 %v845
    %1789 = vmatmul.bf16.gmra.mxu0 %v1779
    %v1790 = vpop.f32.mrf.mxu0
    %v1791 = vadd.f32 %v645, %v1790
    %v1792 = vpop.f32.mrf.mxu0
    %1793 = vdwg.mxu0
    %1794 = vmatpush.bf16.msra.mxu0 %v905
    %1795 = vmatpush.bf16.msra.mxu0 %v901
    %1796 = vmatpush.bf16.msra.mxu0 %v897
    %1797 = vmatpush.bf16.msra.mxu0 %v893
    %1798 = vmatpush.bf16.msra.mxu0 %v889
    %1799 = vmatpush.bf16.msra.mxu0 %v885
    %1800 = vmatpush.bf16.msra.mxu0 %v881
    %1801 = vmatpush.bf16.msra.mxu0 %v877
    %1802 = vmatmul.bf16.gmra.mxu0 %v1780
    %v1803 = vpop.f32.mrf.mxu0
    %v1804 = vadd.f32 %v1791, %v1803
    %v1805 = vpop.f32.mrf.mxu0
    %1806 = vdwg.mxu0
    %1807 = vmatpush.bf16.msra.mxu0 %v874
    %1808 = vmatpush.bf16.msra.mxu0 %v870
    %1809 = vmatpush.bf16.msra.mxu0 %v866
    %1810 = vmatpush.bf16.msra.mxu0 %v862
    %1811 = vmatpush.bf16.msra.mxu0 %v858
    %1812 = vmatpush.bf16.msra.mxu0 %v854
    %1813 = vmatpush.bf16.msra.mxu0 %v850
    %1814 = vmatpush.bf16.msra.mxu0 %v846
    %1815 = vmatmul.bf16.gmra.mxu0 %v1779
    %v1816 = vpop.f32.mrf.mxu0
    %v1817 = vadd.f32 %v646, %v1816
    %v1818 = vpop.f32.mrf.mxu0
    %1819 = vdwg.mxu0
    %1820 = vmatpush.bf16.msra.mxu0 %v906
    %1821 = vmatpush.bf16.msra.mxu0 %v902
    %1822 = vmatpush.bf16.msra.mxu0 %v898
    %1823 = vmatpush.bf16.msra.mxu0 %v894
    %1824 = vmatpush.bf16.msra.mxu0 %v890
    %1825 = vmatpush.bf16.msra.mxu0 %v886
    %1826 = vmatpush.bf16.msra.mxu0 %v882
    %1827 = vmatpush.bf16.msra.mxu0 %v878
    %1828 = vmatmul.bf16.gmra.mxu0 %v1780
    %v1829 = vpop.f32.mrf.mxu0
    %v1830 = vadd.f32 %v1817, %v1829
    %v1831 = vpop.f32.mrf.mxu0
    %1832 = vdwg.mxu0
    %1833 = vmatpush.bf16.msra.mxu0 %v875
    %1834 = vmatpush.bf16.msra.mxu0 %v871
    %1835 = vmatpush.bf16.msra.mxu0 %v867
    %1836 = vmatpush.bf16.msra.mxu0 %v863
    %1837 = vmatpush.bf16.msra.mxu0 %v859
    %1838 = vmatpush.bf16.msra.mxu0 %v855
    %1839 = vmatpush.bf16.msra.mxu0 %v851
    %1840 = vmatpush.bf16.msra.mxu0 %v847
    %1841 = vmatmul.bf16.gmra.mxu0 %v1779
    %v1842 = vpop.f32.mrf.mxu0
    %v1843 = vadd.f32 %v647, %v1842
    %v1844 = vpop.f32.mrf.mxu0
    %1845 = vdwg.mxu0
    %1846 = vmatpush.bf16.msra.mxu0 %v907
    %1847 = vmatpush.bf16.msra.mxu0 %v903
    %1848 = vmatpush.bf16.msra.mxu0 %v899
    %1849 = vmatpush.bf16.msra.mxu0 %v895
    %1850 = vmatpush.bf16.msra.mxu0 %v891
    %1851 = vmatpush.bf16.msra.mxu0 %v887
    %1852 = vmatpush.bf16.msra.mxu0 %v883
    %1853 = vmatpush.bf16.msra.mxu0 %v879
    %1854 = vmatmul.bf16.gmra.mxu0 %v1780
    %v1855 = vpop.f32.mrf.mxu0
    %v1856 = vadd.f32 %v1843, %v1855
    %v1857 = vpop.f32.mrf.mxu0
    %1858 = vdwg.mxu0
    %1859 = vmatpush.bf16.msra.mxu0 %v876
    %1860 = vmatpush.bf16.msra.mxu0 %v872
    %1861 = vmatpush.bf16.msra.mxu0 %v868
    %1862 = vmatpush.bf16.msra.mxu0 %v864
    %1863 = vmatpush.bf16.msra.mxu0 %v860
    %1864 = vmatpush.bf16.msra.mxu0 %v856
    %1865 = vmatpush.bf16.msra.mxu0 %v852
    %1866 = vmatpush.bf16.msra.mxu0 %v848
    %1867 = vmatmul.bf16.gmra.mxu0 %v1779
    %v1868 = vpop.f32.mrf.mxu0
    %v1869 = vadd.f32 %v648, %v1868
    %v1870 = vpop.f32.mrf.mxu0
    %1871 = vdwg.mxu0
    %1872 = vmatpush.bf16.msra.mxu0 %v908
    %1873 = vmatpush.bf16.msra.mxu0 %v904
    %1874 = vmatpush.bf16.msra.mxu0 %v900
    %1875 = vmatpush.bf16.msra.mxu0 %v896
    %1876 = vmatpush.bf16.msra.mxu0 %v892
    %1877 = vmatpush.bf16.msra.mxu0 %v888
    %1878 = vmatpush.bf16.msra.mxu0 %v884
    %1879 = vmatpush.bf16.msra.mxu0 %v880
    %1880 = vmatmul.bf16.gmra.mxu0 %v1780
    %v1881 = vpop.f32.mrf.mxu0
    %v1882 = vadd.f32 %v1869, %v1881
    %v1883 = vpop.f32.mrf.mxu0
    %1884 = vdwg.mxu0
    %v1885 = vmul.f32 %v1804, 0.5
    %v1886 = vtanh.pop %v1885
    %v1887 = vmul.f32 %v1886, 0.5
    %v1888 = vadd.f32 %v1887, 0.5
    %v1889 = vmul.f32 %v1830, 0.5
    %v1890 = vtanh.pop %v1889
    %v1891 = vmul.f32 %v1890, 0.5
    %v1892 = vadd.f32 %v1891, 0.5
    %v1893 = vtanh.pop %v1856
    %v1894 = vmul.f32 %v1882, 0.5
    %v1895 = vtanh.pop %v1894
    %v1896 = vmul.f32 %v1895, 0.5
    %v1897 = vadd.f32 %v1896, 0.5
    %v1898 = vmul.f32 %v1892, %v1698
    %v1899 = vmul.f32 %v1888, %v1893
    %v1900 = vadd.f32 %v1898, %v1899
    %v1901 = vtanh.pop %v1900
    %v1902 = vmul.f32 %v1897, %v1901
    %v1903 = vld [vmem:[#allocation2 + $0xa0] sm:$0xff]
    %v1904 = vld [vmem:[#allocation2 + $0xa8] sm:$0xff]
    %v1905 = vld [vmem:[#allocation2 + $0xb0] sm:$0xff]
    %v1906 = vld [vmem:[#allocation2 + $0xb8] sm:$0xff]
    %1907 = vmatpush.bf16.msra.mxu0 %v467
    %1908 = vmatpush.bf16.msra.mxu0 %v463
    %1909 = vmatpush.bf16.msra.mxu0 %v459
    %1910 = vmatpush.bf16.msra.mxu0 %v455
    %1911 = vmatpush.bf16.msra.mxu0 %v451
    %1912 = vmatpush.bf16.msra.mxu0 %v447
    %1913 = vmatpush.bf16.msra.mxu0 %v443
    %1914 = vmatpush.bf16.msra.mxu0 %v439
    %1915 = vmatmul.bf16.gmra.mxu0 %v1779
    %v1916 = vpop.f32.mrf.mxu0
    %v1917 = vadd.f32 0.0, %v1916
    %v1918 = vpop.f32.mrf.mxu0
    %1919 = vdwg.mxu0
    %1920 = vmatpush.bf16.msra.mxu0 %v468
    %1921 = vmatpush.bf16.msra.mxu0 %v464
    %1922 = vmatpush.bf16.msra.mxu0 %v460
    %1923 = vmatpush.bf16.msra.mxu0 %v456
    %1924 = vmatpush.bf16.msra.mxu0 %v452
    %1925 = vmatpush.bf16.msra.mxu0 %v448
    %1926 = vmatpush.bf16.msra.mxu0 %v444
    %1927 = vmatpush.bf16.msra.mxu0 %v440
    %1928 = vmatmul.bf16.gmra.mxu0 %v1779
    %v1929 = vpop.f32.mrf.mxu0
    %v1930 = vadd.f32 0.0, %v1929
    %v1931 = vpop.f32.mrf.mxu0
    %1932 = vdwg.mxu0
    %1933 = vmatpush.bf16.msra.mxu0 %v469
    %1934 = vmatpush.bf16.msra.mxu0 %v465
    %1935 = vmatpush.bf16.msra.mxu0 %v461
    %1936 = vmatpush.bf16.msra.mxu0 %v457
    %1937 = vmatpush.bf16.msra.mxu0 %v453
    %1938 = vmatpush.bf16.msra.mxu0 %v449
    %1939 = vmatpush.bf16.msra.mxu0 %v445
    %1940 = vmatpush.bf16.msra.mxu0 %v441
    %1941 = vmatmul.bf16.gmra.mxu0 %v1779
    %v1942 = vpop.f32.mrf.mxu0
    %v1943 = vadd.f32 0.0, %v1942
    %v1944 = vpop.f32.mrf.mxu0
    %1945 = vdwg.mxu0
    %1946 = vmatpush.bf16.msra.mxu0 %v470
    %1947 = vmatpush.bf16.msra.mxu0 %v466
    %1948 = vmatpush.bf16.msra.mxu0 %v462
    %1949 = vmatpush.bf16.msra.mxu0 %v458
    %1950 = vmatpush.bf16.msra.mxu0 %v454
    %1951 = vmatpush.bf16.msra.mxu0 %v450
    %1952 = vmatpush.bf16.msra.mxu0 %v446
    %1953 = vmatpush.bf16.msra.mxu0 %v442
    %1954 = vmatmul.bf16.gmra.mxu0 %v1779
    %v1955 = vpop.f32.mrf.mxu0
    %v1956 = vadd.f32 0.0, %v1955
    %v1957 = vpop.f32.mrf.mxu0
    %1958 = vdwg.mxu0
    %v1959 = vadd.f32 %v1903, %v1917
    %v1960 = vadd.f32 %v1904, %v1930
    %v1961 = vadd.f32 %v1905, %v1943
    %v1962 = vadd.f32 %v1906, %v1956
    %v1963 = vmul.f32 %v1959, 0.5
    %v1964 = vtanh.pop %v1963
    %v1965 = vmul.f32 %v1964, 0.5
    %v1966 = vadd.f32 %v1965, 0.5
    %v1967 = vmul.f32 %v1960, 0.5
    %v1968 = vtanh.pop %v1967
    %v1969 = vmul.f32 %v1968, 0.5
    %v1970 = vadd.f32 %v1969, 0.5
    %v1971 = vtanh.pop %v1961
    %v1972 = vmul.f32 %v1962, 0.5
    %v1973 = vtanh.pop %v1972
    %v1974 = vmul.f32 %v1973, 0.5
    %v1975 = vadd.f32 %v1974, 0.5
    %v1976 = vmul.f32 %v1970, %v1776
    %v1977 = vmul.f32 %v1966, %v1971
    %v1978 = vadd.f32 %v1976, %v1977
    %v1979 = vtanh.pop %v1978
    %v1980 = vmul.f32 %v1975, %v1979
    %v1981 = vpack.c.bf16 %v1980, %v1980
    %v1982 = vpack.c.bf16 %v1902, %v1902
    %1983 = vmatpush.bf16.msra.mxu0 %v873
    %1984 = vmatpush.bf16.msra.mxu0 %v869
    %1985 = vmatpush.bf16.msra.mxu0 %v865
    %1986 = vmatpush.bf16.msra.mxu0 %v861
    %1987 = vmatpush.bf16.msra.mxu0 %v857
    %1988 = vmatpush.bf16.msra.mxu0 %v853
    %1989 = vmatpush.bf16.msra.mxu0 %v849
    %1990 = vmatpush.bf16.msra.mxu0 %v845
    %1991 = vmatmul.bf16.gmra.mxu0 %v1981
    %v1992 = vpop.f32.mrf.mxu0
    %v1993 = vadd.f32 %v645, %v1992
    %v1994 = vpop.f32.mrf.mxu0
    %1995 = vdwg.mxu0
    %1996 = vmatpush.bf16.msra.mxu0 %v905
    %1997 = vmatpush.bf16.msra.mxu0 %v901
    %1998 = vmatpush.bf16.msra.mxu0 %v897
    %1999 = vmatpush.bf16.msra.mxu0 %v893
    %2000 = vmatpush.bf16.msra.mxu0 %v889
    %2001 = vmatpush.bf16.msra.mxu0 %v885
    %2002 = vmatpush.bf16.msra.mxu0 %v881
    %2003 = vmatpush.bf16.msra.mxu0 %v877
    %2004 = vmatmul.bf16.gmra.mxu0 %v1982
    %v2005 = vpop.f32.mrf.mxu0
    %v2006 = vadd.f32 %v1993, %v2005
    %v2007 = vpop.f32.mrf.mxu0
    %2008 = vdwg.mxu0
    %2009 = vmatpush.bf16.msra.mxu0 %v874
    %2010 = vmatpush.bf16.msra.mxu0 %v870
    %2011 = vmatpush.bf16.msra.mxu0 %v866
    %2012 = vmatpush.bf16.msra.mxu0 %v862
    %2013 = vmatpush.bf16.msra.mxu0 %v858
    %2014 = vmatpush.bf16.msra.mxu0 %v854
    %2015 = vmatpush.bf16.msra.mxu0 %v850
    %2016 = vmatpush.bf16.msra.mxu0 %v846
    %2017 = vmatmul.bf16.gmra.mxu0 %v1981
    %v2018 = vpop.f32.mrf.mxu0
    %v2019 = vadd.f32 %v646, %v2018
    %v2020 = vpop.f32.mrf.mxu0
    %2021 = vdwg.mxu0
    %2022 = vmatpush.bf16.msra.mxu0 %v906
    %2023 = vmatpush.bf16.msra.mxu0 %v902
    %2024 = vmatpush.bf16.msra.mxu0 %v898
    %2025 = vmatpush.bf16.msra.mxu0 %v894
    %2026 = vmatpush.bf16.msra.mxu0 %v890
    %2027 = vmatpush.bf16.msra.mxu0 %v886
    %2028 = vmatpush.bf16.msra.mxu0 %v882
    %2029 = vmatpush.bf16.msra.mxu0 %v878
    %2030 = vmatmul.bf16.gmra.mxu0 %v1982
    %v2031 = vpop.f32.mrf.mxu0
    %v2032 = vadd.f32 %v2019, %v2031
    %v2033 = vpop.f32.mrf.mxu0
    %2034 = vdwg.mxu0
    %2035 = vmatpush.bf16.msra.mxu0 %v875
    %2036 = vmatpush.bf16.msra.mxu0 %v871
    %2037 = vmatpush.bf16.msra.mxu0 %v867
    %2038 = vmatpush.bf16.msra.mxu0 %v863
    %2039 = vmatpush.bf16.msra.mxu0 %v859
    %2040 = vmatpush.bf16.msra.mxu0 %v855
    %2041 = vmatpush.bf16.msra.mxu0 %v851
    %2042 = vmatpush.bf16.msra.mxu0 %v847
    %2043 = vmatmul.bf16.gmra.mxu0 %v1981
    %v2044 = vpop.f32.mrf.mxu0
    %v2045 = vadd.f32 %v647, %v2044
    %v2046 = vpop.f32.mrf.mxu0
    %2047 = vdwg.mxu0
    %2048 = vmatpush.bf16.msra.mxu0 %v907
    %2049 = vmatpush.bf16.msra.mxu0 %v903
    %2050 = vmatpush.bf16.msra.mxu0 %v899
    %2051 = vmatpush.bf16.msra.mxu0 %v895
    %2052 = vmatpush.bf16.msra.mxu0 %v891
    %2053 = vmatpush.bf16.msra.mxu0 %v887
    %2054 = vmatpush.bf16.msra.mxu0 %v883
    %2055 = vmatpush.bf16.msra.mxu0 %v879
    %2056 = vmatmul.bf16.gmra.mxu0 %v1982
    %v2057 = vpop.f32.mrf.mxu0
    %v2058 = vadd.f32 %v2045, %v2057
    %v2059 = vpop.f32.mrf.mxu0
    %2060 = vdwg.mxu0
    %2061 = vmatpush.bf16.msra.mxu0 %v876
    %2062 = vmatpush.bf16.msra.mxu0 %v872
    %2063 = vmatpush.bf16.msra.mxu0 %v868
    %2064 = vmatpush.bf16.msra.mxu0 %v864
    %2065 = vmatpush.bf16.msra.mxu0 %v860
    %2066 = vmatpush.bf16.msra.mxu0 %v856
    %2067 = vmatpush.bf16.msra.mxu0 %v852
    %2068 = vmatpush.bf16.msra.mxu0 %v848
    %2069 = vmatmul.bf16.gmra.mxu0 %v1981
    %v2070 = vpop.f32.mrf.mxu0
    %v2071 = vadd.f32 %v648, %v2070
    %v2072 = vpop.f32.mrf.mxu0
    %2073 = vdwg.mxu0
    %2074 = vmatpush.bf16.msra.mxu0 %v908
    %2075 = vmatpush.bf16.msra.mxu0 %v904
    %2076 = vmatpush.bf16.msra.mxu0 %v900
    %2077 = vmatpush.bf16.msra.mxu0 %v896
    %2078 = vmatpush.bf16.msra.mxu0 %v892
    %2079 = vmatpush.bf16.msra.mxu0 %v888
    %2080 = vmatpush.bf16.msra.mxu0 %v884
    %2081 = vmatpush.bf16.msra.mxu0 %v880
    %2082 = vmatmul.bf16.gmra.mxu0 %v1982
    %v2083 = vpop.f32.mrf.mxu0
    %v2084 = vadd.f32 %v2071, %v2083
    %v2085 = vpop.f32.mrf.mxu0
    %2086 = vdwg.mxu0
    %v2087 = vmul.f32 %v2006, 0.5
    %v2088 = vtanh.pop %v2087
    %v2089 = vmul.f32 %v2088, 0.5
    %v2090 = vadd.f32 %v2089, 0.5
    %v2091 = vmul.f32 %v2032, 0.5
    %v2092 = vtanh.pop %v2091
    %v2093 = vmul.f32 %v2092, 0.5
    %v2094 = vadd.f32 %v2093, 0.5
    %v2095 = vtanh.pop %v2058
    %v2096 = vmul.f32 %v2084, 0.5
    %v2097 = vtanh.pop %v2096
    %v2098 = vmul.f32 %v2097, 0.5
    %v2099 = vadd.f32 %v2098, 0.5
    %v2100 = vmul.f32 %v2094, %v1900
    %v2101 = vmul.f32 %v2090, %v2095
    %v2102 = vadd.f32 %v2100, %v2101
    %v2103 = vtanh.pop %v2102
    %v2104 = vmul.f32 %v2099, %v2103
    %v2105 = vld [vmem:[#allocation2 + $0xc0] sm:$0xff]
    %v2106 = vld [vmem:[#allocation2 + $0xc8] sm:$0xff]
    %v2107 = vld [vmem:[#allocation2 + $0xd0] sm:$0xff]
    %v2108 = vld [vmem:[#allocation2 + $0xd8] sm:$0xff]
    %2109 = vmatpush.bf16.msra.mxu0 %v467
    %2110 = vmatpush.bf16.msra.mxu0 %v463
    %2111 = vmatpush.bf16.msra.mxu0 %v459
    %2112 = vmatpush.bf16.msra.mxu0 %v455
    %2113 = vmatpush.bf16.msra.mxu0 %v451
    %2114 = vmatpush.bf16.msra.mxu0 %v447
    %2115 = vmatpush.bf16.msra.mxu0 %v443
    %2116 = vmatpush.bf16.msra.mxu0 %v439
    %2117 = vmatmul.bf16.gmra.mxu0 %v1981
    %v2118 = vpop.f32.mrf.mxu0
    %v2119 = vadd.f32 0.0, %v2118
    %v2120 = vpop.f32.mrf.mxu0
    %2121 = vdwg.mxu0
    %2122 = vmatpush.bf16.msra.mxu0 %v468
    %2123 = vmatpush.bf16.msra.mxu0 %v464
    %2124 = vmatpush.bf16.msra.mxu0 %v460
    %2125 = vmatpush.bf16.msra.mxu0 %v456
    %2126 = vmatpush.bf16.msra.mxu0 %v452
    %2127 = vmatpush.bf16.msra.mxu0 %v448
    %2128 = vmatpush.bf16.msra.mxu0 %v444
    %2129 = vmatpush.bf16.msra.mxu0 %v440
    %2130 = vmatmul.bf16.gmra.mxu0 %v1981
    %v2131 = vpop.f32.mrf.mxu0
    %v2132 = vadd.f32 0.0, %v2131
    %v2133 = vpop.f32.mrf.mxu0
    %2134 = vdwg.mxu0
    %2135 = vmatpush.bf16.msra.mxu0 %v469
    %2136 = vmatpush.bf16.msra.mxu0 %v465
    %2137 = vmatpush.bf16.msra.mxu0 %v461
    %2138 = vmatpush.bf16.msra.mxu0 %v457
    %2139 = vmatpush.bf16.msra.mxu0 %v453
    %2140 = vmatpush.bf16.msra.mxu0 %v449
    %2141 = vmatpush.bf16.msra.mxu0 %v445
    %2142 = vmatpush.bf16.msra.mxu0 %v441
    %2143 = vmatmul.bf16.gmra.mxu0 %v1981
    %v2144 = vpop.f32.mrf.mxu0
    %v2145 = vadd.f32 0.0, %v2144
    %v2146 = vpop.f32.mrf.mxu0
    %2147 = vdwg.mxu0
    %2148 = vmatpush.bf16.msra.mxu0 %v470
    %2149 = vmatpush.bf16.msra.mxu0 %v466
    %2150 = vmatpush.bf16.msra.mxu0 %v462
    %2151 = vmatpush.bf16.msra.mxu0 %v458
    %2152 = vmatpush.bf16.msra.mxu0 %v454
    %2153 = vmatpush.bf16.msra.mxu0 %v450
    %2154 = vmatpush.bf16.msra.mxu0 %v446
    %2155 = vmatpush.bf16.msra.mxu0 %v442
    %2156 = vmatmul.bf16.gmra.mxu0 %v1981
    %v2157 = vpop.f32.mrf.mxu0
    %v2158 = vadd.f32 0.0, %v2157
    %v2159 = vpop.f32.mrf.mxu0
    %2160 = vdwg.mxu0
    %v2161 = vadd.f32 %v2105, %v2119
    %v2162 = vadd.f32 %v2106, %v2132
    %v2163 = vadd.f32 %v2107, %v2145
    %v2164 = vadd.f32 %v2108, %v2158
    %v2165 = vmul.f32 %v2161, 0.5
    %v2166 = vtanh.pop %v2165
    %v2167 = vmul.f32 %v2166, 0.5
    %v2168 = vadd.f32 %v2167, 0.5
    %v2169 = vmul.f32 %v2162, 0.5
    %v2170 = vtanh.pop %v2169
    %v2171 = vmul.f32 %v2170, 0.5
    %v2172 = vadd.f32 %v2171, 0.5
    %v2173 = vtanh.pop %v2163
    %v2174 = vmul.f32 %v2164, 0.5
    %v2175 = vtanh.pop %v2174
    %v2176 = vmul.f32 %v2175, 0.5
    %v2177 = vadd.f32 %v2176, 0.5
    %v2178 = vmul.f32 %v2172, %v1978
    %v2179 = vmul.f32 %v2168, %v2173
    %v2180 = vadd.f32 %v2178, %v2179
    %v2181 = vtanh.pop %v2180
    %v2182 = vmul.f32 %v2177, %v2181
    %v2183 = vpack.c.bf16 %v2182, %v2182
    %v2184 = vpack.c.bf16 %v2104, %v2104
    %2185 = vmatpush.bf16.msra.mxu0 %v873
    %2186 = vmatpush.bf16.msra.mxu0 %v869
    %2187 = vmatpush.bf16.msra.mxu0 %v865
    %2188 = vmatpush.bf16.msra.mxu0 %v861
    %2189 = vmatpush.bf16.msra.mxu0 %v857
    %2190 = vmatpush.bf16.msra.mxu0 %v853
    %2191 = vmatpush.bf16.msra.mxu0 %v849
    %2192 = vmatpush.bf16.msra.mxu0 %v845
    %2193 = vmatmul.bf16.gmra.mxu0 %v2183
    %v2194 = vpop.f32.mrf.mxu0
    %v2195 = vadd.f32 %v645, %v2194
    %v2196 = vpop.f32.mrf.mxu0
    %2197 = vdwg.mxu0
    %2198 = vmatpush.bf16.msra.mxu0 %v905
    %2199 = vmatpush.bf16.msra.mxu0 %v901
    %2200 = vmatpush.bf16.msra.mxu0 %v897
    %2201 = vmatpush.bf16.msra.mxu0 %v893
    %2202 = vmatpush.bf16.msra.mxu0 %v889
    %2203 = vmatpush.bf16.msra.mxu0 %v885
    %2204 = vmatpush.bf16.msra.mxu0 %v881
    %2205 = vmatpush.bf16.msra.mxu0 %v877
    %2206 = vmatmul.bf16.gmra.mxu0 %v2184
    %v2207 = vpop.f32.mrf.mxu0
    %v2208 = vadd.f32 %v2195, %v2207
    %v2209 = vpop.f32.mrf.mxu0
    %2210 = vdwg.mxu0
    %2211 = vmatpush.bf16.msra.mxu0 %v874
    %2212 = vmatpush.bf16.msra.mxu0 %v870
    %2213 = vmatpush.bf16.msra.mxu0 %v866
    %2214 = vmatpush.bf16.msra.mxu0 %v862
    %2215 = vmatpush.bf16.msra.mxu0 %v858
    %2216 = vmatpush.bf16.msra.mxu0 %v854
    %2217 = vmatpush.bf16.msra.mxu0 %v850
    %2218 = vmatpush.bf16.msra.mxu0 %v846
    %2219 = vmatmul.bf16.gmra.mxu0 %v2183
    %v2220 = vpop.f32.mrf.mxu0
    %v2221 = vadd.f32 %v646, %v2220
    %v2222 = vpop.f32.mrf.mxu0
    %2223 = vdwg.mxu0
    %2224 = vmatpush.bf16.msra.mxu0 %v906
    %2225 = vmatpush.bf16.msra.mxu0 %v902
    %2226 = vmatpush.bf16.msra.mxu0 %v898
    %2227 = vmatpush.bf16.msra.mxu0 %v894
    %2228 = vmatpush.bf16.msra.mxu0 %v890
    %2229 = vmatpush.bf16.msra.mxu0 %v886
    %2230 = vmatpush.bf16.msra.mxu0 %v882
    %2231 = vmatpush.bf16.msra.mxu0 %v878
    %2232 = vmatmul.bf16.gmra.mxu0 %v2184
    %v2233 = vpop.f32.mrf.mxu0
    %v2234 = vadd.f32 %v2221, %v2233
    %v2235 = vpop.f32.mrf.mxu0
    %2236 = vdwg.mxu0
    %2237 = vmatpush.bf16.msra.mxu0 %v875
    %2238 = vmatpush.bf16.msra.mxu0 %v871
    %2239 = vmatpush.bf16.msra.mxu0 %v867
    %2240 = vmatpush.bf16.msra.mxu0 %v863
    %2241 = vmatpush.bf16.msra.mxu0 %v859
    %2242 = vmatpush.bf16.msra.mxu0 %v855
    %2243 = vmatpush.bf16.msra.mxu0 %v851
    %2244 = vmatpush.bf16.msra.mxu0 %v847
    %2245 = vmatmul.bf16.gmra.mxu0 %v2183
    %v2246 = vpop.f32.mrf.mxu0
    %v2247 = vadd.f32 %v647, %v2246
    %v2248 = vpop.f32.mrf.mxu0
    %2249 = vdwg.mxu0
    %2250 = vmatpush.bf16.msra.mxu0 %v907
    %2251 = vmatpush.bf16.msra.mxu0 %v903
    %2252 = vmatpush.bf16.msra.mxu0 %v899
    %2253 = vmatpush.bf16.msra.mxu0 %v895
    %2254 = vmatpush.bf16.msra.mxu0 %v891
    %2255 = vmatpush.bf16.msra.mxu0 %v887
    %2256 = vmatpush.bf16.msra.mxu0 %v883
    %2257 = vmatpush.bf16.msra.mxu0 %v879
    %2258 = vmatmul.bf16.gmra.mxu0 %v2184
    %v2259 = vpop.f32.mrf.mxu0
    %v2260 = vadd.f32 %v2247, %v2259
    %v2261 = vpop.f32.mrf.mxu0
    %2262 = vdwg.mxu0
    %2263 = vmatpush.bf16.msra.mxu0 %v876
    %2264 = vmatpush.bf16.msra.mxu0 %v872
    %2265 = vmatpush.bf16.msra.mxu0 %v868
    %2266 = vmatpush.bf16.msra.mxu0 %v864
    %2267 = vmatpush.bf16.msra.mxu0 %v860
    %2268 = vmatpush.bf16.msra.mxu0 %v856
    %2269 = vmatpush.bf16.msra.mxu0 %v852
    %2270 = vmatpush.bf16.msra.mxu0 %v848
    %2271 = vmatmul.bf16.gmra.mxu0 %v2183
    %v2272 = vpop.f32.mrf.mxu0
    %v2273 = vadd.f32 %v648, %v2272
    %v2274 = vpop.f32.mrf.mxu0
    %2275 = vdwg.mxu0
    %2276 = vmatpush.bf16.msra.mxu0 %v908
    %2277 = vmatpush.bf16.msra.mxu0 %v904
    %2278 = vmatpush.bf16.msra.mxu0 %v900
    %2279 = vmatpush.bf16.msra.mxu0 %v896
    %2280 = vmatpush.bf16.msra.mxu0 %v892
    %2281 = vmatpush.bf16.msra.mxu0 %v888
    %2282 = vmatpush.bf16.msra.mxu0 %v884
    %2283 = vmatpush.bf16.msra.mxu0 %v880
    %2284 = vmatmul.bf16.gmra.mxu0 %v2184
    %v2285 = vpop.f32.mrf.mxu0
    %v2286 = vadd.f32 %v2273, %v2285
    %v2287 = vpop.f32.mrf.mxu0
    %2288 = vdwg.mxu0
    %v2289 = vmul.f32 %v2208, 0.5
    %v2290 = vtanh.pop %v2289
    %v2291 = vmul.f32 %v2290, 0.5
    %v2292 = vadd.f32 %v2291, 0.5
    %v2293 = vmul.f32 %v2234, 0.5
    %v2294 = vtanh.pop %v2293
    %v2295 = vmul.f32 %v2294, 0.5
    %v2296 = vadd.f32 %v2295, 0.5
    %v2297 = vtanh.pop %v2260
    %v2298 = vmul.f32 %v2286, 0.5
    %v2299 = vtanh.pop %v2298
    %v2300 = vmul.f32 %v2299, 0.5
    %v2301 = vadd.f32 %v2300, 0.5
    %v2302 = vmul.f32 %v2296, %v2102
    %v2303 = vmul.f32 %v2292, %v2297
    %v2304 = vadd.f32 %v2302, %v2303
    %v2305 = vtanh.pop %v2304
    %v2306 = vmul.f32 %v2301, %v2305
    %v2307 = vld [vmem:[#allocation2 + $0xe0] sm:$0xff]
    %v2308 = vld [vmem:[#allocation2 + $0xe8] sm:$0xff]
    %v2309 = vld [vmem:[#allocation2 + $0xf0] sm:$0xff]
    %v2310 = vld [vmem:[#allocation2 + $0xf8] sm:$0xff]
    %2311 = vmatpush.bf16.msra.mxu0 %v467
    %2312 = vmatpush.bf16.msra.mxu0 %v463
    %2313 = vmatpush.bf16.msra.mxu0 %v459
    %2314 = vmatpush.bf16.msra.mxu0 %v455
    %2315 = vmatpush.bf16.msra.mxu0 %v451
    %2316 = vmatpush.bf16.msra.mxu0 %v447
    %2317 = vmatpush.bf16.msra.mxu0 %v443
    %2318 = vmatpush.bf16.msra.mxu0 %v439
    %2319 = vmatmul.bf16.gmra.mxu0 %v2183
    %v2320 = vpop.f32.mrf.mxu0
    %v2321 = vadd.f32 0.0, %v2320
    %v2322 = vpop.f32.mrf.mxu0
    %2323 = vdwg.mxu0
    %2324 = vmatpush.bf16.msra.mxu0 %v468
    %2325 = vmatpush.bf16.msra.mxu0 %v464
    %2326 = vmatpush.bf16.msra.mxu0 %v460
    %2327 = vmatpush.bf16.msra.mxu0 %v456
    %2328 = vmatpush.bf16.msra.mxu0 %v452
    %2329 = vmatpush.bf16.msra.mxu0 %v448
    %2330 = vmatpush.bf16.msra.mxu0 %v444
    %2331 = vmatpush.bf16.msra.mxu0 %v440
    %2332 = vmatmul.bf16.gmra.mxu0 %v2183
    %v2333 = vpop.f32.mrf.mxu0
    %v2334 = vadd.f32 0.0, %v2333
    %v2335 = vpop.f32.mrf.mxu0
    %2336 = vdwg.mxu0
    %2337 = vmatpush.bf16.msra.mxu0 %v469
    %2338 = vmatpush.bf16.msra.mxu0 %v465
    %2339 = vmatpush.bf16.msra.mxu0 %v461
    %2340 = vmatpush.bf16.msra.mxu0 %v457
    %2341 = vmatpush.bf16.msra.mxu0 %v453
    %2342 = vmatpush.bf16.msra.mxu0 %v449
    %2343 = vmatpush.bf16.msra.mxu0 %v445
    %2344 = vmatpush.bf16.msra.mxu0 %v441
    %2345 = vmatmul.bf16.gmra.mxu0 %v2183
    %v2346 = vpop.f32.mrf.mxu0
    %v2347 = vadd.f32 0.0, %v2346
    %v2348 = vpop.f32.mrf.mxu0
    %2349 = vdwg.mxu0
    %2350 = vmatpush.bf16.msra.mxu0 %v470
    %2351 = vmatpush.bf16.msra.mxu0 %v466
    %2352 = vmatpush.bf16.msra.mxu0 %v462
    %2353 = vmatpush.bf16.msra.mxu0 %v458
    %2354 = vmatpush.bf16.msra.mxu0 %v454
    %2355 = vmatpush.bf16.msra.mxu0 %v450
    %2356 = vmatpush.bf16.msra.mxu0 %v446
    %2357 = vmatpush.bf16.msra.mxu0 %v442
    %2358 = vmatmul.bf16.gmra.mxu0 %v2183
    %v2359 = vpop.f32.mrf.mxu0
    %v2360 = vadd.f32 0.0, %v2359
    %v2361 = vpop.f32.mrf.mxu0
    %2362 = vdwg.mxu0
    %v2363 = vadd.f32 %v2307, %v2321
    %v2364 = vadd.f32 %v2308, %v2334
    %v2365 = vadd.f32 %v2309, %v2347
    %v2366 = vadd.f32 %v2310, %v2360
    %v2367 = vmul.f32 %v2363, 0.5
    %v2368 = vtanh.pop %v2367
    %v2369 = vmul.f32 %v2368, 0.5
    %v2370 = vadd.f32 %v2369, 0.5
    %v2371 = vmul.f32 %v2364, 0.5
    %v2372 = vtanh.pop %v2371
    %v2373 = vmul.f32 %v2372, 0.5
    %v2374 = vadd.f32 %v2373, 0.5
    %v2375 = vtanh.pop %v2365
    %v2376 = vmul.f32 %v2366, 0.5
    %v2377 = vtanh.pop %v2376
    %v2378 = vmul.f32 %v2377, 0.5
    %v2379 = vadd.f32 %v2378, 0.5
    %v2380 = vmul.f32 %v2374, %v2180
    %v2381 = vmul.f32 %v2370, %v2375
    %v2382 = vadd.f32 %v2380, %v2381
    %v2383 = vtanh.pop %v2382
    %v2384 = vmul.f32 %v2379, %v2383
    %v2385 = vpack.c.bf16 %v2384, %v2384
    %v2386 = vpack.c.bf16 %v2306, %v2306
    %2387 = vmatpush.bf16.msra.mxu0 %v873
    %2388 = vmatpush.bf16.msra.mxu0 %v869
    %2389 = vmatpush.bf16.msra.mxu0 %v865
    %2390 = vmatpush.bf16.msra.mxu0 %v861
    %2391 = vmatpush.bf16.msra.mxu0 %v857
    %2392 = vmatpush.bf16.msra.mxu0 %v853
    %2393 = vmatpush.bf16.msra.mxu0 %v849
    %2394 = vmatpush.bf16.msra.mxu0 %v845
    %2395 = vmatmul.bf16.gmra.mxu0 %v2385
    %v2396 = vpop.f32.mrf.mxu0
    %v2397 = vadd.f32 %v645, %v2396
    %v2398 = vpop.f32.mrf.mxu0
    %2399 = vdwg.mxu0
    %2400 = vmatpush.bf16.msra.mxu0 %v905
    %2401 = vmatpush.bf16.msra.mxu0 %v901
    %2402 = vmatpush.bf16.msra.mxu0 %v897
    %2403 = vmatpush.bf16.msra.mxu0 %v893
    %2404 = vmatpush.bf16.msra.mxu0 %v889
    %2405 = vmatpush.bf16.msra.mxu0 %v885
    %2406 = vmatpush.bf16.msra.mxu0 %v881
    %2407 = vmatpush.bf16.msra.mxu0 %v877
    %2408 = vmatmul.bf16.gmra.mxu0 %v2386
    %v2409 = vpop.f32.mrf.mxu0
    %v2410 = vadd.f32 %v2397, %v2409
    %v2411 = vpop.f32.mrf.mxu0
    %2412 = vdwg.mxu0
    %2413 = vmatpush.bf16.msra.mxu0 %v874
    %2414 = vmatpush.bf16.msra.mxu0 %v870
    %2415 = vmatpush.bf16.msra.mxu0 %v866
    %2416 = vmatpush.bf16.msra.mxu0 %v862
    %2417 = vmatpush.bf16.msra.mxu0 %v858
    %2418 = vmatpush.bf16.msra.mxu0 %v854
    %2419 = vmatpush.bf16.msra.mxu0 %v850
    %2420 = vmatpush.bf16.msra.mxu0 %v846
    %2421 = vmatmul.bf16.gmra.mxu0 %v2385
    %v2422 = vpop.f32.mrf.mxu0
    %v2423 = vadd.f32 %v646, %v2422
    %v2424 = vpop.f32.mrf.mxu0
    %2425 = vdwg.mxu0
    %2426 = vmatpush.bf16.msra.mxu0 %v906
    %2427 = vmatpush.bf16.msra.mxu0 %v902
    %2428 = vmatpush.bf16.msra.mxu0 %v898
    %2429 = vmatpush.bf16.msra.mxu0 %v894
    %2430 = vmatpush.bf16.msra.mxu0 %v890
    %2431 = vmatpush.bf16.msra.mxu0 %v886
    %2432 = vmatpush.bf16.msra.mxu0 %v882
    %2433 = vmatpush.bf16.msra.mxu0 %v878
    %2434 = vmatmul.bf16.gmra.mxu0 %v2386
    %v2435 = vpop.f32.mrf.mxu0
    %v2436 = vadd.f32 %v2423, %v2435
    %v2437 = vpop.f32.mrf.mxu0
    %2438 = vdwg.mxu0
    %2439 = vmatpush.bf16.msra.mxu0 %v875
    %2440 = vmatpush.bf16.msra.mxu0 %v871
    %2441 = vmatpush.bf16.msra.mxu0 %v867
    %2442 = vmatpush.bf16.msra.mxu0 %v863
    %2443 = vmatpush.bf16.msra.mxu0 %v859
    %2444 = vmatpush.bf16.msra.mxu0 %v855
    %2445 = vmatpush.bf16.msra.mxu0 %v851
    %2446 = vmatpush.bf16.msra.mxu0 %v847
    %2447 = vmatmul.bf16.gmra.mxu0 %v2385
    %v2448 = vpop.f32.mrf.mxu0
    %v2449 = vadd.f32 %v647, %v2448
    %v2450 = vpop.f32.mrf.mxu0
    %2451 = vdwg.mxu0
    %2452 = vmatpush.bf16.msra.mxu0 %v907
    %2453 = vmatpush.bf16.msra.mxu0 %v903
    %2454 = vmatpush.bf16.msra.mxu0 %v899
    %2455 = vmatpush.bf16.msra.mxu0 %v895
    %2456 = vmatpush.bf16.msra.mxu0 %v891
    %2457 = vmatpush.bf16.msra.mxu0 %v887
    %2458 = vmatpush.bf16.msra.mxu0 %v883
    %2459 = vmatpush.bf16.msra.mxu0 %v879
    %2460 = vmatmul.bf16.gmra.mxu0 %v2386
    %v2461 = vpop.f32.mrf.mxu0
    %v2462 = vadd.f32 %v2449, %v2461
    %v2463 = vpop.f32.mrf.mxu0
    %2464 = vdwg.mxu0
    %2465 = vmatpush.bf16.msra.mxu0 %v876
    %2466 = vmatpush.bf16.msra.mxu0 %v872
    %2467 = vmatpush.bf16.msra.mxu0 %v868
    %2468 = vmatpush.bf16.msra.mxu0 %v864
    %2469 = vmatpush.bf16.msra.mxu0 %v860
    %2470 = vmatpush.bf16.msra.mxu0 %v856
    %2471 = vmatpush.bf16.msra.mxu0 %v852
    %2472 = vmatpush.bf16.msra.mxu0 %v848
    %2473 = vmatmul.bf16.gmra.mxu0 %v2385
    %v2474 = vpop.f32.mrf.mxu0
    %v2475 = vadd.f32 %v648, %v2474
    %v2476 = vpop.f32.mrf.mxu0
    %2477 = vdwg.mxu0
    %2478 = vmatpush.bf16.msra.mxu0 %v908
    %2479 = vmatpush.bf16.msra.mxu0 %v904
    %2480 = vmatpush.bf16.msra.mxu0 %v900
    %2481 = vmatpush.bf16.msra.mxu0 %v896
    %2482 = vmatpush.bf16.msra.mxu0 %v892
    %2483 = vmatpush.bf16.msra.mxu0 %v888
    %2484 = vmatpush.bf16.msra.mxu0 %v884
    %2485 = vmatpush.bf16.msra.mxu0 %v880
    %2486 = vmatmul.bf16.gmra.mxu0 %v2386
    %v2487 = vpop.f32.mrf.mxu0
    %v2488 = vadd.f32 %v2475, %v2487
    %v2489 = vpop.f32.mrf.mxu0
    %2490 = vdwg.mxu0
    %v2491 = vmul.f32 %v2410, 0.5
    %v2492 = vtanh.pop %v2491
    %v2493 = vmul.f32 %v2492, 0.5
    %v2494 = vadd.f32 %v2493, 0.5
    %v2495 = vmul.f32 %v2436, 0.5
    %v2496 = vtanh.pop %v2495
    %v2497 = vmul.f32 %v2496, 0.5
    %v2498 = vadd.f32 %v2497, 0.5
    %v2499 = vtanh.pop %v2462
    %v2500 = vmul.f32 %v2488, 0.5
    %v2501 = vtanh.pop %v2500
    %v2502 = vmul.f32 %v2501, 0.5
    %v2503 = vadd.f32 %v2502, 0.5
    %v2504 = vmul.f32 %v2498, %v2304
    %v2505 = vmul.f32 %v2494, %v2499
    %v2506 = vadd.f32 %v2504, %v2505
    %v2507 = vtanh.pop %v2506
    %v2508 = vmul.f32 %v2503, %v2507
    %v2509 = vld [vmem:[%s6] sm:$0xff]
    %v2510 = vld [vmem:[%s6 + $0x8] sm:$0xff]
    %v2511 = vld [vmem:[%s6 + $0x10] sm:$0xff]
    %v2512 = vld [vmem:[%s6 + $0x18] sm:$0xff]
    %v2513 = vld [vmem:[%s6 + $0x20] sm:$0xff]
    %v2514 = vld [vmem:[%s6 + $0x28] sm:$0xff]
    %v2515 = vld [vmem:[%s6 + $0x30] sm:$0xff]
    %v2516 = vld [vmem:[%s6 + $0x38] sm:$0xff]
    %v2517 = vld [vmem:[%s6 + $0x40] sm:$0xff]
    %v2518 = vld [vmem:[%s6 + $0x48] sm:$0xff]
    %v2519 = vld [vmem:[%s6 + $0x50] sm:$0xff]
    %v2520 = vld [vmem:[%s6 + $0x58] sm:$0xff]
    %v2521 = vld [vmem:[%s6 + $0x60] sm:$0xff]
    %v2522 = vld [vmem:[%s6 + $0x68] sm:$0xff]
    %v2523 = vld [vmem:[%s6 + $0x70] sm:$0xff]
    %v2524 = vld [vmem:[%s6 + $0x78] sm:$0xff]
    %v2525 = vld [vmem:[#allocation3] sm:$0x1]
    %v2527 = vperm.slane %v2525, 0
    %2529 = vmatpush.msra.mxu0 %v2524
    %2530 = vmatpush.msra.mxu0 %v2523
    %2531 = vmatpush.msra.mxu0 %v2522
    %2532 = vmatpush.msra.mxu0 %v2521
    %2533 = vmatpush.msra.mxu0 %v2520
    %2534 = vmatpush.msra.mxu0 %v2519
    %2535 = vmatpush.msra.mxu0 %v2518
    %2536 = vmatpush.msra.mxu0 %v2517
    %2537 = vmatpush.msra.mxu0 %v2516
    %2538 = vmatpush.msra.mxu0 %v2515
    %2539 = vmatpush.msra.mxu0 %v2514
    %2540 = vmatpush.msra.mxu0 %v2513
    %2541 = vmatpush.msra.mxu0 %v2512
    %2542 = vmatpush.msra.mxu0 %v2511
    %2543 = vmatpush.msra.mxu0 %v2510
    %2544 = vmatpush.msra.mxu0 %v2509
    %2545 = vmatmul.f32.gmra.mxu0 %v2508
    %v2546 = vpop.f32.mrf.mxu0
    %v2547 = vadd.f32 %v2527, %v2546
    %2548 = vdwg.mxu0
    %vm2549 = vcmask 1024
    %2550 = vst.msk [vmem:[%s8] sm:$0x3] %vm2549, %v2547
    // Predicated region
    $region42: #{fwd.1} parent=1 // pred_check
      _
    $region43: #{fwd.1} parent=1 // pred_check_branch
      %2552 = sbr.rel (0) target = $region45
    $region44: #{fwd.1} parent=1 // pred_region
      _
    $region45: #{fwd.1} parent=1 // pred_fallthru
      _
    // Predicated region
    $region46: #{fwd.1} parent=1 // pred_check
      _
    $region47: #{fwd.1} parent=1 // pred_check_branch
      %2554 = sbr.rel (0) target = $region49
    $region48: #{fwd.1} parent=1 // pred_region
      _
    $region49: #{fwd.1} parent=1 // pred_fallthru
      _
    %2555 = vsyncpa [#allocation5], 1
    %2556 = vsyncpa [#allocation7], 1

</llo_original>
